<compile_context>
chip_gen: v6e
topology: v6e:2x2x1
jax: 0.10.0
libtpu: 0.0.40
codegen_flags: <defaults>
</compile_context>

<pallas_src>
import math

import jax
import jax.numpy as jnp
import numpy as np
from jax.experimental import pallas as pl
from jax.experimental.pallas import tpu as pltpu  # noqa: F401

# ---- small hyperparameters consistent with the module ----------------------
VOCAB = 12
SEQ = 7                       # fixed by the model (max_len=7, head expects 7*d_model)
D_MODEL = 32
NHEAD = 4
HEAD_DIM = D_MODEL // NHEAD
DIM_FF = 64
NUM_LAYERS = 2
BATCH = 8
HEAD_HIDDEN = 16

ROWS = SEQ * BATCH            # 56 rows; row = n*BATCH + b  (n = token slot, b = batch)
VEC_W = 3 * D_MODEL           # width of the packed bias/LN-param array
NEG_INF = -1e30


def _layernorm(x, g, b, eps=1e-5):
    mu = jnp.mean(x, axis=-1, keepdims=True)
    xc = x - mu
    var = jnp.mean(xc * xc, axis=-1, keepdims=True)
    return xc * jax.lax.rsqrt(var + eps) * g + b


# ---- single fused Pallas kernel: 2 encoder layers + head FFN ----------------
def fused_forward_kernel(x_ref, mask_ref, vec_ref,
                         w_in0_ref, w_out0_ref, wf1_0_ref, wf2_0_ref,
                         w_in1_ref, w_out1_ref, wf1_1_ref, wf2_1_ref,
                         wh1_ref, wh2_ref, o_ref):
    x = x_ref[...]                       # (ROWS, E) f32
    mask = mask_ref[...]                 # (ROWS, ROWS) additive block-diagonal mask

    layer_refs = ((w_in0_ref, w_out0_ref, wf1_0_ref, wf2_0_ref),
                  (w_in1_ref, w_out1_ref, wf1_1_ref, wf2_1_ref))

    for layer, (w_in_r, w_out_r, wf1_r, wf2_r) in enumerate(layer_refs):
        base = layer * 8
        b_in = vec_ref[base + 0:base + 1, :]              # (1, 3E), Q part pre-scaled
        b_out = vec_ref[base + 1:base + 2, :D_MODEL]
        ln1_g = vec_ref[base + 2:base + 3, :D_MODEL]
        ln1_b = vec_ref[base + 3:base + 4, :D_MODEL]
        b1 = vec_ref[base + 4:base + 5, :DIM_FF]
        b2 = vec_ref[base + 5:base + 6, :D_MODEL]
        ln2_g = vec_ref[base + 6:base + 7, :D_MODEL]
        ln2_b = vec_ref[base + 7:base + 8, :D_MODEL]

        # QKV projection over all 7 groups at once: (56,32)@(32,96).
        qkv = jnp.dot(x, w_in_r[...], preferred_element_type=jnp.float32) + b_in

        heads = []
        for h in range(NHEAD):
            qh = qkv[:, h * HEAD_DIM:(h + 1) * HEAD_DIM]
            kh = qkv[:, D_MODEL + h * HEAD_DIM:D_MODEL + (h + 1) * HEAD_DIM]
            vh = qkv[:, 2 * D_MODEL + h * HEAD_DIM:2 * D_MODEL + (h + 1) * HEAD_DIM]
            # (56,8)@(56,8)^T -> (56,56); group structure enforced by the mask.
            s = jax.lax.dot_general(qh, kh, (((1,), (1,)), ((), ())),
                                    preferred_element_type=jnp.float32)
            s = s + mask
            s = s - jnp.max(s, axis=-1, keepdims=True)
            p = jnp.exp(s)
            p = p * pl.reciprocal(jnp.sum(p, axis=-1, keepdims=True), approx=True)
            heads.append(jnp.dot(p, vh, preferred_element_type=jnp.float32))
        ctx = jnp.concatenate(heads, axis=-1)             # (56, 32)

        attn = jnp.dot(ctx, w_out_r[...], preferred_element_type=jnp.float32) + b_out
        h1 = _layernorm(x + attn, ln1_g, ln1_b)
        ff = jnp.maximum(
            jnp.dot(h1, wf1_r[...], preferred_element_type=jnp.float32) + b1, 0.0)
        ff = jnp.dot(ff, wf2_r[...], preferred_element_type=jnp.float32) + b2
        x = _layernorm(h1 + ff, ln2_g, ln2_b)

    # Head: out[b] = relu(concat_n x[n*B + b] @ W1 + b1) @ W2 + b2.
    # Accumulate per-slot contributions with sublane-aligned static slices —
    # avoids any in-kernel (56,32)->(8,224) relayout/reshape.
    hb1 = vec_ref[NUM_LAYERS * 8 + 0:NUM_LAYERS * 8 + 1, :HEAD_HIDDEN]
    hb2 = vec_ref[NUM_LAYERS * 8 + 1:NUM_LAYERS * 8 + 2, :1]
    acc = jnp.dot(x[0:BATCH, :], wh1_ref[0:D_MODEL, :],
                  preferred_element_type=jnp.float32)
    for n in range(1, SEQ):
        acc = acc + jnp.dot(x[n * BATCH:(n + 1) * BATCH, :],
                            wh1_ref[n * D_MODEL:(n + 1) * D_MODEL, :],
                            preferred_element_type=jnp.float32)
    hidden = jnp.maximum(acc + hb1, 0.0)                  # (B, 16)
    o_ref[...] = jnp.dot(hidden, wh2_ref[...],
                         preferred_element_type=jnp.float32) + hb2


def forward(tokens, kp):
    # Embedding gather + sinusoidal PE + (slot, batch) flatten: one tiny fused
    # XLA producer for the kernel's (ROWS, E) operand. (Dropout = eval no-op.)
    emb = jnp.take(kp['embedding'], tokens.T, axis=0)      # (SEQ, B, E)
    x = (emb + kp['pe'][:, None, :]).reshape(ROWS, D_MODEL)
    return pl.pallas_call(
        fused_forward_kernel,
        out_shape=jax.ShapeDtypeStruct((tokens.shape[0], 1), jnp.float32),
    )(x, kp['mask'], kp['vec'], *kp['layer_weights'], kp['wh1'], kp['wh2'])


# ---- parameters, packing, positional encoding --------------------------------
def make_positional_encoding(max_len, d_model):
    position = np.arange(max_len, dtype=np.float32)[:, None]
    div_term = np.exp(np.arange(0, d_model, 2, dtype=np.float32)
                      * (-math.log(10000.0) / d_model))
    pe = np.zeros((max_len, d_model), dtype=np.float32)
    pe[:, 0::2] = np.sin(position * div_term)
    pe[:, 1::2] = np.cos(position * div_term)
    return jnp.asarray(pe)


def init_params(key):
    std = 0.02
    keys = jax.random.split(key, NUM_LAYERS + 2)
    params = {'embedding': jax.random.normal(keys[0], (VOCAB, D_MODEL),
                                             jnp.float32) * 0.1}
    layers = []
    for l in range(NUM_LAYERS):
        lk = jax.random.split(keys[1 + l], 12)
        layers.append(dict(
            w_in_t=jax.random.normal(lk[0], (D_MODEL, 3 * D_MODEL), jnp.float32) * std,
            b_in=jax.random.normal(lk[1], (1, 3 * D_MODEL), jnp.float32) * std,
            w_out_t=jax.random.normal(lk[2], (D_MODEL, D_MODEL), jnp.float32) * std,
            b_out=jax.random.normal(lk[3], (1, D_MODEL), jnp.float32) * std,
            ln1_g=1.0 + jax.random.normal(lk[4], (1, D_MODEL), jnp.float32) * 0.1,
            ln1_b=jax.random.normal(lk[5], (1, D_MODEL), jnp.float32) * 0.1,
            w1_t=jax.random.normal(lk[6], (D_MODEL, DIM_FF), jnp.float32) * std,
            b1=jax.random.normal(lk[7], (1, DIM_FF), jnp.float32) * std,
            w2_t=jax.random.normal(lk[8], (DIM_FF, D_MODEL), jnp.float32) * std,
            b2=jax.random.normal(lk[9], (1, D_MODEL), jnp.float32) * std,
            ln2_g=1.0 + jax.random.normal(lk[10], (1, D_MODEL), jnp.float32) * 0.1,
            ln2_b=jax.random.normal(lk[11], (1, D_MODEL), jnp.float32) * 0.1,
        ))
    params['layers'] = layers
    hk = jax.random.split(keys[1 + NUM_LAYERS], 4)
    params['head'] = dict(
        w1_t=jax.random.normal(hk[0], (SEQ * D_MODEL, HEAD_HIDDEN), jnp.float32) * std,
        b1=jax.random.normal(hk[1], (1, HEAD_HIDDEN), jnp.float32) * std,
        w2_t=jax.random.normal(hk[2], (HEAD_HIDDEN, 1), jnp.float32) * std,
        b2=jax.random.normal(hk[3], (1, 1), jnp.float32) * std,
    )
    return params


def pack_params(params, pe):
    """Fold the attention scale into Q, pack all small vectors into one array."""
    scale = 1.0 / math.sqrt(HEAD_DIM)

    def pad_row(v):
        return jnp.pad(v, ((0, 0), (0, VEC_W - v.shape[1])))

    rows, layer_weights = [], []
    for p in params['layers']:
        w_in_t = p['w_in_t'].at[:, :D_MODEL].multiply(scale)   # scale Q columns
        b_in = p['b_in'].at[:, :D_MODEL].multiply(scale)        # and the Q bias
        layer_weights += [w_in_t, p['w_out_t'], p['w1_t'], p['w2_t']]
        rows += [pad_row(b_in), pad_row(p['b_out']),
                 pad_row(p['ln1_g']), pad_row(p['ln1_b']),
                 pad_row(p['b1']), pad_row(p['b2']),
                 pad_row(p['ln2_g']), pad_row(p['ln2_b'])]
    hp = params['head']
    rows += [pad_row(hp['b1']), pad_row(hp['b2'])]

    group = np.arange(ROWS) // BATCH                    # attention group = token slot
    mask = np.where(group[:, None] == group[None, :], 0.0, NEG_INF).astype(np.float32)

    return dict(
        embedding=params['embedding'],
        pe=pe,
        mask=jnp.asarray(mask),
        vec=jnp.concatenate(rows, axis=0),              # (NUM_LAYERS*8 + 2, 96)
        layer_weights=layer_weights,                    # 8 weight matrices
        wh1=hp['w1_t'],                                 # (7E, 16)
        wh2=hp['w2_t'],                                 # (16, 1)
    )


# ---- pure-JAX reference for validation --------------------------------------
def ref_forward(tokens, params, pe):
    emb = jnp.take(params['embedding'], tokens, axis=0)
    h = jnp.transpose(emb + pe[None], (1, 0, 2))        # (N=SEQ groups, S=B, E)
    for p in params['layers']:
        N, S, E = h.shape
        qkv = h @ p['w_in_t'] + p['b_in']
        q, k, v = jnp.split(qkv, 3, axis=-1)
        rh = lambda t: t.reshape(N, S, NHEAD, HEAD_DIM).transpose(0, 2, 1, 3)
        qh, kh, vh = rh(q), rh(k), rh(v)
        s = jnp.einsum('nhqd,nhkd->nhqk', qh, kh) / math.sqrt(HEAD_DIM)
        a = jax.nn.softmax(s, axis=-1)
        ctx = jnp.einsum('nhqk,nhkd->nhqd', a, vh).transpose(0, 2, 1, 3).reshape(N, S, E)
        attn = ctx @ p['w_out_t'] + p['b_out']
        h1 = _layernorm(h + attn, p['ln1_g'], p['ln1_b'])
        ff = jax.nn.relu(h1 @ p['w1_t'] + p['b1']) @ p['w2_t'] + p['b2']
        h = _layernorm(h1 + ff, p['ln2_g'], p['ln2_b'])
    h = jnp.transpose(h, (1, 0, 2)).reshape(tokens.shape[0], SEQ * D_MODEL)
    hp = params['head']
    return jax.nn.relu(h @ hp['w1_t'] + hp['b1']) @ hp['w2_t'] + hp['b2']


if __name__ == "__main__":
    key = jax.random.PRNGKey(0)
    pkey, tkey = jax.random.split(key)
    params = init_params(pkey)
    pe = make_positional_encoding(SEQ, D_MODEL)
    kparams = pack_params(params, pe)
    tokens = jax.random.randint(tkey, (BATCH, SEQ), 0, VOCAB, dtype=jnp.int32)

    out = jax.block_until_ready(forward(tokens, kparams))
    ref = jax.block_until_ready(ref_forward(tokens, params, pe))

    assert out.shape == (BATCH, 1)
    assert bool(jnp.all(jnp.isfinite(out)))
    np.testing.assert_allclose(np.asarray(out), np.asarray(ref),
                               rtol=2e-2, atol=2e-2)
    print("KERNEL_OK")
</pallas_src>

<mosaic_0001>
module attributes {stable_mosaic.version = 11 : i64} {
  func.func @fused_forward_kernel(%arg0: memref<56x32xf32, #tpu.memory_space<vmem>>, %arg1: memref<56x56xf32, #tpu.memory_space<vmem>>, %arg2: memref<18x96xf32, #tpu.memory_space<vmem>>, %arg3: memref<32x96xf32, #tpu.memory_space<vmem>>, %arg4: memref<32x32xf32, #tpu.memory_space<vmem>>, %arg5: memref<32x64xf32, #tpu.memory_space<vmem>>, %arg6: memref<64x32xf32, #tpu.memory_space<vmem>>, %arg7: memref<32x96xf32, #tpu.memory_space<vmem>>, %arg8: memref<32x32xf32, #tpu.memory_space<vmem>>, %arg9: memref<32x64xf32, #tpu.memory_space<vmem>>, %arg10: memref<64x32xf32, #tpu.memory_space<vmem>>, %arg11: memref<224x16xf32, #tpu.memory_space<vmem>>, %arg12: memref<16x1xf32, #tpu.memory_space<vmem>>, %arg13: memref<8x1xf32, #tpu.memory_space<vmem>>) attributes {dimension_semantics = [], scalar_prefetch = 0 : i64, scratch_operands = 0 : i64, tpu.core_type = #tpu.core_type<tc>} {
    %c0 = arith.constant 0 : index
    %c0_0 = arith.constant 0 : index
    %0 = vector.load %arg0[%c0, %c0_0] : memref<56x32xf32, #tpu.memory_space<vmem>>, vector<56x32xf32>
    %c0_1 = arith.constant 0 : index
    %c0_2 = arith.constant 0 : index
    %1 = vector.load %arg1[%c0_1, %c0_2] : memref<56x56xf32, #tpu.memory_space<vmem>>, vector<56x56xf32>
    %c0_3 = arith.constant 0 : index
    %c0_4 = arith.constant 0 : index
    %2 = vector.load %arg2[%c0_3, %c0_4] : memref<18x96xf32, #tpu.memory_space<vmem>>, vector<1x96xf32>
    %c1 = arith.constant 1 : index
    %c0_5 = arith.constant 0 : index
    %3 = vector.load %arg2[%c1, %c0_5] : memref<18x96xf32, #tpu.memory_space<vmem>>, vector<1x32xf32>
    %c2 = arith.constant 2 : index
    %c0_6 = arith.constant 0 : index
    %4 = vector.load %arg2[%c2, %c0_6] : memref<18x96xf32, #tpu.memory_space<vmem>>, vector<1x32xf32>
    %c3 = arith.constant 3 : index
    %c0_7 = arith.constant 0 : index
    %5 = vector.load %arg2[%c3, %c0_7] : memref<18x96xf32, #tpu.memory_space<vmem>>, vector<1x32xf32>
    %c4 = arith.constant 4 : index
    %c0_8 = arith.constant 0 : index
    %6 = vector.load %arg2[%c4, %c0_8] : memref<18x96xf32, #tpu.memory_space<vmem>>, vector<1x64xf32>
    %c5 = arith.constant 5 : index
    %c0_9 = arith.constant 0 : index
    %7 = vector.load %arg2[%c5, %c0_9] : memref<18x96xf32, #tpu.memory_space<vmem>>, vector<1x32xf32>
    %c6 = arith.constant 6 : index
    %c0_10 = arith.constant 0 : index
    %8 = vector.load %arg2[%c6, %c0_10] : memref<18x96xf32, #tpu.memory_space<vmem>>, vector<1x32xf32>
    %c7 = arith.constant 7 : index
    %c0_11 = arith.constant 0 : index
    %9 = vector.load %arg2[%c7, %c0_11] : memref<18x96xf32, #tpu.memory_space<vmem>>, vector<1x32xf32>
    %c0_12 = arith.constant 0 : index
    %c0_13 = arith.constant 0 : index
    %10 = vector.load %arg3[%c0_12, %c0_13] : memref<32x96xf32, #tpu.memory_space<vmem>>, vector<32x96xf32>
    %cst = arith.constant dense<0.000000e+00> : vector<56x96xf32>
    %11 = tpu.matmul %0, %10, %cst {dimension_numbers = #tpu.dot_dimension_numbers<[1], [0], [0], [1], [0, 0, 1, 1], [], []>} : vector<56x32xf32>, vector<32x96xf32>, vector<56x96xf32> -> vector<56x96xf32>
    %12 = vector.broadcast %2 : vector<1x96xf32> to vector<56x96xf32>
    %13 = arith.addf %11, %12 : vector<56x96xf32>
    %14 = vector.extract_strided_slice %13 {offsets = [0, 0], sizes = [56, 8], strides = [1, 1]} : vector<56x96xf32> to vector<56x8xf32>
    %15 = vector.extract_strided_slice %13 {offsets = [0, 32], sizes = [56, 8], strides = [1, 1]} : vector<56x96xf32> to vector<56x8xf32>
    %16 = vector.extract_strided_slice %13 {offsets = [0, 64], sizes = [56, 8], strides = [1, 1]} : vector<56x96xf32> to vector<56x8xf32>
    %cst_14 = arith.constant dense<0.000000e+00> : vector<56x56xf32>
    %17 = tpu.matmul %14, %15, %cst_14 {dimension_numbers = #tpu.dot_dimension_numbers<[1], [1], [0], [0], [0, 0, 1, 0], [], []>} : vector<56x8xf32>, vector<56x8xf32>, vector<56x56xf32> -> vector<56x56xf32>
    %18 = arith.addf %17, %1 : vector<56x56xf32>
    %cst_15 = arith.constant dense<0xFF800000> : vector<56xf32>
    %19 = vector.multi_reduction <maximumf>, %18, %cst_15 [1] : vector<56x56xf32> to vector<56xf32>
    %20 = vector.shape_cast %19 : vector<56xf32> to vector<56x1xf32>
    %21 = vector.broadcast %20 : vector<56x1xf32> to vector<56x56xf32>
    %22 = arith.subf %18, %21 : vector<56x56xf32>
    %23 = math.exp %22 : vector<56x56xf32>
    %cst_16 = arith.constant dense<0.000000e+00> : vector<56xf32>
    %24 = vector.multi_reduction <add>, %23, %cst_16 [1] : vector<56x56xf32> to vector<56xf32>
    %25 = vector.shape_cast %24 : vector<56xf32> to vector<56x1xf32>
    %26 = tpu.reciprocal %25 {approx = true} : vector<56x1xf32> -> vector<56x1xf32>
    %27 = vector.broadcast %26 : vector<56x1xf32> to vector<56x56xf32>
    %28 = arith.mulf %23, %27 : vector<56x56xf32>
    %cst_17 = arith.constant dense<0.000000e+00> : vector<56x8xf32>
    %29 = tpu.matmul %28, %16, %cst_17 {dimension_numbers = #tpu.dot_dimension_numbers<[1], [0], [0], [1], [0, 0, 1, 1], [], []>} : vector<56x56xf32>, vector<56x8xf32>, vector<56x8xf32> -> vector<56x8xf32>
    %30 = vector.extract_strided_slice %13 {offsets = [0, 8], sizes = [56, 8], strides = [1, 1]} : vector<56x96xf32> to vector<56x8xf32>
    %31 = vector.extract_strided_slice %13 {offsets = [0, 40], sizes = [56, 8], strides = [1, 1]} : vector<56x96xf32> to vector<56x8xf32>
    %32 = vector.extract_strided_slice %13 {offsets = [0, 72], sizes = [56, 8], strides = [1, 1]} : vector<56x96xf32> to vector<56x8xf32>
    %cst_18 = arith.constant dense<0.000000e+00> : vector<56x56xf32>
    %33 = tpu.matmul %30, %31, %cst_18 {dimension_numbers = #tpu.dot_dimension_numbers<[1], [1], [0], [0], [0, 0, 1, 0], [], []>} : vector<56x8xf32>, vector<56x8xf32>, vector<56x56xf32> -> vector<56x56xf32>
    %34 = arith.addf %33, %1 : vector<56x56xf32>
    %cst_19 = arith.constant dense<0xFF800000> : vector<56xf32>
    %35 = vector.multi_reduction <maximumf>, %34, %cst_19 [1] : vector<56x56xf32> to vector<56xf32>
    %36 = vector.shape_cast %35 : vector<56xf32> to vector<56x1xf32>
    %37 = vector.broadcast %36 : vector<56x1xf32> to vector<56x56xf32>
    %38 = arith.subf %34, %37 : vector<56x56xf32>
    %39 = math.exp %38 : vector<56x56xf32>
    %cst_20 = arith.constant dense<0.000000e+00> : vector<56xf32>
    %40 = vector.multi_reduction <add>, %39, %cst_20 [1] : vector<56x56xf32> to vector<56xf32>
    %41 = vector.shape_cast %40 : vector<56xf32> to vector<56x1xf32>
    %42 = tpu.reciprocal %41 {approx = true} : vector<56x1xf32> -> vector<56x1xf32>
    %43 = vector.broadcast %42 : vector<56x1xf32> to vector<56x56xf32>
    %44 = arith.mulf %39, %43 : vector<56x56xf32>
    %cst_21 = arith.constant dense<0.000000e+00> : vector<56x8xf32>
    %45 = tpu.matmul %44, %32, %cst_21 {dimension_numbers = #tpu.dot_dimension_numbers<[1], [0], [0], [1], [0, 0, 1, 1], [], []>} : vector<56x56xf32>, vector<56x8xf32>, vector<56x8xf32> -> vector<56x8xf32>
    %46 = vector.extract_strided_slice %13 {offsets = [0, 16], sizes = [56, 8], strides = [1, 1]} : vector<56x96xf32> to vector<56x8xf32>
    %47 = vector.extract_strided_slice %13 {offsets = [0, 48], sizes = [56, 8], strides = [1, 1]} : vector<56x96xf32> to vector<56x8xf32>
    %48 = vector.extract_strided_slice %13 {offsets = [0, 80], sizes = [56, 8], strides = [1, 1]} : vector<56x96xf32> to vector<56x8xf32>
    %cst_22 = arith.constant dense<0.000000e+00> : vector<56x56xf32>
    %49 = tpu.matmul %46, %47, %cst_22 {dimension_numbers = #tpu.dot_dimension_numbers<[1], [1], [0], [0], [0, 0, 1, 0], [], []>} : vector<56x8xf32>, vector<56x8xf32>, vector<56x56xf32> -> vector<56x56xf32>
    %50 = arith.addf %49, %1 : vector<56x56xf32>
    %cst_23 = arith.constant dense<0xFF800000> : vector<56xf32>
    %51 = vector.multi_reduction <maximumf>, %50, %cst_23 [1] : vector<56x56xf32> to vector<56xf32>
    %52 = vector.shape_cast %51 : vector<56xf32> to vector<56x1xf32>
    %53 = vector.broadcast %52 : vector<56x1xf32> to vector<56x56xf32>
    %54 = arith.subf %50, %53 : vector<56x56xf32>
    %55 = math.exp %54 : vector<56x56xf32>
    %cst_24 = arith.constant dense<0.000000e+00> : vector<56xf32>
    %56 = vector.multi_reduction <add>, %55, %cst_24 [1] : vector<56x56xf32> to vector<56xf32>
    %57 = vector.shape_cast %56 : vector<56xf32> to vector<56x1xf32>
    %58 = tpu.reciprocal %57 {approx = true} : vector<56x1xf32> -> vector<56x1xf32>
    %59 = vector.broadcast %58 : vector<56x1xf32> to vector<56x56xf32>
    %60 = arith.mulf %55, %59 : vector<56x56xf32>
    %cst_25 = arith.constant dense<0.000000e+00> : vector<56x8xf32>
    %61 = tpu.matmul %60, %48, %cst_25 {dimension_numbers = #tpu.dot_dimension_numbers<[1], [0], [0], [1], [0, 0, 1, 1], [], []>} : vector<56x56xf32>, vector<56x8xf32>, vector<56x8xf32> -> vector<56x8xf32>
    %62 = vector.extract_strided_slice %13 {offsets = [0, 24], sizes = [56, 8], strides = [1, 1]} : vector<56x96xf32> to vector<56x8xf32>
    %63 = vector.extract_strided_slice %13 {offsets = [0, 56], sizes = [56, 8], strides = [1, 1]} : vector<56x96xf32> to vector<56x8xf32>
    %64 = vector.extract_strided_slice %13 {offsets = [0, 88], sizes = [56, 8], strides = [1, 1]} : vector<56x96xf32> to vector<56x8xf32>
    %cst_26 = arith.constant dense<0.000000e+00> : vector<56x56xf32>
    %65 = tpu.matmul %62, %63, %cst_26 {dimension_numbers = #tpu.dot_dimension_numbers<[1], [1], [0], [0], [0, 0, 1, 0], [], []>} : vector<56x8xf32>, vector<56x8xf32>, vector<56x56xf32> -> vector<56x56xf32>
    %66 = arith.addf %65, %1 : vector<56x56xf32>
    %cst_27 = arith.constant dense<0xFF800000> : vector<56xf32>
    %67 = vector.multi_reduction <maximumf>, %66, %cst_27 [1] : vector<56x56xf32> to vector<56xf32>
    %68 = vector.shape_cast %67 : vector<56xf32> to vector<56x1xf32>
    %69 = vector.broadcast %68 : vector<56x1xf32> to vector<56x56xf32>
    %70 = arith.subf %66, %69 : vector<56x56xf32>
    %71 = math.exp %70 : vector<56x56xf32>
    %cst_28 = arith.constant dense<0.000000e+00> : vector<56xf32>
    %72 = vector.multi_reduction <add>, %71, %cst_28 [1] : vector<56x56xf32> to vector<56xf32>
    %73 = vector.shape_cast %72 : vector<56xf32> to vector<56x1xf32>
    %74 = tpu.reciprocal %73 {approx = true} : vector<56x1xf32> -> vector<56x1xf32>
    %75 = vector.broadcast %74 : vector<56x1xf32> to vector<56x56xf32>
    %76 = arith.mulf %71, %75 : vector<56x56xf32>
    %cst_29 = arith.constant dense<0.000000e+00> : vector<56x8xf32>
    %77 = tpu.matmul %76, %64, %cst_29 {dimension_numbers = #tpu.dot_dimension_numbers<[1], [0], [0], [1], [0, 0, 1, 1], [], []>} : vector<56x56xf32>, vector<56x8xf32>, vector<56x8xf32> -> vector<56x8xf32>
    %78 = tpu.concatenate %29, %45, %61, %77 in 1 : vector<56x8xf32>, vector<56x8xf32>, vector<56x8xf32>, vector<56x8xf32> -> vector<56x32xf32>
    %c0_30 = arith.constant 0 : index
    %c0_31 = arith.constant 0 : index
    %79 = vector.load %arg4[%c0_30, %c0_31] : memref<32x32xf32, #tpu.memory_space<vmem>>, vector<32x32xf32>
    %cst_32 = arith.constant dense<0.000000e+00> : vector<56x32xf32>
    %80 = tpu.matmul %78, %79, %cst_32 {dimension_numbers = #tpu.dot_dimension_numbers<[1], [0], [0], [1], [0, 0, 1, 1], [], []>} : vector<56x32xf32>, vector<32x32xf32>, vector<56x32xf32> -> vector<56x32xf32>
    %81 = vector.broadcast %3 : vector<1x32xf32> to vector<56x32xf32>
    %82 = arith.addf %80, %81 : vector<56x32xf32>
    %83 = arith.addf %0, %82 : vector<56x32xf32>
    %cst_33 = arith.constant dense<0.000000e+00> : vector<56xf32>
    %84 = vector.multi_reduction <add>, %83, %cst_33 [1] : vector<56x32xf32> to vector<56xf32>
    %85 = vector.shape_cast %84 : vector<56xf32> to vector<56x1xf32>
    %cst_34 = arith.constant 3.200000e+01 : f32
    %86 = vector.broadcast %cst_34 : f32 to vector<56x1xf32>
    %87 = arith.divf %85, %86 : vector<56x1xf32>
    %88 = vector.broadcast %87 : vector<56x1xf32> to vector<56x32xf32>
    %89 = arith.subf %83, %88 : vector<56x32xf32>
    %90 = arith.mulf %89, %89 : vector<56x32xf32>
    %cst_35 = arith.constant dense<0.000000e+00> : vector<56xf32>
    %91 = vector.multi_reduction <add>, %90, %cst_35 [1] : vector<56x32xf32> to vector<56xf32>
    %92 = vector.shape_cast %91 : vector<56xf32> to vector<56x1xf32>
    %cst_36 = arith.constant 3.200000e+01 : f32
    %93 = vector.broadcast %cst_36 : f32 to vector<56x1xf32>
    %94 = arith.divf %92, %93 : vector<56x1xf32>
    %cst_37 = arith.constant 9.99999974E-6 : f32
    %95 = vector.broadcast %cst_37 : f32 to vector<56x1xf32>
    %96 = arith.addf %94, %95 : vector<56x1xf32>
    %97 = math.rsqrt %96 : vector<56x1xf32>
    %98 = vector.broadcast %97 : vector<56x1xf32> to vector<56x32xf32>
    %99 = arith.mulf %89, %98 : vector<56x32xf32>
    %100 = vector.broadcast %4 : vector<1x32xf32> to vector<56x32xf32>
    %101 = arith.mulf %99, %100 : vector<56x32xf32>
    %102 = vector.broadcast %5 : vector<1x32xf32> to vector<56x32xf32>
    %103 = arith.addf %101, %102 : vector<56x32xf32>
    %c0_38 = arith.constant 0 : index
    %c0_39 = arith.constant 0 : index
    %104 = vector.load %arg5[%c0_38, %c0_39] : memref<32x64xf32, #tpu.memory_space<vmem>>, vector<32x64xf32>
    %cst_40 = arith.constant dense<0.000000e+00> : vector<56x64xf32>
    %105 = tpu.matmul %103, %104, %cst_40 {dimension_numbers = #tpu.dot_dimension_numbers<[1], [0], [0], [1], [0, 0, 1, 1], [], []>} : vector<56x32xf32>, vector<32x64xf32>, vector<56x64xf32> -> vector<56x64xf32>
    %106 = vector.broadcast %6 : vector<1x64xf32> to vector<56x64xf32>
    %107 = arith.addf %105, %106 : vector<56x64xf32>
    %cst_41 = arith.constant 0.000000e+00 : f32
    %108 = vector.broadcast %cst_41 : f32 to vector<56x64xf32>
    %109 = arith.maximumf %107, %108 : vector<56x64xf32>
    %c0_42 = arith.constant 0 : index
    %c0_43 = arith.constant 0 : index
    %110 = vector.load %arg6[%c0_42, %c0_43] : memref<64x32xf32, #tpu.memory_space<vmem>>, vector<64x32xf32>
    %cst_44 = arith.constant dense<0.000000e+00> : vector<56x32xf32>
    %111 = tpu.matmul %109, %110, %cst_44 {dimension_numbers = #tpu.dot_dimension_numbers<[1], [0], [0], [1], [0, 0, 1, 1], [], []>} : vector<56x64xf32>, vector<64x32xf32>, vector<56x32xf32> -> vector<56x32xf32>
    %112 = vector.broadcast %7 : vector<1x32xf32> to vector<56x32xf32>
    %113 = arith.addf %111, %112 : vector<56x32xf32>
    %114 = arith.addf %103, %113 : vector<56x32xf32>
    %cst_45 = arith.constant dense<0.000000e+00> : vector<56xf32>
    %115 = vector.multi_reduction <add>, %114, %cst_45 [1] : vector<56x32xf32> to vector<56xf32>
    %116 = vector.shape_cast %115 : vector<56xf32> to vector<56x1xf32>
    %cst_46 = arith.constant 3.200000e+01 : f32
    %117 = vector.broadcast %cst_46 : f32 to vector<56x1xf32>
    %118 = arith.divf %116, %117 : vector<56x1xf32>
    %119 = vector.broadcast %118 : vector<56x1xf32> to vector<56x32xf32>
    %120 = arith.subf %114, %119 : vector<56x32xf32>
    %121 = arith.mulf %120, %120 : vector<56x32xf32>
    %cst_47 = arith.constant dense<0.000000e+00> : vector<56xf32>
    %122 = vector.multi_reduction <add>, %121, %cst_47 [1] : vector<56x32xf32> to vector<56xf32>
    %123 = vector.shape_cast %122 : vector<56xf32> to vector<56x1xf32>
    %cst_48 = arith.constant 3.200000e+01 : f32
    %124 = vector.broadcast %cst_48 : f32 to vector<56x1xf32>
    %125 = arith.divf %123, %124 : vector<56x1xf32>
    %cst_49 = arith.constant 9.99999974E-6 : f32
    %126 = vector.broadcast %cst_49 : f32 to vector<56x1xf32>
    %127 = arith.addf %125, %126 : vector<56x1xf32>
    %128 = math.rsqrt %127 : vector<56x1xf32>
    %129 = vector.broadcast %128 : vector<56x1xf32> to vector<56x32xf32>
    %130 = arith.mulf %120, %129 : vector<56x32xf32>
    %131 = vector.broadcast %8 : vector<1x32xf32> to vector<56x32xf32>
    %132 = arith.mulf %130, %131 : vector<56x32xf32>
    %133 = vector.broadcast %9 : vector<1x32xf32> to vector<56x32xf32>
    %134 = arith.addf %132, %133 : vector<56x32xf32>
    %c8 = arith.constant 8 : index
    %c0_50 = arith.constant 0 : index
    %135 = vector.load %arg2[%c8, %c0_50] : memref<18x96xf32, #tpu.memory_space<vmem>>, vector<1x96xf32>
    %c9 = arith.constant 9 : index
    %c0_51 = arith.constant 0 : index
    %136 = vector.load %arg2[%c9, %c0_51] : memref<18x96xf32, #tpu.memory_space<vmem>>, vector<1x32xf32>
    %c10 = arith.constant 10 : index
    %c0_52 = arith.constant 0 : index
    %137 = vector.load %arg2[%c10, %c0_52] : memref<18x96xf32, #tpu.memory_space<vmem>>, vector<1x32xf32>
    %c11 = arith.constant 11 : index
    %c0_53 = arith.constant 0 : index
    %138 = vector.load %arg2[%c11, %c0_53] : memref<18x96xf32, #tpu.memory_space<vmem>>, vector<1x32xf32>
    %c12 = arith.constant 12 : index
    %c0_54 = arith.constant 0 : index
    %139 = vector.load %arg2[%c12, %c0_54] : memref<18x96xf32, #tpu.memory_space<vmem>>, vector<1x64xf32>
    %c13 = arith.constant 13 : index
    %c0_55 = arith.constant 0 : index
    %140 = vector.load %arg2[%c13, %c0_55] : memref<18x96xf32, #tpu.memory_space<vmem>>, vector<1x32xf32>
    %c14 = arith.constant 14 : index
    %c0_56 = arith.constant 0 : index
    %141 = vector.load %arg2[%c14, %c0_56] : memref<18x96xf32, #tpu.memory_space<vmem>>, vector<1x32xf32>
    %c15 = arith.constant 15 : index
    %c0_57 = arith.constant 0 : index
    %142 = vector.load %arg2[%c15, %c0_57] : memref<18x96xf32, #tpu.memory_space<vmem>>, vector<1x32xf32>
    %c0_58 = arith.constant 0 : index
    %c0_59 = arith.constant 0 : index
    %143 = vector.load %arg7[%c0_58, %c0_59] : memref<32x96xf32, #tpu.memory_space<vmem>>, vector<32x96xf32>
    %cst_60 = arith.constant dense<0.000000e+00> : vector<56x96xf32>
    %144 = tpu.matmul %134, %143, %cst_60 {dimension_numbers = #tpu.dot_dimension_numbers<[1], [0], [0], [1], [0, 0, 1, 1], [], []>} : vector<56x32xf32>, vector<32x96xf32>, vector<56x96xf32> -> vector<56x96xf32>
    %145 = vector.broadcast %135 : vector<1x96xf32> to vector<56x96xf32>
    %146 = arith.addf %144, %145 : vector<56x96xf32>
    %147 = vector.extract_strided_slice %146 {offsets = [0, 0], sizes = [56, 8], strides = [1, 1]} : vector<56x96xf32> to vector<56x8xf32>
    %148 = vector.extract_strided_slice %146 {offsets = [0, 32], sizes = [56, 8], strides = [1, 1]} : vector<56x96xf32> to vector<56x8xf32>
    %149 = vector.extract_strided_slice %146 {offsets = [0, 64], sizes = [56, 8], strides = [1, 1]} : vector<56x96xf32> to vector<56x8xf32>
    %cst_61 = arith.constant dense<0.000000e+00> : vector<56x56xf32>
    %150 = tpu.matmul %147, %148, %cst_61 {dimension_numbers = #tpu.dot_dimension_numbers<[1], [1], [0], [0], [0, 0, 1, 0], [], []>} : vector<56x8xf32>, vector<56x8xf32>, vector<56x56xf32> -> vector<56x56xf32>
    %151 = arith.addf %150, %1 : vector<56x56xf32>
    %cst_62 = arith.constant dense<0xFF800000> : vector<56xf32>
    %152 = vector.multi_reduction <maximumf>, %151, %cst_62 [1] : vector<56x56xf32> to vector<56xf32>
    %153 = vector.shape_cast %152 : vector<56xf32> to vector<56x1xf32>
    %154 = vector.broadcast %153 : vector<56x1xf32> to vector<56x56xf32>
    %155 = arith.subf %151, %154 : vector<56x56xf32>
    %156 = math.exp %155 : vector<56x56xf32>
    %cst_63 = arith.constant dense<0.000000e+00> : vector<56xf32>
    %157 = vector.multi_reduction <add>, %156, %cst_63 [1] : vector<56x56xf32> to vector<56xf32>
    %158 = vector.shape_cast %157 : vector<56xf32> to vector<56x1xf32>
    %159 = tpu.reciprocal %158 {approx = true} : vector<56x1xf32> -> vector<56x1xf32>
    %160 = vector.broadcast %159 : vector<56x1xf32> to vector<56x56xf32>
    %161 = arith.mulf %156, %160 : vector<56x56xf32>
    %cst_64 = arith.constant dense<0.000000e+00> : vector<56x8xf32>
    %162 = tpu.matmul %161, %149, %cst_64 {dimension_numbers = #tpu.dot_dimension_numbers<[1], [0], [0], [1], [0, 0, 1, 1], [], []>} : vector<56x56xf32>, vector<56x8xf32>, vector<56x8xf32> -> vector<56x8xf32>
    %163 = vector.extract_strided_slice %146 {offsets = [0, 8], sizes = [56, 8], strides = [1, 1]} : vector<56x96xf32> to vector<56x8xf32>
    %164 = vector.extract_strided_slice %146 {offsets = [0, 40], sizes = [56, 8], strides = [1, 1]} : vector<56x96xf32> to vector<56x8xf32>
    %165 = vector.extract_strided_slice %146 {offsets = [0, 72], sizes = [56, 8], strides = [1, 1]} : vector<56x96xf32> to vector<56x8xf32>
    %cst_65 = arith.constant dense<0.000000e+00> : vector<56x56xf32>
    %166 = tpu.matmul %163, %164, %cst_65 {dimension_numbers = #tpu.dot_dimension_numbers<[1], [1], [0], [0], [0, 0, 1, 0], [], []>} : vector<56x8xf32>, vector<56x8xf32>, vector<56x56xf32> -> vector<56x56xf32>
    %167 = arith.addf %166, %1 : vector<56x56xf32>
    %cst_66 = arith.constant dense<0xFF800000> : vector<56xf32>
    %168 = vector.multi_reduction <maximumf>, %167, %cst_66 [1] : vector<56x56xf32> to vector<56xf32>
    %169 = vector.shape_cast %168 : vector<56xf32> to vector<56x1xf32>
    %170 = vector.broadcast %169 : vector<56x1xf32> to vector<56x56xf32>
    %171 = arith.subf %167, %170 : vector<56x56xf32>
    %172 = math.exp %171 : vector<56x56xf32>
    %cst_67 = arith.constant dense<0.000000e+00> : vector<56xf32>
    %173 = vector.multi_reduction <add>, %172, %cst_67 [1] : vector<56x56xf32> to vector<56xf32>
    %174 = vector.shape_cast %173 : vector<56xf32> to vector<56x1xf32>
    %175 = tpu.reciprocal %174 {approx = true} : vector<56x1xf32> -> vector<56x1xf32>
    %176 = vector.broadcast %175 : vector<56x1xf32> to vector<56x56xf32>
    %177 = arith.mulf %172, %176 : vector<56x56xf32>
    %cst_68 = arith.constant dense<0.000000e+00> : vector<56x8xf32>
    %178 = tpu.matmul %177, %165, %cst_68 {dimension_numbers = #tpu.dot_dimension_numbers<[1], [0], [0], [1], [0, 0, 1, 1], [], []>} : vector<56x56xf32>, vector<56x8xf32>, vector<56x8xf32> -> vector<56x8xf32>
    %179 = vector.extract_strided_slice %146 {offsets = [0, 16], sizes = [56, 8], strides = [1, 1]} : vector<56x96xf32> to vector<56x8xf32>
    %180 = vector.extract_strided_slice %146 {offsets = [0, 48], sizes = [56, 8], strides = [1, 1]} : vector<56x96xf32> to vector<56x8xf32>
    %181 = vector.extract_strided_slice %146 {offsets = [0, 80], sizes = [56, 8], strides = [1, 1]} : vector<56x96xf32> to vector<56x8xf32>
    %cst_69 = arith.constant dense<0.000000e+00> : vector<56x56xf32>
    %182 = tpu.matmul %179, %180, %cst_69 {dimension_numbers = #tpu.dot_dimension_numbers<[1], [1], [0], [0], [0, 0, 1, 0], [], []>} : vector<56x8xf32>, vector<56x8xf32>, vector<56x56xf32> -> vector<56x56xf32>
    %183 = arith.addf %182, %1 : vector<56x56xf32>
    %cst_70 = arith.constant dense<0xFF800000> : vector<56xf32>
    %184 = vector.multi_reduction <maximumf>, %183, %cst_70 [1] : vector<56x56xf32> to vector<56xf32>
    %185 = vector.shape_cast %184 : vector<56xf32> to vector<56x1xf32>
    %186 = vector.broadcast %185 : vector<56x1xf32> to vector<56x56xf32>
    %187 = arith.subf %183, %186 : vector<56x56xf32>
    %188 = math.exp %187 : vector<56x56xf32>
    %cst_71 = arith.constant dense<0.000000e+00> : vector<56xf32>
    %189 = vector.multi_reduction <add>, %188, %cst_71 [1] : vector<56x56xf32> to vector<56xf32>
    %190 = vector.shape_cast %189 : vector<56xf32> to vector<56x1xf32>
    %191 = tpu.reciprocal %190 {approx = true} : vector<56x1xf32> -> vector<56x1xf32>
    %192 = vector.broadcast %191 : vector<56x1xf32> to vector<56x56xf32>
    %193 = arith.mulf %188, %192 : vector<56x56xf32>
    %cst_72 = arith.constant dense<0.000000e+00> : vector<56x8xf32>
    %194 = tpu.matmul %193, %181, %cst_72 {dimension_numbers = #tpu.dot_dimension_numbers<[1], [0], [0], [1], [0, 0, 1, 1], [], []>} : vector<56x56xf32>, vector<56x8xf32>, vector<56x8xf32> -> vector<56x8xf32>
    %195 = vector.extract_strided_slice %146 {offsets = [0, 24], sizes = [56, 8], strides = [1, 1]} : vector<56x96xf32> to vector<56x8xf32>
    %196 = vector.extract_strided_slice %146 {offsets = [0, 56], sizes = [56, 8], strides = [1, 1]} : vector<56x96xf32> to vector<56x8xf32>
    %197 = vector.extract_strided_slice %146 {offsets = [0, 88], sizes = [56, 8], strides = [1, 1]} : vector<56x96xf32> to vector<56x8xf32>
    %cst_73 = arith.constant dense<0.000000e+00> : vector<56x56xf32>
    %198 = tpu.matmul %195, %196, %cst_73 {dimension_numbers = #tpu.dot_dimension_numbers<[1], [1], [0], [0], [0, 0, 1, 0], [], []>} : vector<56x8xf32>, vector<56x8xf32>, vector<56x56xf32> -> vector<56x56xf32>
    %199 = arith.addf %198, %1 : vector<56x56xf32>
    %cst_74 = arith.constant dense<0xFF800000> : vector<56xf32>
    %200 = vector.multi_reduction <maximumf>, %199, %cst_74 [1] : vector<56x56xf32> to vector<56xf32>
    %201 = vector.shape_cast %200 : vector<56xf32> to vector<56x1xf32>
    %202 = vector.broadcast %201 : vector<56x1xf32> to vector<56x56xf32>
    %203 = arith.subf %199, %202 : vector<56x56xf32>
    %204 = math.exp %203 : vector<56x56xf32>
    %cst_75 = arith.constant dense<0.000000e+00> : vector<56xf32>
    %205 = vector.multi_reduction <add>, %204, %cst_75 [1] : vector<56x56xf32> to vector<56xf32>
    %206 = vector.shape_cast %205 : vector<56xf32> to vector<56x1xf32>
    %207 = tpu.reciprocal %206 {approx = true} : vector<56x1xf32> -> vector<56x1xf32>
    %208 = vector.broadcast %207 : vector<56x1xf32> to vector<56x56xf32>
    %209 = arith.mulf %204, %208 : vector<56x56xf32>
    %cst_76 = arith.constant dense<0.000000e+00> : vector<56x8xf32>
    %210 = tpu.matmul %209, %197, %cst_76 {dimension_numbers = #tpu.dot_dimension_numbers<[1], [0], [0], [1], [0, 0, 1, 1], [], []>} : vector<56x56xf32>, vector<56x8xf32>, vector<56x8xf32> -> vector<56x8xf32>
    %211 = tpu.concatenate %162, %178, %194, %210 in 1 : vector<56x8xf32>, vector<56x8xf32>, vector<56x8xf32>, vector<56x8xf32> -> vector<56x32xf32>
    %c0_77 = arith.constant 0 : index
    %c0_78 = arith.constant 0 : index
    %212 = vector.load %arg8[%c0_77, %c0_78] : memref<32x32xf32, #tpu.memory_space<vmem>>, vector<32x32xf32>
    %cst_79 = arith.constant dense<0.000000e+00> : vector<56x32xf32>
    %213 = tpu.matmul %211, %212, %cst_79 {dimension_numbers = #tpu.dot_dimension_numbers<[1], [0], [0], [1], [0, 0, 1, 1], [], []>} : vector<56x32xf32>, vector<32x32xf32>, vector<56x32xf32> -> vector<56x32xf32>
    %214 = vector.broadcast %136 : vector<1x32xf32> to vector<56x32xf32>
    %215 = arith.addf %213, %214 : vector<56x32xf32>
    %216 = arith.addf %134, %215 : vector<56x32xf32>
    %cst_80 = arith.constant dense<0.000000e+00> : vector<56xf32>
    %217 = vector.multi_reduction <add>, %216, %cst_80 [1] : vector<56x32xf32> to vector<56xf32>
    %218 = vector.shape_cast %217 : vector<56xf32> to vector<56x1xf32>
    %cst_81 = arith.constant 3.200000e+01 : f32
    %219 = vector.broadcast %cst_81 : f32 to vector<56x1xf32>
    %220 = arith.divf %218, %219 : vector<56x1xf32>
    %221 = vector.broadcast %220 : vector<56x1xf32> to vector<56x32xf32>
    %222 = arith.subf %216, %221 : vector<56x32xf32>
    %223 = arith.mulf %222, %222 : vector<56x32xf32>
    %cst_82 = arith.constant dense<0.000000e+00> : vector<56xf32>
    %224 = vector.multi_reduction <add>, %223, %cst_82 [1] : vector<56x32xf32> to vector<56xf32>
    %225 = vector.shape_cast %224 : vector<56xf32> to vector<56x1xf32>
    %cst_83 = arith.constant 3.200000e+01 : f32
    %226 = vector.broadcast %cst_83 : f32 to vector<56x1xf32>
    %227 = arith.divf %225, %226 : vector<56x1xf32>
    %cst_84 = arith.constant 9.99999974E-6 : f32
    %228 = vector.broadcast %cst_84 : f32 to vector<56x1xf32>
    %229 = arith.addf %227, %228 : vector<56x1xf32>
    %230 = math.rsqrt %229 : vector<56x1xf32>
    %231 = vector.broadcast %230 : vector<56x1xf32> to vector<56x32xf32>
    %232 = arith.mulf %222, %231 : vector<56x32xf32>
    %233 = vector.broadcast %137 : vector<1x32xf32> to vector<56x32xf32>
    %234 = arith.mulf %232, %233 : vector<56x32xf32>
    %235 = vector.broadcast %138 : vector<1x32xf32> to vector<56x32xf32>
    %236 = arith.addf %234, %235 : vector<56x32xf32>
    %c0_85 = arith.constant 0 : index
    %c0_86 = arith.constant 0 : index
    %237 = vector.load %arg9[%c0_85, %c0_86] : memref<32x64xf32, #tpu.memory_space<vmem>>, vector<32x64xf32>
    %cst_87 = arith.constant dense<0.000000e+00> : vector<56x64xf32>
    %238 = tpu.matmul %236, %237, %cst_87 {dimension_numbers = #tpu.dot_dimension_numbers<[1], [0], [0], [1], [0, 0, 1, 1], [], []>} : vector<56x32xf32>, vector<32x64xf32>, vector<56x64xf32> -> vector<56x64xf32>
    %239 = vector.broadcast %139 : vector<1x64xf32> to vector<56x64xf32>
    %240 = arith.addf %238, %239 : vector<56x64xf32>
    %cst_88 = arith.constant 0.000000e+00 : f32
    %241 = vector.broadcast %cst_88 : f32 to vector<56x64xf32>
    %242 = arith.maximumf %240, %241 : vector<56x64xf32>
    %c0_89 = arith.constant 0 : index
    %c0_90 = arith.constant 0 : index
    %243 = vector.load %arg10[%c0_89, %c0_90] : memref<64x32xf32, #tpu.memory_space<vmem>>, vector<64x32xf32>
    %cst_91 = arith.constant dense<0.000000e+00> : vector<56x32xf32>
    %244 = tpu.matmul %242, %243, %cst_91 {dimension_numbers = #tpu.dot_dimension_numbers<[1], [0], [0], [1], [0, 0, 1, 1], [], []>} : vector<56x64xf32>, vector<64x32xf32>, vector<56x32xf32> -> vector<56x32xf32>
    %245 = vector.broadcast %140 : vector<1x32xf32> to vector<56x32xf32>
    %246 = arith.addf %244, %245 : vector<56x32xf32>
    %247 = arith.addf %236, %246 : vector<56x32xf32>
    %cst_92 = arith.constant dense<0.000000e+00> : vector<56xf32>
    %248 = vector.multi_reduction <add>, %247, %cst_92 [1] : vector<56x32xf32> to vector<56xf32>
    %249 = vector.shape_cast %248 : vector<56xf32> to vector<56x1xf32>
    %cst_93 = arith.constant 3.200000e+01 : f32
    %250 = vector.broadcast %cst_93 : f32 to vector<56x1xf32>
    %251 = arith.divf %249, %250 : vector<56x1xf32>
    %252 = vector.broadcast %251 : vector<56x1xf32> to vector<56x32xf32>
    %253 = arith.subf %247, %252 : vector<56x32xf32>
    %254 = arith.mulf %253, %253 : vector<56x32xf32>
    %cst_94 = arith.constant dense<0.000000e+00> : vector<56xf32>
    %255 = vector.multi_reduction <add>, %254, %cst_94 [1] : vector<56x32xf32> to vector<56xf32>
    %256 = vector.shape_cast %255 : vector<56xf32> to vector<56x1xf32>
    %cst_95 = arith.constant 3.200000e+01 : f32
    %257 = vector.broadcast %cst_95 : f32 to vector<56x1xf32>
    %258 = arith.divf %256, %257 : vector<56x1xf32>
    %cst_96 = arith.constant 9.99999974E-6 : f32
    %259 = vector.broadcast %cst_96 : f32 to vector<56x1xf32>
    %260 = arith.addf %258, %259 : vector<56x1xf32>
    %261 = math.rsqrt %260 : vector<56x1xf32>
    %262 = vector.broadcast %261 : vector<56x1xf32> to vector<56x32xf32>
    %263 = arith.mulf %253, %262 : vector<56x32xf32>
    %264 = vector.broadcast %141 : vector<1x32xf32> to vector<56x32xf32>
    %265 = arith.mulf %263, %264 : vector<56x32xf32>
    %266 = vector.broadcast %142 : vector<1x32xf32> to vector<56x32xf32>
    %267 = arith.addf %265, %266 : vector<56x32xf32>
    %c16 = arith.constant 16 : index
    %c0_97 = arith.constant 0 : index
    %268 = vector.load %arg2[%c16, %c0_97] : memref<18x96xf32, #tpu.memory_space<vmem>>, vector<1x16xf32>
    %c17 = arith.constant 17 : index
    %c0_98 = arith.constant 0 : index
    %269 = vector.load %arg2[%c17, %c0_98] : memref<18x96xf32, #tpu.memory_space<vmem>>, vector<1x1xf32>
    %270 = vector.extract_strided_slice %267 {offsets = [0, 0], sizes = [8, 32], strides = [1, 1]} : vector<56x32xf32> to vector<8x32xf32>
    %c0_99 = arith.constant 0 : index
    %c0_100 = arith.constant 0 : index
    %271 = vector.load %arg11[%c0_99, %c0_100] : memref<224x16xf32, #tpu.memory_space<vmem>>, vector<32x16xf32>
    %cst_101 = arith.constant dense<0.000000e+00> : vector<8x16xf32>
    %272 = tpu.matmul %270, %271, %cst_101 {dimension_numbers = #tpu.dot_dimension_numbers<[1], [0], [0], [1], [0, 0, 1, 1], [], []>} : vector<8x32xf32>, vector<32x16xf32>, vector<8x16xf32> -> vector<8x16xf32>
    %273 = vector.extract_strided_slice %267 {offsets = [8, 0], sizes = [8, 32], strides = [1, 1]} : vector<56x32xf32> to vector<8x32xf32>
    %c32 = arith.constant 32 : index
    %c0_102 = arith.constant 0 : index
    %274 = vector.load %arg11[%c32, %c0_102] : memref<224x16xf32, #tpu.memory_space<vmem>>, vector<32x16xf32>
    %cst_103 = arith.constant dense<0.000000e+00> : vector<8x16xf32>
    %275 = tpu.matmul %273, %274, %cst_103 {dimension_numbers = #tpu.dot_dimension_numbers<[1], [0], [0], [1], [0, 0, 1, 1], [], []>} : vector<8x32xf32>, vector<32x16xf32>, vector<8x16xf32> -> vector<8x16xf32>
    %276 = arith.addf %272, %275 : vector<8x16xf32>
    %277 = vector.extract_strided_slice %267 {offsets = [16, 0], sizes = [8, 32], strides = [1, 1]} : vector<56x32xf32> to vector<8x32xf32>
    %c64 = arith.constant 64 : index
    %c0_104 = arith.constant 0 : index
    %278 = vector.load %arg11[%c64, %c0_104] : memref<224x16xf32, #tpu.memory_space<vmem>>, vector<32x16xf32>
    %cst_105 = arith.constant dense<0.000000e+00> : vector<8x16xf32>
    %279 = tpu.matmul %277, %278, %cst_105 {dimension_numbers = #tpu.dot_dimension_numbers<[1], [0], [0], [1], [0, 0, 1, 1], [], []>} : vector<8x32xf32>, vector<32x16xf32>, vector<8x16xf32> -> vector<8x16xf32>
    %280 = arith.addf %276, %279 : vector<8x16xf32>
    %281 = vector.extract_strided_slice %267 {offsets = [24, 0], sizes = [8, 32], strides = [1, 1]} : vector<56x32xf32> to vector<8x32xf32>
    %c96 = arith.constant 96 : index
    %c0_106 = arith.constant 0 : index
    %282 = vector.load %arg11[%c96, %c0_106] : memref<224x16xf32, #tpu.memory_space<vmem>>, vector<32x16xf32>
    %cst_107 = arith.constant dense<0.000000e+00> : vector<8x16xf32>
    %283 = tpu.matmul %281, %282, %cst_107 {dimension_numbers = #tpu.dot_dimension_numbers<[1], [0], [0], [1], [0, 0, 1, 1], [], []>} : vector<8x32xf32>, vector<32x16xf32>, vector<8x16xf32> -> vector<8x16xf32>
    %284 = arith.addf %280, %283 : vector<8x16xf32>
    %285 = vector.extract_strided_slice %267 {offsets = [32, 0], sizes = [8, 32], strides = [1, 1]} : vector<56x32xf32> to vector<8x32xf32>
    %c128 = arith.constant 128 : index
    %c0_108 = arith.constant 0 : index
    %286 = vector.load %arg11[%c128, %c0_108] : memref<224x16xf32, #tpu.memory_space<vmem>>, vector<32x16xf32>
    %cst_109 = arith.constant dense<0.000000e+00> : vector<8x16xf32>
    %287 = tpu.matmul %285, %286, %cst_109 {dimension_numbers = #tpu.dot_dimension_numbers<[1], [0], [0], [1], [0, 0, 1, 1], [], []>} : vector<8x32xf32>, vector<32x16xf32>, vector<8x16xf32> -> vector<8x16xf32>
    %288 = arith.addf %284, %287 : vector<8x16xf32>
    %289 = vector.extract_strided_slice %267 {offsets = [40, 0], sizes = [8, 32], strides = [1, 1]} : vector<56x32xf32> to vector<8x32xf32>
    %c160 = arith.constant 160 : index
    %c0_110 = arith.constant 0 : index
    %290 = vector.load %arg11[%c160, %c0_110] : memref<224x16xf32, #tpu.memory_space<vmem>>, vector<32x16xf32>
    %cst_111 = arith.constant dense<0.000000e+00> : vector<8x16xf32>
    %291 = tpu.matmul %289, %290, %cst_111 {dimension_numbers = #tpu.dot_dimension_numbers<[1], [0], [0], [1], [0, 0, 1, 1], [], []>} : vector<8x32xf32>, vector<32x16xf32>, vector<8x16xf32> -> vector<8x16xf32>
    %292 = arith.addf %288, %291 : vector<8x16xf32>
    %293 = vector.extract_strided_slice %267 {offsets = [48, 0], sizes = [8, 32], strides = [1, 1]} : vector<56x32xf32> to vector<8x32xf32>
    %c192 = arith.constant 192 : index
    %c0_112 = arith.constant 0 : index
    %294 = vector.load %arg11[%c192, %c0_112] : memref<224x16xf32, #tpu.memory_space<vmem>>, vector<32x16xf32>
    %cst_113 = arith.constant dense<0.000000e+00> : vector<8x16xf32>
    %295 = tpu.matmul %293, %294, %cst_113 {dimension_numbers = #tpu.dot_dimension_numbers<[1], [0], [0], [1], [0, 0, 1, 1], [], []>} : vector<8x32xf32>, vector<32x16xf32>, vector<8x16xf32> -> vector<8x16xf32>
    %296 = arith.addf %292, %295 : vector<8x16xf32>
    %297 = vector.broadcast %268 : vector<1x16xf32> to vector<8x16xf32>
    %298 = arith.addf %296, %297 : vector<8x16xf32>
    %cst_114 = arith.constant 0.000000e+00 : f32
    %299 = vector.broadcast %cst_114 : f32 to vector<8x16xf32>
    %300 = arith.maximumf %298, %299 : vector<8x16xf32>
    %c0_115 = arith.constant 0 : index
    %c0_116 = arith.constant 0 : index
    %301 = vector.load %arg12[%c0_115, %c0_116] : memref<16x1xf32, #tpu.memory_space<vmem>>, vector<16x1xf32>
    %cst_117 = arith.constant dense<0.000000e+00> : vector<8x1xf32>
    %302 = tpu.matmul %300, %301, %cst_117 {dimension_numbers = #tpu.dot_dimension_numbers<[1], [0], [0], [1], [0, 0, 1, 1], [], []>} : vector<8x16xf32>, vector<16x1xf32>, vector<8x1xf32> -> vector<8x1xf32>
    %303 = vector.broadcast %269 : vector<1x1xf32> to vector<8x1xf32>
    %304 = arith.addf %302, %303 : vector<8x1xf32>
    %c0_118 = arith.constant 0 : index
    %c0_119 = arith.constant 0 : index
    %305 = vector.load %arg13[%c0_118, %c0_119] : memref<8x1xf32, #tpu.memory_space<vmem>>, vector<8x1xf32>
    tpu.vector_store %arg13[%c0_118, %c0_119], %304 {strides = array<i32>} : memref<8x1xf32, #tpu.memory_space<vmem>>, vector<8x1xf32>,
    return
  }
}

</mosaic_0001>

<llo_original>
// kernel: tpu_custom_call.1
$region0: #{tpu_custom_call.1}
  #allocation0 [shape = 'u32[]', space=smem, size = 0x4, offset = 0x4, fixed_abs, tag = 'smem constant byte address 0x4 - core index']
  #allocation1 [shape = 'u32[144,128]{1,0:T(1,128)}', space=vmem, size = 0x12000, scoped, tag = 'internal scratch']
  %s0 = inlined_call_operand.vmem [shape: f32[56,32], index: 0, kind: input, shape index: {}]
  %s1 = inlined_call_operand.vmem [shape: f32[56,56], index: 1, kind: input, shape index: {}]
  %s2 = inlined_call_operand.vmem [shape: f32[18,96], index: 2, kind: input, shape index: {}]
  %s3 = inlined_call_operand.vmem [shape: f32[32,96], index: 3, kind: input, shape index: {}]
  %s4 = inlined_call_operand.vmem [shape: f32[32,32], index: 4, kind: input, shape index: {}]
  %s5 = inlined_call_operand.vmem [shape: f32[32,64], index: 5, kind: input, shape index: {}]
  %s6 = inlined_call_operand.vmem [shape: f32[64,32], index: 6, kind: input, shape index: {}]
  %s7 = inlined_call_operand.vmem [shape: f32[32,96], index: 7, kind: input, shape index: {}]
  %s8 = inlined_call_operand.vmem [shape: f32[32,32], index: 8, kind: input, shape index: {}]
  %s9 = inlined_call_operand.vmem [shape: f32[32,64], index: 9, kind: input, shape index: {}]
  %s10 = inlined_call_operand.vmem [shape: f32[64,32], index: 10, kind: input, shape index: {}]
  %s11 = inlined_call_operand.vmem [shape: f32[224,16], index: 11, kind: input, shape index: {}]
  %s12 = inlined_call_operand.vmem [shape: f32[16,1], index: 12, kind: input, shape index: {}]
  %s13 = inlined_call_operand.vmem [shape: f32[8,1], index: 13, kind: output, shape index: {}]
  %s14 = sld [smem:[#allocation0]]
  $region62: #{tpu_custom_call.1} parent=0
    _
  %s16 = ssub.s32 1, %s14
  %s17 = scalar_select 0, %s16, %s14
  // Predicated region
  $region2: #{tpu_custom_call.1} parent=0 // pred_check
    _
  $region3: #{tpu_custom_call.1} parent=0 // pred_check_branch
    %19 = sbr.rel (0) target = $region5
  $region4: #{tpu_custom_call.1} parent=0 // pred_region
    _
  $region5: #{tpu_custom_call.1} parent=0 // pred_fallthru
    _
  // Predicated region
  $region6: #{tpu_custom_call.1} parent=0 // pred_check
    _
  $region7: #{tpu_custom_call.1} parent=0 // pred_check_branch
    %21 = sbr.rel (0) target = $region9
  $region8: #{tpu_custom_call.1} parent=0 // pred_region
    _
  $region9: #{tpu_custom_call.1} parent=0 // pred_fallthru
    _
  // Predicated region
  $region10: #{tpu_custom_call.1} parent=0 // pred_check
    _
  $region11: #{tpu_custom_call.1} parent=0 // pred_check_branch
    %23 = sbr.rel (0) target = $region13
  $region12: #{tpu_custom_call.1} parent=0 // pred_region
    _
  $region13: #{tpu_custom_call.1} parent=0 // pred_fallthru
    _
  // Predicated region
  $region14: #{tpu_custom_call.1} parent=0 // pred_check
    _
  $region15: #{tpu_custom_call.1} parent=0 // pred_check_branch
    %25 = sbr.rel (0) target = $region17
  $region16: #{tpu_custom_call.1} parent=0 // pred_region
    _
  $region17: #{tpu_custom_call.1} parent=0 // pred_fallthru
    _
  // Predicated region
  $region18: #{tpu_custom_call.1} parent=0 // pred_check
    _
  $region19: #{tpu_custom_call.1} parent=0 // pred_check_branch
    %27 = sbr.rel (0) target = $region21
  $region20: #{tpu_custom_call.1} parent=0 // pred_region
    _
  $region21: #{tpu_custom_call.1} parent=0 // pred_fallthru
    _
  // Predicated region
  $region22: #{tpu_custom_call.1} parent=0 // pred_check
    _
  $region23: #{tpu_custom_call.1} parent=0 // pred_check_branch
    %29 = sbr.rel (0) target = $region25
  $region24: #{tpu_custom_call.1} parent=0 // pred_region
    _
  $region25: #{tpu_custom_call.1} parent=0 // pred_fallthru
    _
  // Predicated region
  $region26: #{tpu_custom_call.1} parent=0 // pred_check
    _
  $region27: #{tpu_custom_call.1} parent=0 // pred_check_branch
    %31 = sbr.rel (0) target = $region29
  $region28: #{tpu_custom_call.1} parent=0 // pred_region
    _
  $region29: #{tpu_custom_call.1} parent=0 // pred_fallthru
    _
  // Predicated region
  $region30: #{tpu_custom_call.1} parent=0 // pred_check
    _
  $region31: #{tpu_custom_call.1} parent=0 // pred_check_branch
    %33 = sbr.rel (0) target = $region33
  $region32: #{tpu_custom_call.1} parent=0 // pred_region
    _
  $region33: #{tpu_custom_call.1} parent=0 // pred_fallthru
    _
  // Predicated region
  $region34: #{tpu_custom_call.1} parent=0 // pred_check
    _
  $region35: #{tpu_custom_call.1} parent=0 // pred_check_branch
    %35 = sbr.rel (0) target = $region37
  $region36: #{tpu_custom_call.1} parent=0 // pred_region
    _
  $region37: #{tpu_custom_call.1} parent=0 // pred_fallthru
    _
  // Predicated region
  $region38: #{tpu_custom_call.1} parent=0 // pred_check
    _
  $region39: #{tpu_custom_call.1} parent=0 // pred_check_branch
    %37 = sbr.rel (0) target = $region41
  $region40: #{tpu_custom_call.1} parent=0 // pred_region
    _
  $region41: #{tpu_custom_call.1} parent=0 // pred_fallthru
    _
  // Predicated region
  $region42: #{tpu_custom_call.1} parent=0 // pred_check
    _
  $region43: #{tpu_custom_call.1} parent=0 // pred_check_branch
    %39 = sbr.rel (0) target = $region45
  $region44: #{tpu_custom_call.1} parent=0 // pred_region
    _
  $region45: #{tpu_custom_call.1} parent=0 // pred_fallthru
    _
  // Predicated region
  $region46: #{tpu_custom_call.1} parent=0 // pred_check
    _
  $region47: #{tpu_custom_call.1} parent=0 // pred_check_branch
    %41 = sbr.rel (0) target = $region49
  $region48: #{tpu_custom_call.1} parent=0 // pred_region
    _
  $region49: #{tpu_custom_call.1} parent=0 // pred_fallthru
    _
  // Predicated region
  $region50: #{tpu_custom_call.1} parent=0 // pred_check
    _
  $region51: #{tpu_custom_call.1} parent=0 // pred_check_branch
    %43 = sbr.rel (0) target = $region53
  $region52: #{tpu_custom_call.1} parent=0 // pred_region
    _
  $region53: #{tpu_custom_call.1} parent=0 // pred_fallthru
    _
  %v44 = vld [vmem:[%s0] sm:$0xff]
  %v45 = vld [vmem:[%s0 + $0x8] sm:$0xff]
  %v46 = vld [vmem:[%s0 + $0x10] sm:$0xff]
  %v47 = vld [vmem:[%s0 + $0x18] sm:$0xff]
  %v48 = vld [vmem:[%s0 + $0x20] sm:$0xff]
  %v49 = vld [vmem:[%s0 + $0x28] sm:$0xff]
  %v50 = vld [vmem:[%s0 + $0x30] sm:$0xff]
  %v51 = vld [vmem:[%s1] sm:$0xff]
  %v52 = vld [vmem:[%s1 + $0x8] sm:$0xff]
  %v53 = vld [vmem:[%s1 + $0x10] sm:$0xff]
  %v54 = vld [vmem:[%s1 + $0x18] sm:$0xff]
  %v55 = vld [vmem:[%s1 + $0x20] sm:$0xff]
  %v56 = vld [vmem:[%s1 + $0x28] sm:$0xff]
  %v57 = vld [vmem:[%s1 + $0x30] sm:$0xff]
  %v58 = vld [vmem:[%s2] sm:$0x1]
  %v59 = vld [vmem:[%s2 + $0x1] sm:$0x1]
  %v60 = vld [vmem:[%s2 + $0x2] sm:$0x1]
  %v61 = vld [vmem:[%s2 + $0x3] sm:$0x1]
  %v62 = vld [vmem:[%s2 + $0x4] sm:$0x1]
  %v63 = vld [vmem:[%s2 + $0x5] sm:$0x1]
  %v64 = vld [vmem:[%s2 + $0x6] sm:$0x1]
  %v65 = vld [vmem:[%s2 + $0x7] sm:$0x1]
  %v66 = vld [vmem:[%s3] sm:$0xff]
  %v67 = vld [vmem:[%s3 + $0x8] sm:$0xff]
  %v68 = vld [vmem:[%s3 + $0x10] sm:$0xff]
  %v69 = vld [vmem:[%s3 + $0x18] sm:$0xff]
  %v70 = vlaneseq
  %v71 = vshrl.u32 %v70, 7
  %v72 = vsub.s32 0, %v71
  %v73 = vrot.slane %v58, %v72
  %vm74 = vcmask 261120
  %v76 = vsel %vm74, %v44, 0
  %v79 = vsel %vm74, %v45, 0
  %v82 = vsel %vm74, %v46, 0
  %v85 = vsel %vm74, %v47, 0
  %v88 = vsel %vm74, %v48, 0
  %v91 = vsel %vm74, %v49, 0
  %v94 = vsel %vm74, %v50, 0
  %96 = vmatprep.subr.mxu0 0.0
  %97 = vmatpush1.msra.mxu0 0.0
  %98 = vmatprep.subr.mxu0 0.0
  %99 = vmatpush1.msra.mxu0 0.0
  %100 = vmatprep.subr.mxu0 0.0
  %101 = vmatpush1.msra.mxu0 0.0
  %102 = vmatprep.subr.mxu0 0.0
  %103 = vmatpush1.msra.mxu0 0.0
  %104 = vmatprep.subr.mxu0 0.0
  %105 = vmatpush1.msra.mxu0 0.0
  %106 = vmatprep.subr.mxu0 0.0
  %107 = vmatpush1.msra.mxu0 0.0
  %108 = vmatprep.subr.mxu0 0.0
  %109 = vmatpush1.msra.mxu0 0.0
  %110 = vmatprep.subr.mxu0 0.0
  %111 = vmatpush1.msra.mxu0 0.0
  %112 = vmatprep.subr.mxu0 0.0
  %113 = vmatpush1.msra.mxu0 0.0
  %114 = vmatprep.subr.mxu0 0.0
  %115 = vmatpush1.msra.mxu0 0.0
  %116 = vmatprep.subr.mxu0 0.0
  %117 = vmatpush1.msra.mxu0 0.0
  %118 = vmatprep.subr.mxu0 0.0
  %119 = vmatpush1.msra.mxu0 0.0
  %120 = vmatprep.subr.mxu0 0.0
  %121 = vmatpush1.msra.mxu0 %v69
  %122 = vmatprep.subr.mxu0 0.0
  %123 = vmatpush1.msra.mxu0 %v68
  %124 = vmatprep.subr.mxu0 0.0
  %125 = vmatpush1.msra.mxu0 %v67
  %126 = vmatprep.subr.mxu0 0.0
  %127 = vmatpush1.msra.mxu0 %v66
  %128 = vmatprep.subr.mxu0 0.0
  %129 = vmatpush2.msra.mxu0 0.0
  %130 = vmatprep.subr.mxu0 0.0
  %131 = vmatpush2.msra.mxu0 0.0
  %132 = vmatprep.subr.mxu0 0.0
  %133 = vmatpush2.msra.mxu0 0.0
  %134 = vmatprep.subr.mxu0 0.0
  %135 = vmatpush2.msra.mxu0 0.0
  %136 = vmatprep.subr.mxu0 0.0
  %137 = vmatpush2.msra.mxu0 0.0
  %138 = vmatprep.subr.mxu0 0.0
  %139 = vmatpush2.msra.mxu0 0.0
  %140 = vmatprep.subr.mxu0 0.0
  %141 = vmatpush2.msra.mxu0 0.0
  %142 = vmatprep.subr.mxu0 0.0
  %143 = vmatpush2.msra.mxu0 0.0
  %144 = vmatprep.subr.mxu0 0.0
  %145 = vmatpush2.msra.mxu0 0.0
  %146 = vmatprep.subr.mxu0 0.0
  %147 = vmatpush2.msra.mxu0 0.0
  %148 = vmatprep.subr.mxu0 0.0
  %149 = vmatpush2.msra.mxu0 0.0
  %150 = vmatprep.subr.mxu0 0.0
  %151 = vmatpush2.msra.mxu0 0.0
  %152 = vmatprep.subr.mxu0 0.0
  %153 = vmatpush2.msra.mxu0 0.0
  %154 = vmatprep.subr.mxu0 0.0
  %155 = vmatpush2.msra.mxu0 0.0
  %156 = vmatprep.subr.mxu0 0.0
  %157 = vmatpush2.msra.mxu0 0.0
  %158 = vmatprep.subr.mxu0 0.0
  %159 = vmatpush2.msra.mxu0 0.0
  %160 = vmatprep.mubr.f32.mxu0 0.0
  %161 = vmatmul.mubr.f32.gmra.mxu0 %v76
  %v162 = vpop.f32.mrf.mxu0
  %v163 = vadd.f32 %v73, %v162
  %v164 = vpop.f32.mrf.mxu0
  %165 = vmatprep.mubr.f32.mxu0 0.0
  %166 = vmatmul.mubr.f32.gmra.mxu0 %v79
  %v167 = vpop.f32.mrf.mxu0
  %v168 = vadd.f32 %v73, %v167
  %v169 = vpop.f32.mrf.mxu0
  %170 = vmatprep.mubr.f32.mxu0 0.0
  %171 = vmatmul.mubr.f32.gmra.mxu0 %v82
  %v172 = vpop.f32.mrf.mxu0
  %v173 = vadd.f32 %v73, %v172
  %v174 = vpop.f32.mrf.mxu0
  %175 = vmatprep.mubr.f32.mxu0 0.0
  %176 = vmatmul.mubr.f32.gmra.mxu0 %v85
  %v177 = vpop.f32.mrf.mxu0
  %v178 = vadd.f32 %v73, %v177
  %v179 = vpop.f32.mrf.mxu0
  %180 = vmatprep.mubr.f32.mxu0 0.0
  %181 = vmatmul.mubr.f32.gmra.mxu0 %v88
  %v182 = vpop.f32.mrf.mxu0
  %v183 = vadd.f32 %v73, %v182
  %v184 = vpop.f32.mrf.mxu0
  %185 = vmatprep.mubr.f32.mxu0 0.0
  %186 = vmatmul.mubr.f32.gmra.mxu0 %v91
  %v187 = vpop.f32.mrf.mxu0
  %v188 = vadd.f32 %v73, %v187
  %v189 = vpop.f32.mrf.mxu0
  %190 = vmatprep.mubr.f32.mxu0 0.0
  %191 = vmatmul.mubr.f32.gmra.mxu0 %v94
  %v192 = vpop.f32.mrf.mxu0
  %v193 = vadd.f32 %v73, %v192
  %v194 = vpop.f32.mrf.mxu0
  %195 = vdwg.mxu0
  %203 = vrot.lane.b32.xlu0 %v163, 96
  %v204 = vpop.permute.xlu0 %203
  %205 = vrot.lane.b32.xlu0 %v168, 96
  %v206 = vpop.permute.xlu0 %205
  %207 = vrot.lane.b32.xlu0 %v173, 96
  %v208 = vpop.permute.xlu0 %207
  %209 = vrot.lane.b32.xlu0 %v178, 96
  %v210 = vpop.permute.xlu0 %209
  %211 = vrot.lane.b32.xlu0 %v183, 96
  %v212 = vpop.permute.xlu0 %211
  %213 = vrot.lane.b32.xlu0 %v188, 96
  %v214 = vpop.permute.xlu0 %213
  %215 = vrot.lane.b32.xlu0 %v193, 96
  %v216 = vpop.permute.xlu0 %215
  %vm217 = vcmask 64512
  %v218 = vsel %vm217, %v163, 0
  %v220 = vsel %vm217, %v168, 0
  %v222 = vsel %vm217, %v173, 0
  %v224 = vsel %vm217, %v178, 0
  %v226 = vsel %vm217, %v183, 0
  %v228 = vsel %vm217, %v188, 0
  %v230 = vsel %vm217, %v193, 0
  %v232 = vsel %vm217, %v204, 0
  %v234 = vsel %vm217, %v206, 0
  %v236 = vsel %vm217, %v208, 0
  %v238 = vsel %vm217, %v210, 0
  %v240 = vsel %vm217, %v212, 0
  %v242 = vsel %vm217, %v214, 0
  %v244 = vsel %vm217, %v216, 0
  %246 = vmatprep.subr.mxu0 0.0
  %247 = vmatpush1.xpose.msra.mxu0 0.0
  %248 = vmatprep.subr.mxu0 0.0
  %249 = vmatpush1.xpose.msra.mxu0 0.0
  %250 = vmatprep.subr.mxu0 0.0
  %251 = vmatpush1.xpose.msra.mxu0 0.0
  %252 = vmatprep.subr.mxu0 0.0
  %253 = vmatpush1.xpose.msra.mxu0 0.0
  %254 = vmatprep.subr.mxu0 0.0
  %255 = vmatpush1.xpose.msra.mxu0 0.0
  %256 = vmatprep.subr.mxu0 0.0
  %257 = vmatpush1.xpose.msra.mxu0 0.0
  %258 = vmatprep.subr.mxu0 0.0
  %259 = vmatpush1.xpose.msra.mxu0 0.0
  %260 = vmatprep.subr.mxu0 0.0
  %261 = vmatpush1.xpose.msra.mxu0 0.0
  %262 = vmatprep.subr.mxu0 0.0
  %263 = vmatpush1.xpose.msra.mxu0 0.0
  %264 = vmatprep.subr.mxu0 0.0
  %265 = vmatpush1.xpose.msra.mxu0 %v244
  %266 = vmatprep.subr.mxu0 0.0
  %267 = vmatpush1.xpose.msra.mxu0 %v242
  %268 = vmatprep.subr.mxu0 0.0
  %269 = vmatpush1.xpose.msra.mxu0 %v240
  %270 = vmatprep.subr.mxu0 0.0
  %271 = vmatpush1.xpose.msra.mxu0 %v238
  %272 = vmatprep.subr.mxu0 0.0
  %273 = vmatpush1.xpose.msra.mxu0 %v236
  %274 = vmatprep.subr.mxu0 0.0
  %275 = vmatpush1.xpose.msra.mxu0 %v234
  %276 = vmatprep.subr.mxu0 0.0
  %277 = vmatpush1.xpose.msra.mxu0 %v232
  %278 = vmatprep.subr.mxu0 0.0
  %279 = vmatpush2.xpose.msra.mxu0 0.0
  %280 = vmatprep.subr.mxu0 0.0
  %281 = vmatpush2.xpose.msra.mxu0 0.0
  %282 = vmatprep.subr.mxu0 0.0
  %283 = vmatpush2.xpose.msra.mxu0 0.0
  %284 = vmatprep.subr.mxu0 0.0
  %285 = vmatpush2.xpose.msra.mxu0 0.0
  %286 = vmatprep.subr.mxu0 0.0
  %287 = vmatpush2.xpose.msra.mxu0 0.0
  %288 = vmatprep.subr.mxu0 0.0
  %289 = vmatpush2.xpose.msra.mxu0 0.0
  %290 = vmatprep.subr.mxu0 0.0
  %291 = vmatpush2.xpose.msra.mxu0 0.0
  %292 = vmatprep.subr.mxu0 0.0
  %293 = vmatpush2.xpose.msra.mxu0 0.0
  %294 = vmatprep.subr.mxu0 0.0
  %295 = vmatpush2.xpose.msra.mxu0 0.0
  %296 = vmatprep.subr.mxu0 0.0
  %297 = vmatpush2.xpose.msra.mxu0 0.0
  %298 = vmatprep.subr.mxu0 0.0
  %299 = vmatpush2.xpose.msra.mxu0 0.0
  %300 = vmatprep.subr.mxu0 0.0
  %301 = vmatpush2.xpose.msra.mxu0 0.0
  %302 = vmatprep.subr.mxu0 0.0
  %303 = vmatpush2.xpose.msra.mxu0 0.0
  %304 = vmatprep.subr.mxu0 0.0
  %305 = vmatpush2.xpose.msra.mxu0 0.0
  %306 = vmatprep.subr.mxu0 0.0
  %307 = vmatpush2.xpose.msra.mxu0 0.0
  %308 = vmatprep.subr.mxu0 0.0
  %309 = vmatpush2.xpose.msra.mxu0 0.0
  %310 = vmatprep.mubr.f32.mxu0 0.0
  %311 = vmatmul.mubr.f32.gmra.mxu0 %v218
  %v312 = vpop.f32.mrf.mxu0
  %v313 = vadd.f32 %v51, %v312
  %v314 = vpop.f32.mrf.mxu0
  %315 = vmatprep.mubr.f32.mxu0 0.0
  %316 = vmatmul.mubr.f32.gmra.mxu0 %v220
  %v317 = vpop.f32.mrf.mxu0
  %v318 = vadd.f32 %v52, %v317
  %v319 = vpop.f32.mrf.mxu0
  %320 = vmatprep.mubr.f32.mxu0 0.0
  %321 = vmatmul.mubr.f32.gmra.mxu0 %v222
  %v322 = vpop.f32.mrf.mxu0
  %v323 = vadd.f32 %v53, %v322
  %v324 = vpop.f32.mrf.mxu0
  %325 = vmatprep.mubr.f32.mxu0 0.0
  %326 = vmatmul.mubr.f32.gmra.mxu0 %v224
  %v327 = vpop.f32.mrf.mxu0
  %v328 = vadd.f32 %v54, %v327
  %v329 = vpop.f32.mrf.mxu0
  %330 = vmatprep.mubr.f32.mxu0 0.0
  %331 = vmatmul.mubr.f32.gmra.mxu0 %v226
  %v332 = vpop.f32.mrf.mxu0
  %v333 = vadd.f32 %v55, %v332
  %v334 = vpop.f32.mrf.mxu0
  %335 = vmatprep.mubr.f32.mxu0 0.0
  %336 = vmatmul.mubr.f32.gmra.mxu0 %v228
  %v337 = vpop.f32.mrf.mxu0
  %v338 = vadd.f32 %v56, %v337
  %v339 = vpop.f32.mrf.mxu0
  %340 = vmatprep.mubr.f32.mxu0 0.0
  %341 = vmatmul.mubr.f32.gmra.mxu0 %v230
  %v342 = vpop.f32.mrf.mxu0
  %v343 = vadd.f32 %v57, %v342
  %v344 = vpop.f32.mrf.mxu0
  %345 = vdwg.mxu0
  %vm346 = vcmask 457728
  %v347 = vsel %vm346, %v313, -inf
  %348 = vmax.xlane.f32.xlu0 %v347
  %v349 = vpop.xlane.xlu0 %348
  %v350 = vsel %vm346, %v318, -inf
  %351 = vmax.xlane.f32.xlu0 %v350
  %v352 = vpop.xlane.xlu0 %351
  %v353 = vsel %vm346, %v323, -inf
  %354 = vmax.xlane.f32.xlu0 %v353
  %v355 = vpop.xlane.xlu0 %354
  %v356 = vsel %vm346, %v328, -inf
  %357 = vmax.xlane.f32.xlu0 %v356
  %v358 = vpop.xlane.xlu0 %357
  %v359 = vsel %vm346, %v333, -inf
  %360 = vmax.xlane.f32.xlu0 %v359
  %v361 = vpop.xlane.xlu0 %360
  %v362 = vsel %vm346, %v338, -inf
  %363 = vmax.xlane.f32.xlu0 %v362
  %v364 = vpop.xlane.xlu0 %363
  %v365 = vsel %vm346, %v343, -inf
  %366 = vmax.xlane.f32.xlu0 %v365
  %v367 = vpop.xlane.xlu0 %366
  %v368 = vsub.f32 %v313, %v349
  %v369 = vsub.f32 %v318, %v352
  %v370 = vsub.f32 %v323, %v355
  %v371 = vsub.f32 %v328, %v358
  %v372 = vsub.f32 %v333, %v361
  %v373 = vsub.f32 %v338, %v364
  %v374 = vsub.f32 %v343, %v367
  %v375 = vmul.f32 %v368, 1.442695
  %v376 = vpow.pop %v375
  %v377 = vmul.f32 %v369, 1.442695
  %v378 = vpow.pop %v377
  %v379 = vmul.f32 %v370, 1.442695
  %v380 = vpow.pop %v379
  %v381 = vmul.f32 %v371, 1.442695
  %v382 = vpow.pop %v381
  %v383 = vmul.f32 %v372, 1.442695
  %v384 = vpow.pop %v383
  %v385 = vmul.f32 %v373, 1.442695
  %v386 = vpow.pop %v385
  %v387 = vmul.f32 %v374, 1.442695
  %v388 = vpow.pop %v387
  %v389 = vsel %vm346, %v376, 0.0
  %390 = vadd.xlane.f32.xlu0 %v389
  %v391 = vpop.xlane.xlu0 %390
  %v392 = vsel %vm346, %v378, 0.0
  %393 = vadd.xlane.f32.xlu0 %v392
  %v394 = vpop.xlane.xlu0 %393
  %v395 = vsel %vm346, %v380, 0.0
  %396 = vadd.xlane.f32.xlu0 %v395
  %v397 = vpop.xlane.xlu0 %396
  %v398 = vsel %vm346, %v382, 0.0
  %399 = vadd.xlane.f32.xlu0 %v398
  %v400 = vpop.xlane.xlu0 %399
  %v401 = vsel %vm346, %v384, 0.0
  %402 = vadd.xlane.f32.xlu0 %v401
  %v403 = vpop.xlane.xlu0 %402
  %v404 = vsel %vm346, %v386, 0.0
  %405 = vadd.xlane.f32.xlu0 %v404
  %v406 = vpop.xlane.xlu0 %405
  %v407 = vsel %vm346, %v388, 0.0
  %408 = vadd.xlane.f32.xlu0 %v407
  %v409 = vpop.xlane.xlu0 %408
  %v410 = vrcp.pop %v391
  %v411 = vrcp.pop %v394
  %v412 = vrcp.pop %v397
  %v413 = vrcp.pop %v400
  %v414 = vrcp.pop %v403
  %v415 = vrcp.pop %v406
  %v416 = vrcp.pop %v409
  %v417 = vmul.f32 %v376, %v410
  %v418 = vmul.f32 %v378, %v411
  %v419 = vmul.f32 %v380, %v412
  %v420 = vmul.f32 %v382, %v413
  %v421 = vmul.f32 %v384, %v414
  %v422 = vmul.f32 %v386, %v415
  %v423 = vmul.f32 %v388, %v416
  %424 = vrot.lane.b32.xlu0 %v163, 64
  %v425 = vpop.permute.xlu0 %424
  %426 = vrot.lane.b32.xlu0 %v168, 64
  %v427 = vpop.permute.xlu0 %426
  %428 = vrot.lane.b32.xlu0 %v173, 64
  %v429 = vpop.permute.xlu0 %428
  %430 = vrot.lane.b32.xlu0 %v178, 64
  %v431 = vpop.permute.xlu0 %430
  %432 = vrot.lane.b32.xlu0 %v183, 64
  %v433 = vpop.permute.xlu0 %432
  %434 = vrot.lane.b32.xlu0 %v188, 64
  %v435 = vpop.permute.xlu0 %434
  %436 = vrot.lane.b32.xlu0 %v193, 64
  %v437 = vpop.permute.xlu0 %436
  %v446 = vsel %vm346, %v417, 0
  %v449 = vsel %vm346, %v418, 0
  %v452 = vsel %vm346, %v419, 0
  %v455 = vsel %vm346, %v420, 0
  %v458 = vsel %vm346, %v421, 0
  %v461 = vsel %vm346, %v422, 0
  %v464 = vsel %vm346, %v423, 0
  %466 = vmatprep.subr.mxu0 0.0
  %467 = vmatpush1.msra.mxu0 0.0
  %468 = vmatprep.subr.mxu0 0.0
  %469 = vmatpush1.msra.mxu0 0.0
  %470 = vmatprep.subr.mxu0 0.0
  %471 = vmatpush1.msra.mxu0 0.0
  %472 = vmatprep.subr.mxu0 0.0
  %473 = vmatpush1.msra.mxu0 0.0
  %474 = vmatprep.subr.mxu0 0.0
  %475 = vmatpush1.msra.mxu0 0.0
  %476 = vmatprep.subr.mxu0 0.0
  %477 = vmatpush1.msra.mxu0 0.0
  %478 = vmatprep.subr.mxu0 0.0
  %479 = vmatpush1.msra.mxu0 0.0
  %480 = vmatprep.subr.mxu0 0.0
  %481 = vmatpush1.msra.mxu0 0.0
  %482 = vmatprep.subr.mxu0 0.0
  %483 = vmatpush1.msra.mxu0 0.0
  %484 = vmatprep.subr.mxu0 0.0
  %485 = vmatpush1.msra.mxu0 %v437
  %486 = vmatprep.subr.mxu0 0.0
  %487 = vmatpush1.msra.mxu0 %v435
  %488 = vmatprep.subr.mxu0 0.0
  %489 = vmatpush1.msra.mxu0 %v433
  %490 = vmatprep.subr.mxu0 0.0
  %491 = vmatpush1.msra.mxu0 %v431
  %492 = vmatprep.subr.mxu0 0.0
  %493 = vmatpush1.msra.mxu0 %v429
  %494 = vmatprep.subr.mxu0 0.0
  %495 = vmatpush1.msra.mxu0 %v427
  %496 = vmatprep.subr.mxu0 0.0
  %497 = vmatpush1.msra.mxu0 %v425
  %498 = vmatprep.subr.mxu0 0.0
  %499 = vmatpush2.msra.mxu0 0.0
  %500 = vmatprep.subr.mxu0 0.0
  %501 = vmatpush2.msra.mxu0 0.0
  %502 = vmatprep.subr.mxu0 0.0
  %503 = vmatpush2.msra.mxu0 0.0
  %504 = vmatprep.subr.mxu0 0.0
  %505 = vmatpush2.msra.mxu0 0.0
  %506 = vmatprep.subr.mxu0 0.0
  %507 = vmatpush2.msra.mxu0 0.0
  %508 = vmatprep.subr.mxu0 0.0
  %509 = vmatpush2.msra.mxu0 0.0
  %510 = vmatprep.subr.mxu0 0.0
  %511 = vmatpush2.msra.mxu0 0.0
  %512 = vmatprep.subr.mxu0 0.0
  %513 = vmatpush2.msra.mxu0 0.0
  %514 = vmatprep.subr.mxu0 0.0
  %515 = vmatpush2.msra.mxu0 0.0
  %516 = vmatprep.subr.mxu0 0.0
  %517 = vmatpush2.msra.mxu0 0.0
  %518 = vmatprep.subr.mxu0 0.0
  %519 = vmatpush2.msra.mxu0 0.0
  %520 = vmatprep.subr.mxu0 0.0
  %521 = vmatpush2.msra.mxu0 0.0
  %522 = vmatprep.subr.mxu0 0.0
  %523 = vmatpush2.msra.mxu0 0.0
  %524 = vmatprep.subr.mxu0 0.0
  %525 = vmatpush2.msra.mxu0 0.0
  %526 = vmatprep.subr.mxu0 0.0
  %527 = vmatpush2.msra.mxu0 0.0
  %528 = vmatprep.subr.mxu0 0.0
  %529 = vmatpush2.msra.mxu0 0.0
  %530 = vmatprep.mubr.f32.mxu0 0.0
  %531 = vmatmul.mubr.f32.gmra.mxu0 %v446
  %v532 = vpop.f32.mrf.mxu0
  %v533 = vadd.f32 0.0, %v532
  %v534 = vpop.f32.mrf.mxu0
  %535 = vmatprep.mubr.f32.mxu0 0.0
  %536 = vmatmul.mubr.f32.gmra.mxu0 %v449
  %v537 = vpop.f32.mrf.mxu0
  %v538 = vadd.f32 0.0, %v537
  %v539 = vpop.f32.mrf.mxu0
  %540 = vmatprep.mubr.f32.mxu0 0.0
  %541 = vmatmul.mubr.f32.gmra.mxu0 %v452
  %v542 = vpop.f32.mrf.mxu0
  %v543 = vadd.f32 0.0, %v542
  %v544 = vpop.f32.mrf.mxu0
  %545 = vmatprep.mubr.f32.mxu0 0.0
  %546 = vmatmul.mubr.f32.gmra.mxu0 %v455
  %v547 = vpop.f32.mrf.mxu0
  %v548 = vadd.f32 0.0, %v547
  %v549 = vpop.f32.mrf.mxu0
  %550 = vmatprep.mubr.f32.mxu0 0.0
  %551 = vmatmul.mubr.f32.gmra.mxu0 %v458
  %v552 = vpop.f32.mrf.mxu0
  %v553 = vadd.f32 0.0, %v552
  %v554 = vpop.f32.mrf.mxu0
  %555 = vmatprep.mubr.f32.mxu0 0.0
  %556 = vmatmul.mubr.f32.gmra.mxu0 %v461
  %v557 = vpop.f32.mrf.mxu0
  %v558 = vadd.f32 0.0, %v557
  %v559 = vpop.f32.mrf.mxu0
  %560 = vmatprep.mubr.f32.mxu0 0.0
  %561 = vmatmul.mubr.f32.gmra.mxu0 %v464
  %v562 = vpop.f32.mrf.mxu0
  %v563 = vadd.f32 0.0, %v562
  %v564 = vpop.f32.mrf.mxu0
  %565 = vdwg.mxu0
  %566 = vrot.lane.b32.xlu0 %v163, 120
  %v567 = vpop.permute.xlu0 %566
  %568 = vrot.lane.b32.xlu0 %v168, 120
  %v569 = vpop.permute.xlu0 %568
  %570 = vrot.lane.b32.xlu0 %v173, 120
  %v571 = vpop.permute.xlu0 %570
  %572 = vrot.lane.b32.xlu0 %v178, 120
  %v573 = vpop.permute.xlu0 %572
  %574 = vrot.lane.b32.xlu0 %v183, 120
  %v575 = vpop.permute.xlu0 %574
  %576 = vrot.lane.b32.xlu0 %v188, 120
  %v577 = vpop.permute.xlu0 %576
  %578 = vrot.lane.b32.xlu0 %v193, 120
  %v579 = vpop.permute.xlu0 %578
  %580 = vrot.lane.b32.xlu0 %v163, 88
  %v581 = vpop.permute.xlu0 %580
  %582 = vrot.lane.b32.xlu0 %v168, 88
  %v583 = vpop.permute.xlu0 %582
  %584 = vrot.lane.b32.xlu0 %v173, 88
  %v585 = vpop.permute.xlu0 %584
  %586 = vrot.lane.b32.xlu0 %v178, 88
  %v587 = vpop.permute.xlu0 %586
  %588 = vrot.lane.b32.xlu0 %v183, 88
  %v589 = vpop.permute.xlu0 %588
  %590 = vrot.lane.b32.xlu0 %v188, 88
  %v591 = vpop.permute.xlu0 %590
  %592 = vrot.lane.b32.xlu0 %v193, 88
  %v593 = vpop.permute.xlu0 %592
  %v594 = vsel %vm217, %v567, 0
  %v596 = vsel %vm217, %v569, 0
  %v598 = vsel %vm217, %v571, 0
  %v600 = vsel %vm217, %v573, 0
  %v602 = vsel %vm217, %v575, 0
  %v604 = vsel %vm217, %v577, 0
  %v606 = vsel %vm217, %v579, 0
  %v608 = vsel %vm217, %v581, 0
  %v610 = vsel %vm217, %v583, 0
  %v612 = vsel %vm217, %v585, 0
  %v614 = vsel %vm217, %v587, 0
  %v616 = vsel %vm217, %v589, 0
  %v618 = vsel %vm217, %v591, 0
  %v620 = vsel %vm217, %v593, 0
  %622 = vmatprep.subr.mxu0 0.0
  %623 = vmatpush1.xpose.msra.mxu0 0.0
  %624 = vmatprep.subr.mxu0 0.0
  %625 = vmatpush1.xpose.msra.mxu0 0.0
  %626 = vmatprep.subr.mxu0 0.0
  %627 = vmatpush1.xpose.msra.mxu0 0.0
  %628 = vmatprep.subr.mxu0 0.0
  %629 = vmatpush1.xpose.msra.mxu0 0.0
  %630 = vmatprep.subr.mxu0 0.0
  %631 = vmatpush1.xpose.msra.mxu0 0.0
  %632 = vmatprep.subr.mxu0 0.0
  %633 = vmatpush1.xpose.msra.mxu0 0.0
  %634 = vmatprep.subr.mxu0 0.0
  %635 = vmatpush1.xpose.msra.mxu0 0.0
  %636 = vmatprep.subr.mxu0 0.0
  %637 = vmatpush1.xpose.msra.mxu0 0.0
  %638 = vmatprep.subr.mxu0 0.0
  %639 = vmatpush1.xpose.msra.mxu0 0.0
  %640 = vmatprep.subr.mxu0 0.0
  %641 = vmatpush1.xpose.msra.mxu0 %v620
  %642 = vmatprep.subr.mxu0 0.0
  %643 = vmatpush1.xpose.msra.mxu0 %v618
  %644 = vmatprep.subr.mxu0 0.0
  %645 = vmatpush1.xpose.msra.mxu0 %v616
  %646 = vmatprep.subr.mxu0 0.0
  %647 = vmatpush1.xpose.msra.mxu0 %v614
  %648 = vmatprep.subr.mxu0 0.0
  %649 = vmatpush1.xpose.msra.mxu0 %v612
  %650 = vmatprep.subr.mxu0 0.0
  %651 = vmatpush1.xpose.msra.mxu0 %v610
  %652 = vmatprep.subr.mxu0 0.0
  %653 = vmatpush1.xpose.msra.mxu0 %v608
  %654 = vmatprep.subr.mxu0 0.0
  %655 = vmatpush2.xpose.msra.mxu0 0.0
  %656 = vmatprep.subr.mxu0 0.0
  %657 = vmatpush2.xpose.msra.mxu0 0.0
  %658 = vmatprep.subr.mxu0 0.0
  %659 = vmatpush2.xpose.msra.mxu0 0.0
  %660 = vmatprep.subr.mxu0 0.0
  %661 = vmatpush2.xpose.msra.mxu0 0.0
  %662 = vmatprep.subr.mxu0 0.0
  %663 = vmatpush2.xpose.msra.mxu0 0.0
  %664 = vmatprep.subr.mxu0 0.0
  %665 = vmatpush2.xpose.msra.mxu0 0.0
  %666 = vmatprep.subr.mxu0 0.0
  %667 = vmatpush2.xpose.msra.mxu0 0.0
  %668 = vmatprep.subr.mxu0 0.0
  %669 = vmatpush2.xpose.msra.mxu0 0.0
  %670 = vmatprep.subr.mxu0 0.0
  %671 = vmatpush2.xpose.msra.mxu0 0.0
  %672 = vmatprep.subr.mxu0 0.0
  %673 = vmatpush2.xpose.msra.mxu0 0.0
  %674 = vmatprep.subr.mxu0 0.0
  %675 = vmatpush2.xpose.msra.mxu0 0.0
  %676 = vmatprep.subr.mxu0 0.0
  %677 = vmatpush2.xpose.msra.mxu0 0.0
  %678 = vmatprep.subr.mxu0 0.0
  %679 = vmatpush2.xpose.msra.mxu0 0.0
  %680 = vmatprep.subr.mxu0 0.0
  %681 = vmatpush2.xpose.msra.mxu0 0.0
  %682 = vmatprep.subr.mxu0 0.0
  %683 = vmatpush2.xpose.msra.mxu0 0.0
  %684 = vmatprep.subr.mxu0 0.0
  %685 = vmatpush2.xpose.msra.mxu0 0.0
  %686 = vmatprep.mubr.f32.mxu0 0.0
  %687 = vmatmul.mubr.f32.gmra.mxu0 %v594
  %v688 = vpop.f32.mrf.mxu0
  %v689 = vadd.f32 %v51, %v688
  %v690 = vpop.f32.mrf.mxu0
  %691 = vmatprep.mubr.f32.mxu0 0.0
  %692 = vmatmul.mubr.f32.gmra.mxu0 %v596
  %v693 = vpop.f32.mrf.mxu0
  %v694 = vadd.f32 %v52, %v693
  %v695 = vpop.f32.mrf.mxu0
  %696 = vmatprep.mubr.f32.mxu0 0.0
  %697 = vmatmul.mubr.f32.gmra.mxu0 %v598
  %v698 = vpop.f32.mrf.mxu0
  %v699 = vadd.f32 %v53, %v698
  %v700 = vpop.f32.mrf.mxu0
  %701 = vmatprep.mubr.f32.mxu0 0.0
  %702 = vmatmul.mubr.f32.gmra.mxu0 %v600
  %v703 = vpop.f32.mrf.mxu0
  %v704 = vadd.f32 %v54, %v703
  %v705 = vpop.f32.mrf.mxu0
  %706 = vmatprep.mubr.f32.mxu0 0.0
  %707 = vmatmul.mubr.f32.gmra.mxu0 %v602
  %v708 = vpop.f32.mrf.mxu0
  %v709 = vadd.f32 %v55, %v708
  %v710 = vpop.f32.mrf.mxu0
  %711 = vmatprep.mubr.f32.mxu0 0.0
  %712 = vmatmul.mubr.f32.gmra.mxu0 %v604
  %v713 = vpop.f32.mrf.mxu0
  %v714 = vadd.f32 %v56, %v713
  %v715 = vpop.f32.mrf.mxu0
  %716 = vmatprep.mubr.f32.mxu0 0.0
  %717 = vmatmul.mubr.f32.gmra.mxu0 %v606
  %v718 = vpop.f32.mrf.mxu0
  %v719 = vadd.f32 %v57, %v718
  %v720 = vpop.f32.mrf.mxu0
  %721 = vdwg.mxu0
  %v722 = vsel %vm346, %v689, -inf
  %723 = vmax.xlane.f32.xlu0 %v722
  %v724 = vpop.xlane.xlu0 %723
  %v725 = vsel %vm346, %v694, -inf
  %726 = vmax.xlane.f32.xlu0 %v725
  %v727 = vpop.xlane.xlu0 %726
  %v728 = vsel %vm346, %v699, -inf
  %729 = vmax.xlane.f32.xlu0 %v728
  %v730 = vpop.xlane.xlu0 %729
  %v731 = vsel %vm346, %v704, -inf
  %732 = vmax.xlane.f32.xlu0 %v731
  %v733 = vpop.xlane.xlu0 %732
  %v734 = vsel %vm346, %v709, -inf
  %735 = vmax.xlane.f32.xlu0 %v734
  %v736 = vpop.xlane.xlu0 %735
  %v737 = vsel %vm346, %v714, -inf
  %738 = vmax.xlane.f32.xlu0 %v737
  %v739 = vpop.xlane.xlu0 %738
  %v740 = vsel %vm346, %v719, -inf
  %741 = vmax.xlane.f32.xlu0 %v740
  %v742 = vpop.xlane.xlu0 %741
  %v743 = vsub.f32 %v689, %v724
  %v744 = vsub.f32 %v694, %v727
  %v745 = vsub.f32 %v699, %v730
  %v746 = vsub.f32 %v704, %v733
  %v747 = vsub.f32 %v709, %v736
  %v748 = vsub.f32 %v714, %v739
  %v749 = vsub.f32 %v719, %v742
  %v750 = vmul.f32 %v743, 1.442695
  %v751 = vpow.pop %v750
  %v752 = vmul.f32 %v744, 1.442695
  %v753 = vpow.pop %v752
  %v754 = vmul.f32 %v745, 1.442695
  %v755 = vpow.pop %v754
  %v756 = vmul.f32 %v746, 1.442695
  %v757 = vpow.pop %v756
  %v758 = vmul.f32 %v747, 1.442695
  %v759 = vpow.pop %v758
  %v760 = vmul.f32 %v748, 1.442695
  %v761 = vpow.pop %v760
  %v762 = vmul.f32 %v749, 1.442695
  %v763 = vpow.pop %v762
  %v764 = vsel %vm346, %v751, 0.0
  %765 = vadd.xlane.f32.xlu0 %v764
  %v766 = vpop.xlane.xlu0 %765
  %v767 = vsel %vm346, %v753, 0.0
  %768 = vadd.xlane.f32.xlu0 %v767
  %v769 = vpop.xlane.xlu0 %768
  %v770 = vsel %vm346, %v755, 0.0
  %771 = vadd.xlane.f32.xlu0 %v770
  %v772 = vpop.xlane.xlu0 %771
  %v773 = vsel %vm346, %v757, 0.0
  %774 = vadd.xlane.f32.xlu0 %v773
  %v775 = vpop.xlane.xlu0 %774
  %v776 = vsel %vm346, %v759, 0.0
  %777 = vadd.xlane.f32.xlu0 %v776
  %v778 = vpop.xlane.xlu0 %777
  %v779 = vsel %vm346, %v761, 0.0
  %780 = vadd.xlane.f32.xlu0 %v779
  %v781 = vpop.xlane.xlu0 %780
  %v782 = vsel %vm346, %v763, 0.0
  %783 = vadd.xlane.f32.xlu0 %v782
  %v784 = vpop.xlane.xlu0 %783
  %v785 = vrcp.pop %v766
  %v786 = vrcp.pop %v769
  %v787 = vrcp.pop %v772
  %v788 = vrcp.pop %v775
  %v789 = vrcp.pop %v778
  %v790 = vrcp.pop %v781
  %v791 = vrcp.pop %v784
  %v792 = vmul.f32 %v751, %v785
  %v793 = vmul.f32 %v753, %v786
  %v794 = vmul.f32 %v755, %v787
  %v795 = vmul.f32 %v757, %v788
  %v796 = vmul.f32 %v759, %v789
  %v797 = vmul.f32 %v761, %v790
  %v798 = vmul.f32 %v763, %v791
  %799 = vrot.lane.b32.xlu0 %v163, 56
  %v800 = vpop.permute.xlu0 %799
  %801 = vrot.lane.b32.xlu0 %v168, 56
  %v802 = vpop.permute.xlu0 %801
  %803 = vrot.lane.b32.xlu0 %v173, 56
  %v804 = vpop.permute.xlu0 %803
  %805 = vrot.lane.b32.xlu0 %v178, 56
  %v806 = vpop.permute.xlu0 %805
  %807 = vrot.lane.b32.xlu0 %v183, 56
  %v808 = vpop.permute.xlu0 %807
  %809 = vrot.lane.b32.xlu0 %v188, 56
  %v810 = vpop.permute.xlu0 %809
  %811 = vrot.lane.b32.xlu0 %v193, 56
  %v812 = vpop.permute.xlu0 %811
  %v821 = vsel %vm346, %v792, 0
  %v824 = vsel %vm346, %v793, 0
  %v827 = vsel %vm346, %v794, 0
  %v830 = vsel %vm346, %v795, 0
  %v833 = vsel %vm346, %v796, 0
  %v836 = vsel %vm346, %v797, 0
  %v839 = vsel %vm346, %v798, 0
  %841 = vmatprep.subr.mxu0 0.0
  %842 = vmatpush1.msra.mxu0 0.0
  %843 = vmatprep.subr.mxu0 0.0
  %844 = vmatpush1.msra.mxu0 0.0
  %845 = vmatprep.subr.mxu0 0.0
  %846 = vmatpush1.msra.mxu0 0.0
  %847 = vmatprep.subr.mxu0 0.0
  %848 = vmatpush1.msra.mxu0 0.0
  %849 = vmatprep.subr.mxu0 0.0
  %850 = vmatpush1.msra.mxu0 0.0
  %851 = vmatprep.subr.mxu0 0.0
  %852 = vmatpush1.msra.mxu0 0.0
  %853 = vmatprep.subr.mxu0 0.0
  %854 = vmatpush1.msra.mxu0 0.0
  %855 = vmatprep.subr.mxu0 0.0
  %856 = vmatpush1.msra.mxu0 0.0
  %857 = vmatprep.subr.mxu0 0.0
  %858 = vmatpush1.msra.mxu0 0.0
  %859 = vmatprep.subr.mxu0 0.0
  %860 = vmatpush1.msra.mxu0 %v812
  %861 = vmatprep.subr.mxu0 0.0
  %862 = vmatpush1.msra.mxu0 %v810
  %863 = vmatprep.subr.mxu0 0.0
  %864 = vmatpush1.msra.mxu0 %v808
  %865 = vmatprep.subr.mxu0 0.0
  %866 = vmatpush1.msra.mxu0 %v806
  %867 = vmatprep.subr.mxu0 0.0
  %868 = vmatpush1.msra.mxu0 %v804
  %869 = vmatprep.subr.mxu0 0.0
  %870 = vmatpush1.msra.mxu0 %v802
  %871 = vmatprep.subr.mxu0 0.0
  %872 = vmatpush1.msra.mxu0 %v800
  %873 = vmatprep.subr.mxu0 0.0
  %874 = vmatpush2.msra.mxu0 0.0
  %875 = vmatprep.subr.mxu0 0.0
  %876 = vmatpush2.msra.mxu0 0.0
  %877 = vmatprep.subr.mxu0 0.0
  %878 = vmatpush2.msra.mxu0 0.0
  %879 = vmatprep.subr.mxu0 0.0
  %880 = vmatpush2.msra.mxu0 0.0
  %881 = vmatprep.subr.mxu0 0.0
  %882 = vmatpush2.msra.mxu0 0.0
  %883 = vmatprep.subr.mxu0 0.0
  %884 = vmatpush2.msra.mxu0 0.0
  %885 = vmatprep.subr.mxu0 0.0
  %886 = vmatpush2.msra.mxu0 0.0
  %887 = vmatprep.subr.mxu0 0.0
  %888 = vmatpush2.msra.mxu0 0.0
  %889 = vmatprep.subr.mxu0 0.0
  %890 = vmatpush2.msra.mxu0 0.0
  %891 = vmatprep.subr.mxu0 0.0
  %892 = vmatpush2.msra.mxu0 0.0
  %893 = vmatprep.subr.mxu0 0.0
  %894 = vmatpush2.msra.mxu0 0.0
  %895 = vmatprep.subr.mxu0 0.0
  %896 = vmatpush2.msra.mxu0 0.0
  %897 = vmatprep.subr.mxu0 0.0
  %898 = vmatpush2.msra.mxu0 0.0
  %899 = vmatprep.subr.mxu0 0.0
  %900 = vmatpush2.msra.mxu0 0.0
  %901 = vmatprep.subr.mxu0 0.0
  %902 = vmatpush2.msra.mxu0 0.0
  %903 = vmatprep.subr.mxu0 0.0
  %904 = vmatpush2.msra.mxu0 0.0
  %905 = vmatprep.mubr.f32.mxu0 0.0
  %906 = vmatmul.mubr.f32.gmra.mxu0 %v821
  %v907 = vpop.f32.mrf.mxu0
  %v908 = vadd.f32 0.0, %v907
  %v909 = vpop.f32.mrf.mxu0
  %910 = vmatprep.mubr.f32.mxu0 0.0
  %911 = vmatmul.mubr.f32.gmra.mxu0 %v824
  %v912 = vpop.f32.mrf.mxu0
  %v913 = vadd.f32 0.0, %v912
  %v914 = vpop.f32.mrf.mxu0
  %915 = vmatprep.mubr.f32.mxu0 0.0
  %916 = vmatmul.mubr.f32.gmra.mxu0 %v827
  %v917 = vpop.f32.mrf.mxu0
  %v918 = vadd.f32 0.0, %v917
  %v919 = vpop.f32.mrf.mxu0
  %920 = vmatprep.mubr.f32.mxu0 0.0
  %921 = vmatmul.mubr.f32.gmra.mxu0 %v830
  %v922 = vpop.f32.mrf.mxu0
  %v923 = vadd.f32 0.0, %v922
  %v924 = vpop.f32.mrf.mxu0
  %925 = vmatprep.mubr.f32.mxu0 0.0
  %926 = vmatmul.mubr.f32.gmra.mxu0 %v833
  %v927 = vpop.f32.mrf.mxu0
  %v928 = vadd.f32 0.0, %v927
  %v929 = vpop.f32.mrf.mxu0
  %930 = vmatprep.mubr.f32.mxu0 0.0
  %931 = vmatmul.mubr.f32.gmra.mxu0 %v836
  %v932 = vpop.f32.mrf.mxu0
  %v933 = vadd.f32 0.0, %v932
  %v934 = vpop.f32.mrf.mxu0
  %935 = vmatprep.mubr.f32.mxu0 0.0
  %936 = vmatmul.mubr.f32.gmra.mxu0 %v839
  %v937 = vpop.f32.mrf.mxu0
  %v938 = vadd.f32 0.0, %v937
  %v939 = vpop.f32.mrf.mxu0
  %940 = vdwg.mxu0
  %941 = vrot.lane.b32.xlu0 %v163, 112
  %v942 = vpop.permute.xlu0 %941
  %943 = vrot.lane.b32.xlu0 %v168, 112
  %v944 = vpop.permute.xlu0 %943
  %945 = vrot.lane.b32.xlu0 %v173, 112
  %v946 = vpop.permute.xlu0 %945
  %947 = vrot.lane.b32.xlu0 %v178, 112
  %v948 = vpop.permute.xlu0 %947
  %949 = vrot.lane.b32.xlu0 %v183, 112
  %v950 = vpop.permute.xlu0 %949
  %951 = vrot.lane.b32.xlu0 %v188, 112
  %v952 = vpop.permute.xlu0 %951
  %953 = vrot.lane.b32.xlu0 %v193, 112
  %v954 = vpop.permute.xlu0 %953
  %955 = vrot.lane.b32.xlu0 %v163, 80
  %v956 = vpop.permute.xlu0 %955
  %957 = vrot.lane.b32.xlu0 %v168, 80
  %v958 = vpop.permute.xlu0 %957
  %959 = vrot.lane.b32.xlu0 %v173, 80
  %v960 = vpop.permute.xlu0 %959
  %961 = vrot.lane.b32.xlu0 %v178, 80
  %v962 = vpop.permute.xlu0 %961
  %963 = vrot.lane.b32.xlu0 %v183, 80
  %v964 = vpop.permute.xlu0 %963
  %965 = vrot.lane.b32.xlu0 %v188, 80
  %v966 = vpop.permute.xlu0 %965
  %967 = vrot.lane.b32.xlu0 %v193, 80
  %v968 = vpop.permute.xlu0 %967
  %v969 = vsel %vm217, %v942, 0
  %v971 = vsel %vm217, %v944, 0
  %v973 = vsel %vm217, %v946, 0
  %v975 = vsel %vm217, %v948, 0
  %v977 = vsel %vm217, %v950, 0
  %v979 = vsel %vm217, %v952, 0
  %v981 = vsel %vm217, %v954, 0
  %v983 = vsel %vm217, %v956, 0
  %v985 = vsel %vm217, %v958, 0
  %v987 = vsel %vm217, %v960, 0
  %v989 = vsel %vm217, %v962, 0
  %v991 = vsel %vm217, %v964, 0
  %v993 = vsel %vm217, %v966, 0
  %v995 = vsel %vm217, %v968, 0
  %997 = vmatprep.subr.mxu0 0.0
  %998 = vmatpush1.xpose.msra.mxu0 0.0
  %999 = vmatprep.subr.mxu0 0.0
  %1000 = vmatpush1.xpose.msra.mxu0 0.0
  %1001 = vmatprep.subr.mxu0 0.0
  %1002 = vmatpush1.xpose.msra.mxu0 0.0
  %1003 = vmatprep.subr.mxu0 0.0
  %1004 = vmatpush1.xpose.msra.mxu0 0.0
  %1005 = vmatprep.subr.mxu0 0.0
  %1006 = vmatpush1.xpose.msra.mxu0 0.0
  %1007 = vmatprep.subr.mxu0 0.0
  %1008 = vmatpush1.xpose.msra.mxu0 0.0
  %1009 = vmatprep.subr.mxu0 0.0
  %1010 = vmatpush1.xpose.msra.mxu0 0.0
  %1011 = vmatprep.subr.mxu0 0.0
  %1012 = vmatpush1.xpose.msra.mxu0 0.0
  %1013 = vmatprep.subr.mxu0 0.0
  %1014 = vmatpush1.xpose.msra.mxu0 0.0
  %1015 = vmatprep.subr.mxu0 0.0
  %1016 = vmatpush1.xpose.msra.mxu0 %v995
  %1017 = vmatprep.subr.mxu0 0.0
  %1018 = vmatpush1.xpose.msra.mxu0 %v993
  %1019 = vmatprep.subr.mxu0 0.0
  %1020 = vmatpush1.xpose.msra.mxu0 %v991
  %1021 = vmatprep.subr.mxu0 0.0
  %1022 = vmatpush1.xpose.msra.mxu0 %v989
  %1023 = vmatprep.subr.mxu0 0.0
  %1024 = vmatpush1.xpose.msra.mxu0 %v987
  %1025 = vmatprep.subr.mxu0 0.0
  %1026 = vmatpush1.xpose.msra.mxu0 %v985
  %1027 = vmatprep.subr.mxu0 0.0
  %1028 = vmatpush1.xpose.msra.mxu0 %v983
  %1029 = vmatprep.subr.mxu0 0.0
  %1030 = vmatpush2.xpose.msra.mxu0 0.0
  %1031 = vmatprep.subr.mxu0 0.0
  %1032 = vmatpush2.xpose.msra.mxu0 0.0
  %1033 = vmatprep.subr.mxu0 0.0
  %1034 = vmatpush2.xpose.msra.mxu0 0.0
  %1035 = vmatprep.subr.mxu0 0.0
  %1036 = vmatpush2.xpose.msra.mxu0 0.0
  %1037 = vmatprep.subr.mxu0 0.0
  %1038 = vmatpush2.xpose.msra.mxu0 0.0
  %1039 = vmatprep.subr.mxu0 0.0
  %1040 = vmatpush2.xpose.msra.mxu0 0.0
  %1041 = vmatprep.subr.mxu0 0.0
  %1042 = vmatpush2.xpose.msra.mxu0 0.0
  %1043 = vmatprep.subr.mxu0 0.0
  %1044 = vmatpush2.xpose.msra.mxu0 0.0
  %1045 = vmatprep.subr.mxu0 0.0
  %1046 = vmatpush2.xpose.msra.mxu0 0.0
  %1047 = vmatprep.subr.mxu0 0.0
  %1048 = vmatpush2.xpose.msra.mxu0 0.0
  %1049 = vmatprep.subr.mxu0 0.0
  %1050 = vmatpush2.xpose.msra.mxu0 0.0
  %1051 = vmatprep.subr.mxu0 0.0
  %1052 = vmatpush2.xpose.msra.mxu0 0.0
  %1053 = vmatprep.subr.mxu0 0.0
  %1054 = vmatpush2.xpose.msra.mxu0 0.0
  %1055 = vmatprep.subr.mxu0 0.0
  %1056 = vmatpush2.xpose.msra.mxu0 0.0
  %1057 = vmatprep.subr.mxu0 0.0
  %1058 = vmatpush2.xpose.msra.mxu0 0.0
  %1059 = vmatprep.subr.mxu0 0.0
  %1060 = vmatpush2.xpose.msra.mxu0 0.0
  %1061 = vmatprep.mubr.f32.mxu0 0.0
  %1062 = vmatmul.mubr.f32.gmra.mxu0 %v969
  %v1063 = vpop.f32.mrf.mxu0
  %v1064 = vadd.f32 %v51, %v1063
  %v1065 = vpop.f32.mrf.mxu0
  %1066 = vmatprep.mubr.f32.mxu0 0.0
  %1067 = vmatmul.mubr.f32.gmra.mxu0 %v971
  %v1068 = vpop.f32.mrf.mxu0
  %v1069 = vadd.f32 %v52, %v1068
  %v1070 = vpop.f32.mrf.mxu0
  %1071 = vmatprep.mubr.f32.mxu0 0.0
  %1072 = vmatmul.mubr.f32.gmra.mxu0 %v973
  %v1073 = vpop.f32.mrf.mxu0
  %v1074 = vadd.f32 %v53, %v1073
  %v1075 = vpop.f32.mrf.mxu0
  %1076 = vmatprep.mubr.f32.mxu0 0.0
  %1077 = vmatmul.mubr.f32.gmra.mxu0 %v975
  %v1078 = vpop.f32.mrf.mxu0
  %v1079 = vadd.f32 %v54, %v1078
  %v1080 = vpop.f32.mrf.mxu0
  %1081 = vmatprep.mubr.f32.mxu0 0.0
  %1082 = vmatmul.mubr.f32.gmra.mxu0 %v977
  %v1083 = vpop.f32.mrf.mxu0
  %v1084 = vadd.f32 %v55, %v1083
  %v1085 = vpop.f32.mrf.mxu0
  %1086 = vmatprep.mubr.f32.mxu0 0.0
  %1087 = vmatmul.mubr.f32.gmra.mxu0 %v979
  %v1088 = vpop.f32.mrf.mxu0
  %v1089 = vadd.f32 %v56, %v1088
  %v1090 = vpop.f32.mrf.mxu0
  %1091 = vmatprep.mubr.f32.mxu0 0.0
  %1092 = vmatmul.mubr.f32.gmra.mxu0 %v981
  %v1093 = vpop.f32.mrf.mxu0
  %v1094 = vadd.f32 %v57, %v1093
  %v1095 = vpop.f32.mrf.mxu0
  %1096 = vdwg.mxu0
  %v1097 = vsel %vm346, %v1064, -inf
  %1098 = vmax.xlane.f32.xlu0 %v1097
  %v1099 = vpop.xlane.xlu0 %1098
  %v1100 = vsel %vm346, %v1069, -inf
  %1101 = vmax.xlane.f32.xlu0 %v1100
  %v1102 = vpop.xlane.xlu0 %1101
  %v1103 = vsel %vm346, %v1074, -inf
  %1104 = vmax.xlane.f32.xlu0 %v1103
  %v1105 = vpop.xlane.xlu0 %1104
  %v1106 = vsel %vm346, %v1079, -inf
  %1107 = vmax.xlane.f32.xlu0 %v1106
  %v1108 = vpop.xlane.xlu0 %1107
  %v1109 = vsel %vm346, %v1084, -inf
  %1110 = vmax.xlane.f32.xlu0 %v1109
  %v1111 = vpop.xlane.xlu0 %1110
  %v1112 = vsel %vm346, %v1089, -inf
  %1113 = vmax.xlane.f32.xlu0 %v1112
  %v1114 = vpop.xlane.xlu0 %1113
  %v1115 = vsel %vm346, %v1094, -inf
  %1116 = vmax.xlane.f32.xlu0 %v1115
  %v1117 = vpop.xlane.xlu0 %1116
  %v1118 = vsub.f32 %v1064, %v1099
  %v1119 = vsub.f32 %v1069, %v1102
  %v1120 = vsub.f32 %v1074, %v1105
  %v1121 = vsub.f32 %v1079, %v1108
  %v1122 = vsub.f32 %v1084, %v1111
  %v1123 = vsub.f32 %v1089, %v1114
  %v1124 = vsub.f32 %v1094, %v1117
  %v1125 = vmul.f32 %v1118, 1.442695
  %v1126 = vpow.pop %v1125
  %v1127 = vmul.f32 %v1119, 1.442695
  %v1128 = vpow.pop %v1127
  %v1129 = vmul.f32 %v1120, 1.442695
  %v1130 = vpow.pop %v1129
  %v1131 = vmul.f32 %v1121, 1.442695
  %v1132 = vpow.pop %v1131
  %v1133 = vmul.f32 %v1122, 1.442695
  %v1134 = vpow.pop %v1133
  %v1135 = vmul.f32 %v1123, 1.442695
  %v1136 = vpow.pop %v1135
  %v1137 = vmul.f32 %v1124, 1.442695
  %v1138 = vpow.pop %v1137
  %v1139 = vsel %vm346, %v1126, 0.0
  %1140 = vadd.xlane.f32.xlu0 %v1139
  %v1141 = vpop.xlane.xlu0 %1140
  %v1142 = vsel %vm346, %v1128, 0.0
  %1143 = vadd.xlane.f32.xlu0 %v1142
  %v1144 = vpop.xlane.xlu0 %1143
  %v1145 = vsel %vm346, %v1130, 0.0
  %1146 = vadd.xlane.f32.xlu0 %v1145
  %v1147 = vpop.xlane.xlu0 %1146
  %v1148 = vsel %vm346, %v1132, 0.0
  %1149 = vadd.xlane.f32.xlu0 %v1148
  %v1150 = vpop.xlane.xlu0 %1149
  %v1151 = vsel %vm346, %v1134, 0.0
  %1152 = vadd.xlane.f32.xlu0 %v1151
  %v1153 = vpop.xlane.xlu0 %1152
  %v1154 = vsel %vm346, %v1136, 0.0
  %1155 = vadd.xlane.f32.xlu0 %v1154
  %v1156 = vpop.xlane.xlu0 %1155
  %v1157 = vsel %vm346, %v1138, 0.0
  %1158 = vadd.xlane.f32.xlu0 %v1157
  %v1159 = vpop.xlane.xlu0 %1158
  %v1160 = vrcp.pop %v1141
  %v1161 = vrcp.pop %v1144
  %v1162 = vrcp.pop %v1147
  %v1163 = vrcp.pop %v1150
  %v1164 = vrcp.pop %v1153
  %v1165 = vrcp.pop %v1156
  %v1166 = vrcp.pop %v1159
  %v1167 = vmul.f32 %v1126, %v1160
  %v1168 = vmul.f32 %v1128, %v1161
  %v1169 = vmul.f32 %v1130, %v1162
  %v1170 = vmul.f32 %v1132, %v1163
  %v1171 = vmul.f32 %v1134, %v1164
  %v1172 = vmul.f32 %v1136, %v1165
  %v1173 = vmul.f32 %v1138, %v1166
  %1174 = vrot.lane.b32.xlu0 %v163, 48
  %v1175 = vpop.permute.xlu0 %1174
  %1176 = vrot.lane.b32.xlu0 %v168, 48
  %v1177 = vpop.permute.xlu0 %1176
  %1178 = vrot.lane.b32.xlu0 %v173, 48
  %v1179 = vpop.permute.xlu0 %1178
  %1180 = vrot.lane.b32.xlu0 %v178, 48
  %v1181 = vpop.permute.xlu0 %1180
  %1182 = vrot.lane.b32.xlu0 %v183, 48
  %v1183 = vpop.permute.xlu0 %1182
  %1184 = vrot.lane.b32.xlu0 %v188, 48
  %v1185 = vpop.permute.xlu0 %1184
  %1186 = vrot.lane.b32.xlu0 %v193, 48
  %v1187 = vpop.permute.xlu0 %1186
  %v1196 = vsel %vm346, %v1167, 0
  %v1199 = vsel %vm346, %v1168, 0
  %v1202 = vsel %vm346, %v1169, 0
  %v1205 = vsel %vm346, %v1170, 0
  %v1208 = vsel %vm346, %v1171, 0
  %v1211 = vsel %vm346, %v1172, 0
  %v1214 = vsel %vm346, %v1173, 0
  %1216 = vmatprep.subr.mxu0 0.0
  %1217 = vmatpush1.msra.mxu0 0.0
  %1218 = vmatprep.subr.mxu0 0.0
  %1219 = vmatpush1.msra.mxu0 0.0
  %1220 = vmatprep.subr.mxu0 0.0
  %1221 = vmatpush1.msra.mxu0 0.0
  %1222 = vmatprep.subr.mxu0 0.0
  %1223 = vmatpush1.msra.mxu0 0.0
  %1224 = vmatprep.subr.mxu0 0.0
  %1225 = vmatpush1.msra.mxu0 0.0
  %1226 = vmatprep.subr.mxu0 0.0
  %1227 = vmatpush1.msra.mxu0 0.0
  %1228 = vmatprep.subr.mxu0 0.0
  %1229 = vmatpush1.msra.mxu0 0.0
  %1230 = vmatprep.subr.mxu0 0.0
  %1231 = vmatpush1.msra.mxu0 0.0
  %1232 = vmatprep.subr.mxu0 0.0
  %1233 = vmatpush1.msra.mxu0 0.0
  %1234 = vmatprep.subr.mxu0 0.0
  %1235 = vmatpush1.msra.mxu0 %v1187
  %1236 = vmatprep.subr.mxu0 0.0
  %1237 = vmatpush1.msra.mxu0 %v1185
  %1238 = vmatprep.subr.mxu0 0.0
  %1239 = vmatpush1.msra.mxu0 %v1183
  %1240 = vmatprep.subr.mxu0 0.0
  %1241 = vmatpush1.msra.mxu0 %v1181
  %1242 = vmatprep.subr.mxu0 0.0
  %1243 = vmatpush1.msra.mxu0 %v1179
  %1244 = vmatprep.subr.mxu0 0.0
  %1245 = vmatpush1.msra.mxu0 %v1177
  %1246 = vmatprep.subr.mxu0 0.0
  %1247 = vmatpush1.msra.mxu0 %v1175
  %1248 = vmatprep.subr.mxu0 0.0
  %1249 = vmatpush2.msra.mxu0 0.0
  %1250 = vmatprep.subr.mxu0 0.0
  %1251 = vmatpush2.msra.mxu0 0.0
  %1252 = vmatprep.subr.mxu0 0.0
  %1253 = vmatpush2.msra.mxu0 0.0
  %1254 = vmatprep.subr.mxu0 0.0
  %1255 = vmatpush2.msra.mxu0 0.0
  %1256 = vmatprep.subr.mxu0 0.0
  %1257 = vmatpush2.msra.mxu0 0.0
  %1258 = vmatprep.subr.mxu0 0.0
  %1259 = vmatpush2.msra.mxu0 0.0
  %1260 = vmatprep.subr.mxu0 0.0
  %1261 = vmatpush2.msra.mxu0 0.0
  %1262 = vmatprep.subr.mxu0 0.0
  %1263 = vmatpush2.msra.mxu0 0.0
  %1264 = vmatprep.subr.mxu0 0.0
  %1265 = vmatpush2.msra.mxu0 0.0
  %1266 = vmatprep.subr.mxu0 0.0
  %1267 = vmatpush2.msra.mxu0 0.0
  %1268 = vmatprep.subr.mxu0 0.0
  %1269 = vmatpush2.msra.mxu0 0.0
  %1270 = vmatprep.subr.mxu0 0.0
  %1271 = vmatpush2.msra.mxu0 0.0
  %1272 = vmatprep.subr.mxu0 0.0
  %1273 = vmatpush2.msra.mxu0 0.0
  %1274 = vmatprep.subr.mxu0 0.0
  %1275 = vmatpush2.msra.mxu0 0.0
  %1276 = vmatprep.subr.mxu0 0.0
  %1277 = vmatpush2.msra.mxu0 0.0
  %1278 = vmatprep.subr.mxu0 0.0
  %1279 = vmatpush2.msra.mxu0 0.0
  %1280 = vmatprep.mubr.f32.mxu0 0.0
  %1281 = vmatmul.mubr.f32.gmra.mxu0 %v1196
  %v1282 = vpop.f32.mrf.mxu0
  %v1283 = vadd.f32 0.0, %v1282
  %v1284 = vpop.f32.mrf.mxu0
  %1285 = vmatprep.mubr.f32.mxu0 0.0
  %1286 = vmatmul.mubr.f32.gmra.mxu0 %v1199
  %v1287 = vpop.f32.mrf.mxu0
  %v1288 = vadd.f32 0.0, %v1287
  %v1289 = vpop.f32.mrf.mxu0
  %1290 = vmatprep.mubr.f32.mxu0 0.0
  %1291 = vmatmul.mubr.f32.gmra.mxu0 %v1202
  %v1292 = vpop.f32.mrf.mxu0
  %v1293 = vadd.f32 0.0, %v1292
  %v1294 = vpop.f32.mrf.mxu0
  %1295 = vmatprep.mubr.f32.mxu0 0.0
  %1296 = vmatmul.mubr.f32.gmra.mxu0 %v1205
  %v1297 = vpop.f32.mrf.mxu0
  %v1298 = vadd.f32 0.0, %v1297
  %v1299 = vpop.f32.mrf.mxu0
  %1300 = vmatprep.mubr.f32.mxu0 0.0
  %1301 = vmatmul.mubr.f32.gmra.mxu0 %v1208
  %v1302 = vpop.f32.mrf.mxu0
  %v1303 = vadd.f32 0.0, %v1302
  %v1304 = vpop.f32.mrf.mxu0
  %1305 = vmatprep.mubr.f32.mxu0 0.0
  %1306 = vmatmul.mubr.f32.gmra.mxu0 %v1211
  %v1307 = vpop.f32.mrf.mxu0
  %v1308 = vadd.f32 0.0, %v1307
  %v1309 = vpop.f32.mrf.mxu0
  %1310 = vmatprep.mubr.f32.mxu0 0.0
  %1311 = vmatmul.mubr.f32.gmra.mxu0 %v1214
  %v1312 = vpop.f32.mrf.mxu0
  %v1313 = vadd.f32 0.0, %v1312
  %v1314 = vpop.f32.mrf.mxu0
  %1315 = vdwg.mxu0
  %1316 = vrot.lane.b32.xlu0 %v163, 104
  %v1317 = vpop.permute.xlu0 %1316
  %1318 = vrot.lane.b32.xlu0 %v168, 104
  %v1319 = vpop.permute.xlu0 %1318
  %1320 = vrot.lane.b32.xlu0 %v173, 104
  %v1321 = vpop.permute.xlu0 %1320
  %1322 = vrot.lane.b32.xlu0 %v178, 104
  %v1323 = vpop.permute.xlu0 %1322
  %1324 = vrot.lane.b32.xlu0 %v183, 104
  %v1325 = vpop.permute.xlu0 %1324
  %1326 = vrot.lane.b32.xlu0 %v188, 104
  %v1327 = vpop.permute.xlu0 %1326
  %1328 = vrot.lane.b32.xlu0 %v193, 104
  %v1329 = vpop.permute.xlu0 %1328
  %1330 = vrot.lane.b32.xlu0 %v163, 72
  %v1331 = vpop.permute.xlu0 %1330
  %1332 = vrot.lane.b32.xlu0 %v168, 72
  %v1333 = vpop.permute.xlu0 %1332
  %1334 = vrot.lane.b32.xlu0 %v173, 72
  %v1335 = vpop.permute.xlu0 %1334
  %1336 = vrot.lane.b32.xlu0 %v178, 72
  %v1337 = vpop.permute.xlu0 %1336
  %1338 = vrot.lane.b32.xlu0 %v183, 72
  %v1339 = vpop.permute.xlu0 %1338
  %1340 = vrot.lane.b32.xlu0 %v188, 72
  %v1341 = vpop.permute.xlu0 %1340
  %1342 = vrot.lane.b32.xlu0 %v193, 72
  %v1343 = vpop.permute.xlu0 %1342
  %v1344 = vsel %vm217, %v1317, 0
  %v1346 = vsel %vm217, %v1319, 0
  %v1348 = vsel %vm217, %v1321, 0
  %v1350 = vsel %vm217, %v1323, 0
  %v1352 = vsel %vm217, %v1325, 0
  %v1354 = vsel %vm217, %v1327, 0
  %v1356 = vsel %vm217, %v1329, 0
  %v1358 = vsel %vm217, %v1331, 0
  %v1360 = vsel %vm217, %v1333, 0
  %v1362 = vsel %vm217, %v1335, 0
  %v1364 = vsel %vm217, %v1337, 0
  %v1366 = vsel %vm217, %v1339, 0
  %v1368 = vsel %vm217, %v1341, 0
  %v1370 = vsel %vm217, %v1343, 0
  %1372 = vmatprep.subr.mxu0 0.0
  %1373 = vmatpush1.xpose.msra.mxu0 0.0
  %1374 = vmatprep.subr.mxu0 0.0
  %1375 = vmatpush1.xpose.msra.mxu0 0.0
  %1376 = vmatprep.subr.mxu0 0.0
  %1377 = vmatpush1.xpose.msra.mxu0 0.0
  %1378 = vmatprep.subr.mxu0 0.0
  %1379 = vmatpush1.xpose.msra.mxu0 0.0
  %1380 = vmatprep.subr.mxu0 0.0
  %1381 = vmatpush1.xpose.msra.mxu0 0.0
  %1382 = vmatprep.subr.mxu0 0.0
  %1383 = vmatpush1.xpose.msra.mxu0 0.0
  %1384 = vmatprep.subr.mxu0 0.0
  %1385 = vmatpush1.xpose.msra.mxu0 0.0
  %1386 = vmatprep.subr.mxu0 0.0
  %1387 = vmatpush1.xpose.msra.mxu0 0.0
  %1388 = vmatprep.subr.mxu0 0.0
  %1389 = vmatpush1.xpose.msra.mxu0 0.0
  %1390 = vmatprep.subr.mxu0 0.0
  %1391 = vmatpush1.xpose.msra.mxu0 %v1370
  %1392 = vmatprep.subr.mxu0 0.0
  %1393 = vmatpush1.xpose.msra.mxu0 %v1368
  %1394 = vmatprep.subr.mxu0 0.0
  %1395 = vmatpush1.xpose.msra.mxu0 %v1366
  %1396 = vmatprep.subr.mxu0 0.0
  %1397 = vmatpush1.xpose.msra.mxu0 %v1364
  %1398 = vmatprep.subr.mxu0 0.0
  %1399 = vmatpush1.xpose.msra.mxu0 %v1362
  %1400 = vmatprep.subr.mxu0 0.0
  %1401 = vmatpush1.xpose.msra.mxu0 %v1360
  %1402 = vmatprep.subr.mxu0 0.0
  %1403 = vmatpush1.xpose.msra.mxu0 %v1358
  %1404 = vmatprep.subr.mxu0 0.0
  %1405 = vmatpush2.xpose.msra.mxu0 0.0
  %1406 = vmatprep.subr.mxu0 0.0
  %1407 = vmatpush2.xpose.msra.mxu0 0.0
  %1408 = vmatprep.subr.mxu0 0.0
  %1409 = vmatpush2.xpose.msra.mxu0 0.0
  %1410 = vmatprep.subr.mxu0 0.0
  %1411 = vmatpush2.xpose.msra.mxu0 0.0
  %1412 = vmatprep.subr.mxu0 0.0
  %1413 = vmatpush2.xpose.msra.mxu0 0.0
  %1414 = vmatprep.subr.mxu0 0.0
  %1415 = vmatpush2.xpose.msra.mxu0 0.0
  %1416 = vmatprep.subr.mxu0 0.0
  %1417 = vmatpush2.xpose.msra.mxu0 0.0
  %1418 = vmatprep.subr.mxu0 0.0
  %1419 = vmatpush2.xpose.msra.mxu0 0.0
  %1420 = vmatprep.subr.mxu0 0.0
  %1421 = vmatpush2.xpose.msra.mxu0 0.0
  %1422 = vmatprep.subr.mxu0 0.0
  %1423 = vmatpush2.xpose.msra.mxu0 0.0
  %1424 = vmatprep.subr.mxu0 0.0
  %1425 = vmatpush2.xpose.msra.mxu0 0.0
  %1426 = vmatprep.subr.mxu0 0.0
  %1427 = vmatpush2.xpose.msra.mxu0 0.0
  %1428 = vmatprep.subr.mxu0 0.0
  %1429 = vmatpush2.xpose.msra.mxu0 0.0
  %1430 = vmatprep.subr.mxu0 0.0
  %1431 = vmatpush2.xpose.msra.mxu0 0.0
  %1432 = vmatprep.subr.mxu0 0.0
  %1433 = vmatpush2.xpose.msra.mxu0 0.0
  %1434 = vmatprep.subr.mxu0 0.0
  %1435 = vmatpush2.xpose.msra.mxu0 0.0
  %1436 = vmatprep.mubr.f32.mxu0 0.0
  %1437 = vmatmul.mubr.f32.gmra.mxu0 %v1344
  %v1438 = vpop.f32.mrf.mxu0
  %v1439 = vadd.f32 %v51, %v1438
  %v1440 = vpop.f32.mrf.mxu0
  %1441 = vmatprep.mubr.f32.mxu0 0.0
  %1442 = vmatmul.mubr.f32.gmra.mxu0 %v1346
  %v1443 = vpop.f32.mrf.mxu0
  %v1444 = vadd.f32 %v52, %v1443
  %v1445 = vpop.f32.mrf.mxu0
  %1446 = vmatprep.mubr.f32.mxu0 0.0
  %1447 = vmatmul.mubr.f32.gmra.mxu0 %v1348
  %v1448 = vpop.f32.mrf.mxu0
  %v1449 = vadd.f32 %v53, %v1448
  %v1450 = vpop.f32.mrf.mxu0
  %1451 = vmatprep.mubr.f32.mxu0 0.0
  %1452 = vmatmul.mubr.f32.gmra.mxu0 %v1350
  %v1453 = vpop.f32.mrf.mxu0
  %v1454 = vadd.f32 %v54, %v1453
  %v1455 = vpop.f32.mrf.mxu0
  %1456 = vmatprep.mubr.f32.mxu0 0.0
  %1457 = vmatmul.mubr.f32.gmra.mxu0 %v1352
  %v1458 = vpop.f32.mrf.mxu0
  %v1459 = vadd.f32 %v55, %v1458
  %v1460 = vpop.f32.mrf.mxu0
  %1461 = vmatprep.mubr.f32.mxu0 0.0
  %1462 = vmatmul.mubr.f32.gmra.mxu0 %v1354
  %v1463 = vpop.f32.mrf.mxu0
  %v1464 = vadd.f32 %v56, %v1463
  %v1465 = vpop.f32.mrf.mxu0
  %1466 = vmatprep.mubr.f32.mxu0 0.0
  %1467 = vmatmul.mubr.f32.gmra.mxu0 %v1356
  %v1468 = vpop.f32.mrf.mxu0
  %v1469 = vadd.f32 %v57, %v1468
  %v1470 = vpop.f32.mrf.mxu0
  %1471 = vdwg.mxu0
  %v1472 = vsel %vm346, %v1439, -inf
  %1473 = vmax.xlane.f32.xlu0 %v1472
  %v1474 = vpop.xlane.xlu0 %1473
  %v1475 = vsel %vm346, %v1444, -inf
  %1476 = vmax.xlane.f32.xlu0 %v1475
  %v1477 = vpop.xlane.xlu0 %1476
  %v1478 = vsel %vm346, %v1449, -inf
  %1479 = vmax.xlane.f32.xlu0 %v1478
  %v1480 = vpop.xlane.xlu0 %1479
  %v1481 = vsel %vm346, %v1454, -inf
  %1482 = vmax.xlane.f32.xlu0 %v1481
  %v1483 = vpop.xlane.xlu0 %1482
  %v1484 = vsel %vm346, %v1459, -inf
  %1485 = vmax.xlane.f32.xlu0 %v1484
  %v1486 = vpop.xlane.xlu0 %1485
  %v1487 = vsel %vm346, %v1464, -inf
  %1488 = vmax.xlane.f32.xlu0 %v1487
  %v1489 = vpop.xlane.xlu0 %1488
  %v1490 = vsel %vm346, %v1469, -inf
  %1491 = vmax.xlane.f32.xlu0 %v1490
  %v1492 = vpop.xlane.xlu0 %1491
  %v1493 = vsub.f32 %v1439, %v1474
  %v1494 = vsub.f32 %v1444, %v1477
  %v1495 = vsub.f32 %v1449, %v1480
  %v1496 = vsub.f32 %v1454, %v1483
  %v1497 = vsub.f32 %v1459, %v1486
  %v1498 = vsub.f32 %v1464, %v1489
  %v1499 = vsub.f32 %v1469, %v1492
  %v1500 = vmul.f32 %v1493, 1.442695
  %v1501 = vpow.pop %v1500
  %v1502 = vmul.f32 %v1494, 1.442695
  %v1503 = vpow.pop %v1502
  %v1504 = vmul.f32 %v1495, 1.442695
  %v1505 = vpow.pop %v1504
  %v1506 = vmul.f32 %v1496, 1.442695
  %v1507 = vpow.pop %v1506
  %v1508 = vmul.f32 %v1497, 1.442695
  %v1509 = vpow.pop %v1508
  %v1510 = vmul.f32 %v1498, 1.442695
  %v1511 = vpow.pop %v1510
  %v1512 = vmul.f32 %v1499, 1.442695
  %v1513 = vpow.pop %v1512
  %v1514 = vsel %vm346, %v1501, 0.0
  %1515 = vadd.xlane.f32.xlu0 %v1514
  %v1516 = vpop.xlane.xlu0 %1515
  %v1517 = vsel %vm346, %v1503, 0.0
  %1518 = vadd.xlane.f32.xlu0 %v1517
  %v1519 = vpop.xlane.xlu0 %1518
  %v1520 = vsel %vm346, %v1505, 0.0
  %1521 = vadd.xlane.f32.xlu0 %v1520
  %v1522 = vpop.xlane.xlu0 %1521
  %v1523 = vsel %vm346, %v1507, 0.0
  %1524 = vadd.xlane.f32.xlu0 %v1523
  %v1525 = vpop.xlane.xlu0 %1524
  %v1526 = vsel %vm346, %v1509, 0.0
  %1527 = vadd.xlane.f32.xlu0 %v1526
  %v1528 = vpop.xlane.xlu0 %1527
  %v1529 = vsel %vm346, %v1511, 0.0
  %1530 = vadd.xlane.f32.xlu0 %v1529
  %v1531 = vpop.xlane.xlu0 %1530
  %v1532 = vsel %vm346, %v1513, 0.0
  %1533 = vadd.xlane.f32.xlu0 %v1532
  %v1534 = vpop.xlane.xlu0 %1533
  %v1535 = vrcp.pop %v1516
  %v1536 = vrcp.pop %v1519
  %v1537 = vrcp.pop %v1522
  %v1538 = vrcp.pop %v1525
  %v1539 = vrcp.pop %v1528
  %v1540 = vrcp.pop %v1531
  %v1541 = vrcp.pop %v1534
  %v1542 = vmul.f32 %v1501, %v1535
  %v1543 = vmul.f32 %v1503, %v1536
  %v1544 = vmul.f32 %v1505, %v1537
  %v1545 = vmul.f32 %v1507, %v1538
  %v1546 = vmul.f32 %v1509, %v1539
  %v1547 = vmul.f32 %v1511, %v1540
  %v1548 = vmul.f32 %v1513, %v1541
  %1549 = vrot.lane.b32.xlu0 %v163, 40
  %v1550 = vpop.permute.xlu0 %1549
  %1551 = vrot.lane.b32.xlu0 %v168, 40
  %v1552 = vpop.permute.xlu0 %1551
  %1553 = vrot.lane.b32.xlu0 %v173, 40
  %v1554 = vpop.permute.xlu0 %1553
  %1555 = vrot.lane.b32.xlu0 %v178, 40
  %v1556 = vpop.permute.xlu0 %1555
  %1557 = vrot.lane.b32.xlu0 %v183, 40
  %v1558 = vpop.permute.xlu0 %1557
  %1559 = vrot.lane.b32.xlu0 %v188, 40
  %v1560 = vpop.permute.xlu0 %1559
  %1561 = vrot.lane.b32.xlu0 %v193, 40
  %v1562 = vpop.permute.xlu0 %1561
  %v1571 = vsel %vm346, %v1542, 0
  %v1574 = vsel %vm346, %v1543, 0
  %v1577 = vsel %vm346, %v1544, 0
  %v1580 = vsel %vm346, %v1545, 0
  %v1583 = vsel %vm346, %v1546, 0
  %v1586 = vsel %vm346, %v1547, 0
  %v1589 = vsel %vm346, %v1548, 0
  %1591 = vmatprep.subr.mxu0 0.0
  %1592 = vmatpush1.msra.mxu0 0.0
  %1593 = vmatprep.subr.mxu0 0.0
  %1594 = vmatpush1.msra.mxu0 0.0
  %1595 = vmatprep.subr.mxu0 0.0
  %1596 = vmatpush1.msra.mxu0 0.0
  %1597 = vmatprep.subr.mxu0 0.0
  %1598 = vmatpush1.msra.mxu0 0.0
  %1599 = vmatprep.subr.mxu0 0.0
  %1600 = vmatpush1.msra.mxu0 0.0
  %1601 = vmatprep.subr.mxu0 0.0
  %1602 = vmatpush1.msra.mxu0 0.0
  %1603 = vmatprep.subr.mxu0 0.0
  %1604 = vmatpush1.msra.mxu0 0.0
  %1605 = vmatprep.subr.mxu0 0.0
  %1606 = vmatpush1.msra.mxu0 0.0
  %1607 = vmatprep.subr.mxu0 0.0
  %1608 = vmatpush1.msra.mxu0 0.0
  %1609 = vmatprep.subr.mxu0 0.0
  %1610 = vmatpush1.msra.mxu0 %v1562
  %1611 = vmatprep.subr.mxu0 0.0
  %1612 = vmatpush1.msra.mxu0 %v1560
  %1613 = vmatprep.subr.mxu0 0.0
  %1614 = vmatpush1.msra.mxu0 %v1558
  %1615 = vmatprep.subr.mxu0 0.0
  %1616 = vmatpush1.msra.mxu0 %v1556
  %1617 = vmatprep.subr.mxu0 0.0
  %1618 = vmatpush1.msra.mxu0 %v1554
  %1619 = vmatprep.subr.mxu0 0.0
  %1620 = vmatpush1.msra.mxu0 %v1552
  %1621 = vmatprep.subr.mxu0 0.0
  %1622 = vmatpush1.msra.mxu0 %v1550
  %1623 = vmatprep.subr.mxu0 0.0
  %1624 = vmatpush2.msra.mxu0 0.0
  %1625 = vmatprep.subr.mxu0 0.0
  %1626 = vmatpush2.msra.mxu0 0.0
  %1627 = vmatprep.subr.mxu0 0.0
  %1628 = vmatpush2.msra.mxu0 0.0
  %1629 = vmatprep.subr.mxu0 0.0
  %1630 = vmatpush2.msra.mxu0 0.0
  %1631 = vmatprep.subr.mxu0 0.0
  %1632 = vmatpush2.msra.mxu0 0.0
  %1633 = vmatprep.subr.mxu0 0.0
  %1634 = vmatpush2.msra.mxu0 0.0
  %1635 = vmatprep.subr.mxu0 0.0
  %1636 = vmatpush2.msra.mxu0 0.0
  %1637 = vmatprep.subr.mxu0 0.0
  %1638 = vmatpush2.msra.mxu0 0.0
  %1639 = vmatprep.subr.mxu0 0.0
  %1640 = vmatpush2.msra.mxu0 0.0
  %1641 = vmatprep.subr.mxu0 0.0
  %1642 = vmatpush2.msra.mxu0 0.0
  %1643 = vmatprep.subr.mxu0 0.0
  %1644 = vmatpush2.msra.mxu0 0.0
  %1645 = vmatprep.subr.mxu0 0.0
  %1646 = vmatpush2.msra.mxu0 0.0
  %1647 = vmatprep.subr.mxu0 0.0
  %1648 = vmatpush2.msra.mxu0 0.0
  %1649 = vmatprep.subr.mxu0 0.0
  %1650 = vmatpush2.msra.mxu0 0.0
  %1651 = vmatprep.subr.mxu0 0.0
  %1652 = vmatpush2.msra.mxu0 0.0
  %1653 = vmatprep.subr.mxu0 0.0
  %1654 = vmatpush2.msra.mxu0 0.0
  %1655 = vmatprep.mubr.f32.mxu0 0.0
  %1656 = vmatmul.mubr.f32.gmra.mxu0 %v1571
  %v1657 = vpop.f32.mrf.mxu0
  %v1658 = vadd.f32 0.0, %v1657
  %v1659 = vpop.f32.mrf.mxu0
  %1660 = vmatprep.mubr.f32.mxu0 0.0
  %1661 = vmatmul.mubr.f32.gmra.mxu0 %v1574
  %v1662 = vpop.f32.mrf.mxu0
  %v1663 = vadd.f32 0.0, %v1662
  %v1664 = vpop.f32.mrf.mxu0
  %1665 = vmatprep.mubr.f32.mxu0 0.0
  %1666 = vmatmul.mubr.f32.gmra.mxu0 %v1577
  %v1667 = vpop.f32.mrf.mxu0
  %v1668 = vadd.f32 0.0, %v1667
  %v1669 = vpop.f32.mrf.mxu0
  %1670 = vmatprep.mubr.f32.mxu0 0.0
  %1671 = vmatmul.mubr.f32.gmra.mxu0 %v1580
  %v1672 = vpop.f32.mrf.mxu0
  %v1673 = vadd.f32 0.0, %v1672
  %v1674 = vpop.f32.mrf.mxu0
  %1675 = vmatprep.mubr.f32.mxu0 0.0
  %1676 = vmatmul.mubr.f32.gmra.mxu0 %v1583
  %v1677 = vpop.f32.mrf.mxu0
  %v1678 = vadd.f32 0.0, %v1677
  %v1679 = vpop.f32.mrf.mxu0
  %1680 = vmatprep.mubr.f32.mxu0 0.0
  %1681 = vmatmul.mubr.f32.gmra.mxu0 %v1586
  %v1682 = vpop.f32.mrf.mxu0
  %v1683 = vadd.f32 0.0, %v1682
  %v1684 = vpop.f32.mrf.mxu0
  %1685 = vmatprep.mubr.f32.mxu0 0.0
  %1686 = vmatmul.mubr.f32.gmra.mxu0 %v1589
  %v1687 = vpop.f32.mrf.mxu0
  %v1688 = vadd.f32 0.0, %v1687
  %v1689 = vpop.f32.mrf.mxu0
  %1690 = vdwg.mxu0
  %1698 = vrot.lane.b32.xlu0 %v908, 8
  %v1699 = vpop.permute.xlu0 %1698
  %1700 = vrot.lane.b32.xlu0 %v913, 8
  %v1701 = vpop.permute.xlu0 %1700
  %1702 = vrot.lane.b32.xlu0 %v918, 8
  %v1703 = vpop.permute.xlu0 %1702
  %1704 = vrot.lane.b32.xlu0 %v923, 8
  %v1705 = vpop.permute.xlu0 %1704
  %1706 = vrot.lane.b32.xlu0 %v928, 8
  %v1707 = vpop.permute.xlu0 %1706
  %1708 = vrot.lane.b32.xlu0 %v933, 8
  %v1709 = vpop.permute.xlu0 %1708
  %1710 = vrot.lane.b32.xlu0 %v938, 8
  %v1711 = vpop.permute.xlu0 %1710
  %1726 = vrot.lane.b32.xlu0 %v1283, 16
  %v1727 = vpop.permute.xlu0 %1726
  %1728 = vrot.lane.b32.xlu0 %v1288, 16
  %v1729 = vpop.permute.xlu0 %1728
  %1730 = vrot.lane.b32.xlu0 %v1293, 16
  %v1731 = vpop.permute.xlu0 %1730
  %1732 = vrot.lane.b32.xlu0 %v1298, 16
  %v1733 = vpop.permute.xlu0 %1732
  %1734 = vrot.lane.b32.xlu0 %v1303, 16
  %v1735 = vpop.permute.xlu0 %1734
  %1736 = vrot.lane.b32.xlu0 %v1308, 16
  %v1737 = vpop.permute.xlu0 %1736
  %1738 = vrot.lane.b32.xlu0 %v1313, 16
  %v1739 = vpop.permute.xlu0 %1738
  %1754 = vrot.lane.b32.xlu0 %v1658, 24
  %v1755 = vpop.permute.xlu0 %1754
  %1756 = vrot.lane.b32.xlu0 %v1663, 24
  %v1757 = vpop.permute.xlu0 %1756
  %1758 = vrot.lane.b32.xlu0 %v1668, 24
  %v1759 = vpop.permute.xlu0 %1758
  %1760 = vrot.lane.b32.xlu0 %v1673, 24
  %v1761 = vpop.permute.xlu0 %1760
  %1762 = vrot.lane.b32.xlu0 %v1678, 24
  %v1763 = vpop.permute.xlu0 %1762
  %1764 = vrot.lane.b32.xlu0 %v1683, 24
  %v1765 = vpop.permute.xlu0 %1764
  %1766 = vrot.lane.b32.xlu0 %v1688, 24
  %v1767 = vpop.permute.xlu0 %1766
  %v1775 = vsel %vm217, %v533, %v1699
  %v1776 = vsel %vm217, %v538, %v1701
  %v1777 = vsel %vm217, %v543, %v1703
  %v1778 = vsel %vm217, %v548, %v1705
  %v1779 = vsel %vm217, %v553, %v1707
  %v1780 = vsel %vm217, %v558, %v1709
  %v1781 = vsel %vm217, %v563, %v1711
  %vm1782 = vcmask 130048
  %v1783 = vsel %vm1782, %v1775, %v1727
  %v1784 = vsel %vm1782, %v1776, %v1729
  %v1785 = vsel %vm1782, %v1777, %v1731
  %v1786 = vsel %vm1782, %v1778, %v1733
  %v1787 = vsel %vm1782, %v1779, %v1735
  %v1788 = vsel %vm1782, %v1780, %v1737
  %v1789 = vsel %vm1782, %v1781, %v1739
  %vm1790 = vcmask 195584
  %v1791 = vsel %vm1790, %v1783, %v1755
  %v1792 = vsel %vm1790, %v1784, %v1757
  %v1793 = vsel %vm1790, %v1785, %v1759
  %v1794 = vsel %vm1790, %v1786, %v1761
  %v1795 = vsel %vm1790, %v1787, %v1763
  %v1796 = vsel %vm1790, %v1788, %v1765
  %v1797 = vsel %vm1790, %v1789, %v1767
  %v1798 = vld [vmem:[%s4] sm:$0xff]
  %v1799 = vld [vmem:[%s4 + $0x8] sm:$0xff]
  %v1800 = vld [vmem:[%s4 + $0x10] sm:$0xff]
  %v1801 = vld [vmem:[%s4 + $0x18] sm:$0xff]
  %v1802 = vlaneseq
  %v1803 = vshrl.u32 %v1802, 7
  %v1804 = vsub.s32 0, %v1803
  %v1805 = vrot.slane %v59, %v1804
  %v1807 = vsel %vm74, %v1791, 0
  %v1810 = vsel %vm74, %v1792, 0
  %v1813 = vsel %vm74, %v1793, 0
  %v1816 = vsel %vm74, %v1794, 0
  %v1819 = vsel %vm74, %v1795, 0
  %v1822 = vsel %vm74, %v1796, 0
  %v1825 = vsel %vm74, %v1797, 0
  %1827 = vmatprep.subr.mxu0 0.0
  %1828 = vmatpush1.msra.mxu0 0.0
  %1829 = vmatprep.subr.mxu0 0.0
  %1830 = vmatpush1.msra.mxu0 0.0
  %1831 = vmatprep.subr.mxu0 0.0
  %1832 = vmatpush1.msra.mxu0 0.0
  %1833 = vmatprep.subr.mxu0 0.0
  %1834 = vmatpush1.msra.mxu0 0.0
  %1835 = vmatprep.subr.mxu0 0.0
  %1836 = vmatpush1.msra.mxu0 0.0
  %1837 = vmatprep.subr.mxu0 0.0
  %1838 = vmatpush1.msra.mxu0 0.0
  %1839 = vmatprep.subr.mxu0 0.0
  %1840 = vmatpush1.msra.mxu0 0.0
  %1841 = vmatprep.subr.mxu0 0.0
  %1842 = vmatpush1.msra.mxu0 0.0
  %1843 = vmatprep.subr.mxu0 0.0
  %1844 = vmatpush1.msra.mxu0 0.0
  %1845 = vmatprep.subr.mxu0 0.0
  %1846 = vmatpush1.msra.mxu0 0.0
  %1847 = vmatprep.subr.mxu0 0.0
  %1848 = vmatpush1.msra.mxu0 0.0
  %1849 = vmatprep.subr.mxu0 0.0
  %1850 = vmatpush1.msra.mxu0 0.0
  %1851 = vmatprep.subr.mxu0 0.0
  %1852 = vmatpush1.msra.mxu0 %v1801
  %1853 = vmatprep.subr.mxu0 0.0
  %1854 = vmatpush1.msra.mxu0 %v1800
  %1855 = vmatprep.subr.mxu0 0.0
  %1856 = vmatpush1.msra.mxu0 %v1799
  %1857 = vmatprep.subr.mxu0 0.0
  %1858 = vmatpush1.msra.mxu0 %v1798
  %1859 = vmatprep.subr.mxu0 0.0
  %1860 = vmatpush2.msra.mxu0 0.0
  %1861 = vmatprep.subr.mxu0 0.0
  %1862 = vmatpush2.msra.mxu0 0.0
  %1863 = vmatprep.subr.mxu0 0.0
  %1864 = vmatpush2.msra.mxu0 0.0
  %1865 = vmatprep.subr.mxu0 0.0
  %1866 = vmatpush2.msra.mxu0 0.0
  %1867 = vmatprep.subr.mxu0 0.0
  %1868 = vmatpush2.msra.mxu0 0.0
  %1869 = vmatprep.subr.mxu0 0.0
  %1870 = vmatpush2.msra.mxu0 0.0
  %1871 = vmatprep.subr.mxu0 0.0
  %1872 = vmatpush2.msra.mxu0 0.0
  %1873 = vmatprep.subr.mxu0 0.0
  %1874 = vmatpush2.msra.mxu0 0.0
  %1875 = vmatprep.subr.mxu0 0.0
  %1876 = vmatpush2.msra.mxu0 0.0
  %1877 = vmatprep.subr.mxu0 0.0
  %1878 = vmatpush2.msra.mxu0 0.0
  %1879 = vmatprep.subr.mxu0 0.0
  %1880 = vmatpush2.msra.mxu0 0.0
  %1881 = vmatprep.subr.mxu0 0.0
  %1882 = vmatpush2.msra.mxu0 0.0
  %1883 = vmatprep.subr.mxu0 0.0
  %1884 = vmatpush2.msra.mxu0 0.0
  %1885 = vmatprep.subr.mxu0 0.0
  %1886 = vmatpush2.msra.mxu0 0.0
  %1887 = vmatprep.subr.mxu0 0.0
  %1888 = vmatpush2.msra.mxu0 0.0
  %1889 = vmatprep.subr.mxu0 0.0
  %1890 = vmatpush2.msra.mxu0 0.0
  %1891 = vmatprep.mubr.f32.mxu0 0.0
  %1892 = vmatmul.mubr.f32.gmra.mxu0 %v1807
  %v1893 = vpop.f32.mrf.mxu0
  %v1894 = vadd.f32 %v1805, %v1893
  %v1895 = vpop.f32.mrf.mxu0
  %1896 = vmatprep.mubr.f32.mxu0 0.0
  %1897 = vmatmul.mubr.f32.gmra.mxu0 %v1810
  %v1898 = vpop.f32.mrf.mxu0
  %v1899 = vadd.f32 %v1805, %v1898
  %v1900 = vpop.f32.mrf.mxu0
  %1901 = vmatprep.mubr.f32.mxu0 0.0
  %1902 = vmatmul.mubr.f32.gmra.mxu0 %v1813
  %v1903 = vpop.f32.mrf.mxu0
  %v1904 = vadd.f32 %v1805, %v1903
  %v1905 = vpop.f32.mrf.mxu0
  %1906 = vmatprep.mubr.f32.mxu0 0.0
  %1907 = vmatmul.mubr.f32.gmra.mxu0 %v1816
  %v1908 = vpop.f32.mrf.mxu0
  %v1909 = vadd.f32 %v1805, %v1908
  %v1910 = vpop.f32.mrf.mxu0
  %1911 = vmatprep.mubr.f32.mxu0 0.0
  %1912 = vmatmul.mubr.f32.gmra.mxu0 %v1819
  %v1913 = vpop.f32.mrf.mxu0
  %v1914 = vadd.f32 %v1805, %v1913
  %v1915 = vpop.f32.mrf.mxu0
  %1916 = vmatprep.mubr.f32.mxu0 0.0
  %1917 = vmatmul.mubr.f32.gmra.mxu0 %v1822
  %v1918 = vpop.f32.mrf.mxu0
  %v1919 = vadd.f32 %v1805, %v1918
  %v1920 = vpop.f32.mrf.mxu0
  %1921 = vmatprep.mubr.f32.mxu0 0.0
  %1922 = vmatmul.mubr.f32.gmra.mxu0 %v1825
  %v1923 = vpop.f32.mrf.mxu0
  %v1924 = vadd.f32 %v1805, %v1923
  %v1925 = vpop.f32.mrf.mxu0
  %1926 = vdwg.mxu0
  %v1927 = vadd.f32 %v44, %v1894
  %v1928 = vadd.f32 %v45, %v1899
  %v1929 = vadd.f32 %v46, %v1904
  %v1930 = vadd.f32 %v47, %v1909
  %v1931 = vadd.f32 %v48, %v1914
  %v1932 = vadd.f32 %v49, %v1919
  %v1933 = vadd.f32 %v50, %v1924
  %v1934 = vsel %vm74, %v1927, 0.0
  %1935 = vadd.xlane.f32.xlu0 %v1934
  %v1936 = vpop.xlane.xlu0 %1935
  %v1937 = vsel %vm74, %v1928, 0.0
  %1938 = vadd.xlane.f32.xlu0 %v1937
  %v1939 = vpop.xlane.xlu0 %1938
  %v1940 = vsel %vm74, %v1929, 0.0
  %1941 = vadd.xlane.f32.xlu0 %v1940
  %v1942 = vpop.xlane.xlu0 %1941
  %v1943 = vsel %vm74, %v1930, 0.0
  %1944 = vadd.xlane.f32.xlu0 %v1943
  %v1945 = vpop.xlane.xlu0 %1944
  %v1946 = vsel %vm74, %v1931, 0.0
  %1947 = vadd.xlane.f32.xlu0 %v1946
  %v1948 = vpop.xlane.xlu0 %1947
  %v1949 = vsel %vm74, %v1932, 0.0
  %1950 = vadd.xlane.f32.xlu0 %v1949
  %v1951 = vpop.xlane.xlu0 %1950
  %v1952 = vsel %vm74, %v1933, 0.0
  %1953 = vadd.xlane.f32.xlu0 %v1952
  %v1954 = vpop.xlane.xlu0 %1953
  %v1955 = vrcp.pop 32.0
  %v1956 = vmul.f32 %v1936, %v1955
  %v1957 = vmul.f32 %v1939, %v1955
  %v1958 = vmul.f32 %v1942, %v1955
  %v1959 = vmul.f32 %v1945, %v1955
  %v1960 = vmul.f32 %v1948, %v1955
  %v1961 = vmul.f32 %v1951, %v1955
  %v1962 = vmul.f32 %v1954, %v1955
  %v1963 = vsub.f32 %v1927, %v1956
  %v1964 = vsub.f32 %v1928, %v1957
  %v1965 = vsub.f32 %v1929, %v1958
  %v1966 = vsub.f32 %v1930, %v1959
  %v1967 = vsub.f32 %v1931, %v1960
  %v1968 = vsub.f32 %v1932, %v1961
  %v1969 = vsub.f32 %v1933, %v1962
  %v1970 = vmul.f32 %v1963, %v1963
  %v1971 = vmul.f32 %v1964, %v1964
  %v1972 = vmul.f32 %v1965, %v1965
  %v1973 = vmul.f32 %v1966, %v1966
  %v1974 = vmul.f32 %v1967, %v1967
  %v1975 = vmul.f32 %v1968, %v1968
  %v1976 = vmul.f32 %v1969, %v1969
  %v1977 = vsel %vm74, %v1970, 0.0
  %1978 = vadd.xlane.f32.xlu0 %v1977
  %v1979 = vpop.xlane.xlu0 %1978
  %v1980 = vsel %vm74, %v1971, 0.0
  %1981 = vadd.xlane.f32.xlu0 %v1980
  %v1982 = vpop.xlane.xlu0 %1981
  %v1983 = vsel %vm74, %v1972, 0.0
  %1984 = vadd.xlane.f32.xlu0 %v1983
  %v1985 = vpop.xlane.xlu0 %1984
  %v1986 = vsel %vm74, %v1973, 0.0
  %1987 = vadd.xlane.f32.xlu0 %v1986
  %v1988 = vpop.xlane.xlu0 %1987
  %v1989 = vsel %vm74, %v1974, 0.0
  %1990 = vadd.xlane.f32.xlu0 %v1989
  %v1991 = vpop.xlane.xlu0 %1990
  %v1992 = vsel %vm74, %v1975, 0.0
  %1993 = vadd.xlane.f32.xlu0 %v1992
  %v1994 = vpop.xlane.xlu0 %1993
  %v1995 = vsel %vm74, %v1976, 0.0
  %1996 = vadd.xlane.f32.xlu0 %v1995
  %v1997 = vpop.xlane.xlu0 %1996
  %v1998 = vmul.f32 %v1979, %v1955
  %v1999 = vmul.f32 %v1982, %v1955
  %v2000 = vmul.f32 %v1985, %v1955
  %v2001 = vmul.f32 %v1988, %v1955
  %v2002 = vmul.f32 %v1991, %v1955
  %v2003 = vmul.f32 %v1994, %v1955
  %v2004 = vmul.f32 %v1997, %v1955
  %v2005 = vadd.f32 %v1998, 1e-05
  %v2006 = vadd.f32 %v1999, 1e-05
  %v2007 = vadd.f32 %v2000, 1e-05
  %v2008 = vadd.f32 %v2001, 1e-05
  %v2009 = vadd.f32 %v2002, 1e-05
  %v2010 = vadd.f32 %v2003, 1e-05
  %v2011 = vadd.f32 %v2004, 1e-05
  %v2012 = vrsqrt.pop %v2005
  %v2013 = vrsqrt.pop %v2006
  %v2014 = vrsqrt.pop %v2007
  %v2015 = vrsqrt.pop %v2008
  %v2016 = vrsqrt.pop %v2009
  %v2017 = vrsqrt.pop %v2010
  %v2018 = vrsqrt.pop %v2011
  %v2019 = vmul.f32 %v1963, %v2012
  %v2020 = vmul.f32 %v1964, %v2013
  %v2021 = vmul.f32 %v1965, %v2014
  %v2022 = vmul.f32 %v1966, %v2015
  %v2023 = vmul.f32 %v1967, %v2016
  %v2024 = vmul.f32 %v1968, %v2017
  %v2025 = vmul.f32 %v1969, %v2018
  %v2026 = vlaneseq
  %v2027 = vshrl.u32 %v2026, 7
  %v2028 = vsub.s32 0, %v2027
  %v2029 = vrot.slane %v60, %v2028
  %v2030 = vmul.f32 %v2019, %v2029
  %v2031 = vmul.f32 %v2020, %v2029
  %v2032 = vmul.f32 %v2021, %v2029
  %v2033 = vmul.f32 %v2022, %v2029
  %v2034 = vmul.f32 %v2023, %v2029
  %v2035 = vmul.f32 %v2024, %v2029
  %v2036 = vmul.f32 %v2025, %v2029
  %v2037 = vlaneseq
  %v2038 = vshrl.u32 %v2037, 7
  %v2039 = vsub.s32 0, %v2038
  %v2040 = vrot.slane %v61, %v2039
  %v2041 = vadd.f32 %v2030, %v2040
  %v2042 = vadd.f32 %v2031, %v2040
  %v2043 = vadd.f32 %v2032, %v2040
  %v2044 = vadd.f32 %v2033, %v2040
  %v2045 = vadd.f32 %v2034, %v2040
  %v2046 = vadd.f32 %v2035, %v2040
  %v2047 = vadd.f32 %v2036, %v2040
  %v2048 = vld [vmem:[%s5] sm:$0xff]
  %v2049 = vld [vmem:[%s5 + $0x8] sm:$0xff]
  %v2050 = vld [vmem:[%s5 + $0x10] sm:$0xff]
  %v2051 = vld [vmem:[%s5 + $0x18] sm:$0xff]
  %v2052 = vlaneseq
  %v2053 = vshrl.u32 %v2052, 7
  %v2054 = vsub.s32 0, %v2053
  %v2055 = vrot.slane %v62, %v2054
  %v2057 = vsel %vm74, %v2041, 0
  %v2060 = vsel %vm74, %v2042, 0
  %v2063 = vsel %vm74, %v2043, 0
  %v2066 = vsel %vm74, %v2044, 0
  %v2069 = vsel %vm74, %v2045, 0
  %v2072 = vsel %vm74, %v2046, 0
  %v2075 = vsel %vm74, %v2047, 0
  %2077 = vmatprep.subr.mxu0 0.0
  %2078 = vmatpush1.msra.mxu0 0.0
  %2079 = vmatprep.subr.mxu0 0.0
  %2080 = vmatpush1.msra.mxu0 0.0
  %2081 = vmatprep.subr.mxu0 0.0
  %2082 = vmatpush1.msra.mxu0 0.0
  %2083 = vmatprep.subr.mxu0 0.0
  %2084 = vmatpush1.msra.mxu0 0.0
  %2085 = vmatprep.subr.mxu0 0.0
  %2086 = vmatpush1.msra.mxu0 0.0
  %2087 = vmatprep.subr.mxu0 0.0
  %2088 = vmatpush1.msra.mxu0 0.0
  %2089 = vmatprep.subr.mxu0 0.0
  %2090 = vmatpush1.msra.mxu0 0.0
  %2091 = vmatprep.subr.mxu0 0.0
  %2092 = vmatpush1.msra.mxu0 0.0
  %2093 = vmatprep.subr.mxu0 0.0
  %2094 = vmatpush1.msra.mxu0 0.0
  %2095 = vmatprep.subr.mxu0 0.0
  %2096 = vmatpush1.msra.mxu0 0.0
  %2097 = vmatprep.subr.mxu0 0.0
  %2098 = vmatpush1.msra.mxu0 0.0
  %2099 = vmatprep.subr.mxu0 0.0
  %2100 = vmatpush1.msra.mxu0 0.0
  %2101 = vmatprep.subr.mxu0 0.0
  %2102 = vmatpush1.msra.mxu0 %v2051
  %2103 = vmatprep.subr.mxu0 0.0
  %2104 = vmatpush1.msra.mxu0 %v2050
  %2105 = vmatprep.subr.mxu0 0.0
  %2106 = vmatpush1.msra.mxu0 %v2049
  %2107 = vmatprep.subr.mxu0 0.0
  %2108 = vmatpush1.msra.mxu0 %v2048
  %2109 = vmatprep.subr.mxu0 0.0
  %2110 = vmatpush2.msra.mxu0 0.0
  %2111 = vmatprep.subr.mxu0 0.0
  %2112 = vmatpush2.msra.mxu0 0.0
  %2113 = vmatprep.subr.mxu0 0.0
  %2114 = vmatpush2.msra.mxu0 0.0
  %2115 = vmatprep.subr.mxu0 0.0
  %2116 = vmatpush2.msra.mxu0 0.0
  %2117 = vmatprep.subr.mxu0 0.0
  %2118 = vmatpush2.msra.mxu0 0.0
  %2119 = vmatprep.subr.mxu0 0.0
  %2120 = vmatpush2.msra.mxu0 0.0
  %2121 = vmatprep.subr.mxu0 0.0
  %2122 = vmatpush2.msra.mxu0 0.0
  %2123 = vmatprep.subr.mxu0 0.0
  %2124 = vmatpush2.msra.mxu0 0.0
  %2125 = vmatprep.subr.mxu0 0.0
  %2126 = vmatpush2.msra.mxu0 0.0
  %2127 = vmatprep.subr.mxu0 0.0
  %2128 = vmatpush2.msra.mxu0 0.0
  %2129 = vmatprep.subr.mxu0 0.0
  %2130 = vmatpush2.msra.mxu0 0.0
  %2131 = vmatprep.subr.mxu0 0.0
  %2132 = vmatpush2.msra.mxu0 0.0
  %2133 = vmatprep.subr.mxu0 0.0
  %2134 = vmatpush2.msra.mxu0 0.0
  %2135 = vmatprep.subr.mxu0 0.0
  %2136 = vmatpush2.msra.mxu0 0.0
  %2137 = vmatprep.subr.mxu0 0.0
  %2138 = vmatpush2.msra.mxu0 0.0
  %2139 = vmatprep.subr.mxu0 0.0
  %2140 = vmatpush2.msra.mxu0 0.0
  %2141 = vmatprep.mubr.f32.mxu0 0.0
  %2142 = vmatmul.mubr.f32.gmra.mxu0 %v2057
  %v2143 = vpop.f32.mrf.mxu0
  %v2144 = vadd.f32 %v2055, %v2143
  %v2145 = vpop.f32.mrf.mxu0
  %2146 = vmatprep.mubr.f32.mxu0 0.0
  %2147 = vmatmul.mubr.f32.gmra.mxu0 %v2060
  %v2148 = vpop.f32.mrf.mxu0
  %v2149 = vadd.f32 %v2055, %v2148
  %v2150 = vpop.f32.mrf.mxu0
  %2151 = vmatprep.mubr.f32.mxu0 0.0
  %2152 = vmatmul.mubr.f32.gmra.mxu0 %v2063
  %v2153 = vpop.f32.mrf.mxu0
  %v2154 = vadd.f32 %v2055, %v2153
  %v2155 = vpop.f32.mrf.mxu0
  %2156 = vmatprep.mubr.f32.mxu0 0.0
  %2157 = vmatmul.mubr.f32.gmra.mxu0 %v2066
  %v2158 = vpop.f32.mrf.mxu0
  %v2159 = vadd.f32 %v2055, %v2158
  %v2160 = vpop.f32.mrf.mxu0
  %2161 = vmatprep.mubr.f32.mxu0 0.0
  %2162 = vmatmul.mubr.f32.gmra.mxu0 %v2069
  %v2163 = vpop.f32.mrf.mxu0
  %v2164 = vadd.f32 %v2055, %v2163
  %v2165 = vpop.f32.mrf.mxu0
  %2166 = vmatprep.mubr.f32.mxu0 0.0
  %2167 = vmatmul.mubr.f32.gmra.mxu0 %v2072
  %v2168 = vpop.f32.mrf.mxu0
  %v2169 = vadd.f32 %v2055, %v2168
  %v2170 = vpop.f32.mrf.mxu0
  %2171 = vmatprep.mubr.f32.mxu0 0.0
  %2172 = vmatmul.mubr.f32.gmra.mxu0 %v2075
  %v2173 = vpop.f32.mrf.mxu0
  %v2174 = vadd.f32 %v2055, %v2173
  %v2175 = vpop.f32.mrf.mxu0
  %2176 = vdwg.mxu0
  %v2177 = vmax.f32 %v2144, 0.0
  %v2178 = vmax.f32 %v2149, 0.0
  %v2179 = vmax.f32 %v2154, 0.0
  %v2180 = vmax.f32 %v2159, 0.0
  %v2181 = vmax.f32 %v2164, 0.0
  %v2182 = vmax.f32 %v2169, 0.0
  %v2183 = vmax.f32 %v2174, 0.0
  %v2184 = vld [vmem:[%s6] sm:$0xff]
  %v2185 = vld [vmem:[%s6 + $0x8] sm:$0xff]
  %v2186 = vld [vmem:[%s6 + $0x10] sm:$0xff]
  %v2187 = vld [vmem:[%s6 + $0x18] sm:$0xff]
  %v2188 = vld [vmem:[%s6 + $0x20] sm:$0xff]
  %v2189 = vld [vmem:[%s6 + $0x28] sm:$0xff]
  %v2190 = vld [vmem:[%s6 + $0x30] sm:$0xff]
  %v2191 = vld [vmem:[%s6 + $0x38] sm:$0xff]
  %v2192 = vlaneseq
  %v2193 = vshrl.u32 %v2192, 7
  %v2194 = vsub.s32 0, %v2193
  %v2195 = vrot.slane %v63, %v2194
  %vm2196 = vcmask 523264
  %v2198 = vsel %vm2196, %v2177, 0
  %v2201 = vsel %vm2196, %v2178, 0
  %v2204 = vsel %vm2196, %v2179, 0
  %v2207 = vsel %vm2196, %v2180, 0
  %v2210 = vsel %vm2196, %v2181, 0
  %v2213 = vsel %vm2196, %v2182, 0
  %v2216 = vsel %vm2196, %v2183, 0
  %2218 = vmatprep.subr.mxu0 0.0
  %2219 = vmatpush1.msra.mxu0 0.0
  %2220 = vmatprep.subr.mxu0 0.0
  %2221 = vmatpush1.msra.mxu0 0.0
  %2222 = vmatprep.subr.mxu0 0.0
  %2223 = vmatpush1.msra.mxu0 0.0
  %2224 = vmatprep.subr.mxu0 0.0
  %2225 = vmatpush1.msra.mxu0 0.0
  %2226 = vmatprep.subr.mxu0 0.0
  %2227 = vmatpush1.msra.mxu0 0.0
  %2228 = vmatprep.subr.mxu0 0.0
  %2229 = vmatpush1.msra.mxu0 0.0
  %2230 = vmatprep.subr.mxu0 0.0
  %2231 = vmatpush1.msra.mxu0 0.0
  %2232 = vmatprep.subr.mxu0 0.0
  %2233 = vmatpush1.msra.mxu0 0.0
  %2234 = vmatprep.subr.mxu0 0.0
  %2235 = vmatpush1.msra.mxu0 %v2191
  %2236 = vmatprep.subr.mxu0 0.0
  %2237 = vmatpush1.msra.mxu0 %v2190
  %2238 = vmatprep.subr.mxu0 0.0
  %2239 = vmatpush1.msra.mxu0 %v2189
  %2240 = vmatprep.subr.mxu0 0.0
  %2241 = vmatpush1.msra.mxu0 %v2188
  %2242 = vmatprep.subr.mxu0 0.0
  %2243 = vmatpush1.msra.mxu0 %v2187
  %2244 = vmatprep.subr.mxu0 0.0
  %2245 = vmatpush1.msra.mxu0 %v2186
  %2246 = vmatprep.subr.mxu0 0.0
  %2247 = vmatpush1.msra.mxu0 %v2185
  %2248 = vmatprep.subr.mxu0 0.0
  %2249 = vmatpush1.msra.mxu0 %v2184
  %2250 = vmatprep.subr.mxu0 0.0
  %2251 = vmatpush2.msra.mxu0 0.0
  %2252 = vmatprep.subr.mxu0 0.0
  %2253 = vmatpush2.msra.mxu0 0.0
  %2254 = vmatprep.subr.mxu0 0.0
  %2255 = vmatpush2.msra.mxu0 0.0
  %2256 = vmatprep.subr.mxu0 0.0
  %2257 = vmatpush2.msra.mxu0 0.0
  %2258 = vmatprep.subr.mxu0 0.0
  %2259 = vmatpush2.msra.mxu0 0.0
  %2260 = vmatprep.subr.mxu0 0.0
  %2261 = vmatpush2.msra.mxu0 0.0
  %2262 = vmatprep.subr.mxu0 0.0
  %2263 = vmatpush2.msra.mxu0 0.0
  %2264 = vmatprep.subr.mxu0 0.0
  %2265 = vmatpush2.msra.mxu0 0.0
  %2266 = vmatprep.subr.mxu0 0.0
  %2267 = vmatpush2.msra.mxu0 0.0
  %2268 = vmatprep.subr.mxu0 0.0
  %2269 = vmatpush2.msra.mxu0 0.0
  %2270 = vmatprep.subr.mxu0 0.0
  %2271 = vmatpush2.msra.mxu0 0.0
  %2272 = vmatprep.subr.mxu0 0.0
  %2273 = vmatpush2.msra.mxu0 0.0
  %2274 = vmatprep.subr.mxu0 0.0
  %2275 = vmatpush2.msra.mxu0 0.0
  %2276 = vmatprep.subr.mxu0 0.0
  %2277 = vmatpush2.msra.mxu0 0.0
  %2278 = vmatprep.subr.mxu0 0.0
  %2279 = vmatpush2.msra.mxu0 0.0
  %2280 = vmatprep.subr.mxu0 0.0
  %2281 = vmatpush2.msra.mxu0 0.0
  %2282 = vmatprep.mubr.f32.mxu0 0.0
  %2283 = vmatmul.mubr.f32.gmra.mxu0 %v2198
  %v2284 = vpop.f32.mrf.mxu0
  %v2285 = vadd.f32 %v2195, %v2284
  %v2286 = vpop.f32.mrf.mxu0
  %2287 = vmatprep.mubr.f32.mxu0 0.0
  %2288 = vmatmul.mubr.f32.gmra.mxu0 %v2201
  %v2289 = vpop.f32.mrf.mxu0
  %v2290 = vadd.f32 %v2195, %v2289
  %v2291 = vpop.f32.mrf.mxu0
  %2292 = vmatprep.mubr.f32.mxu0 0.0
  %2293 = vmatmul.mubr.f32.gmra.mxu0 %v2204
  %v2294 = vpop.f32.mrf.mxu0
  %v2295 = vadd.f32 %v2195, %v2294
  %v2296 = vpop.f32.mrf.mxu0
  %2297 = vmatprep.mubr.f32.mxu0 0.0
  %2298 = vmatmul.mubr.f32.gmra.mxu0 %v2207
  %v2299 = vpop.f32.mrf.mxu0
  %v2300 = vadd.f32 %v2195, %v2299
  %v2301 = vpop.f32.mrf.mxu0
  %2302 = vmatprep.mubr.f32.mxu0 0.0
  %2303 = vmatmul.mubr.f32.gmra.mxu0 %v2210
  %v2304 = vpop.f32.mrf.mxu0
  %v2305 = vadd.f32 %v2195, %v2304
  %v2306 = vpop.f32.mrf.mxu0
  %2307 = vmatprep.mubr.f32.mxu0 0.0
  %2308 = vmatmul.mubr.f32.gmra.mxu0 %v2213
  %v2309 = vpop.f32.mrf.mxu0
  %v2310 = vadd.f32 %v2195, %v2309
  %v2311 = vpop.f32.mrf.mxu0
  %2312 = vmatprep.mubr.f32.mxu0 0.0
  %2313 = vmatmul.mubr.f32.gmra.mxu0 %v2216
  %v2314 = vpop.f32.mrf.mxu0
  %v2315 = vadd.f32 %v2195, %v2314
  %v2316 = vpop.f32.mrf.mxu0
  %2317 = vdwg.mxu0
  %v2318 = vadd.f32 %v2041, %v2285
  %v2319 = vadd.f32 %v2042, %v2290
  %v2320 = vadd.f32 %v2043, %v2295
  %v2321 = vadd.f32 %v2044, %v2300
  %v2322 = vadd.f32 %v2045, %v2305
  %v2323 = vadd.f32 %v2046, %v2310
  %v2324 = vadd.f32 %v2047, %v2315
  %v2325 = vsel %vm74, %v2318, 0.0
  %2326 = vadd.xlane.f32.xlu0 %v2325
  %v2327 = vpop.xlane.xlu0 %2326
  %v2328 = vsel %vm74, %v2319, 0.0
  %2329 = vadd.xlane.f32.xlu0 %v2328
  %v2330 = vpop.xlane.xlu0 %2329
  %v2331 = vsel %vm74, %v2320, 0.0
  %2332 = vadd.xlane.f32.xlu0 %v2331
  %v2333 = vpop.xlane.xlu0 %2332
  %v2334 = vsel %vm74, %v2321, 0.0
  %2335 = vadd.xlane.f32.xlu0 %v2334
  %v2336 = vpop.xlane.xlu0 %2335
  %v2337 = vsel %vm74, %v2322, 0.0
  %2338 = vadd.xlane.f32.xlu0 %v2337
  %v2339 = vpop.xlane.xlu0 %2338
  %v2340 = vsel %vm74, %v2323, 0.0
  %2341 = vadd.xlane.f32.xlu0 %v2340
  %v2342 = vpop.xlane.xlu0 %2341
  %v2343 = vsel %vm74, %v2324, 0.0
  %2344 = vadd.xlane.f32.xlu0 %v2343
  %v2345 = vpop.xlane.xlu0 %2344
  %v2346 = vmul.f32 %v2327, %v1955
  %v2347 = vmul.f32 %v2330, %v1955
  %v2348 = vmul.f32 %v2333, %v1955
  %v2349 = vmul.f32 %v2336, %v1955
  %v2350 = vmul.f32 %v2339, %v1955
  %v2351 = vmul.f32 %v2342, %v1955
  %v2352 = vmul.f32 %v2345, %v1955
  %v2353 = vsub.f32 %v2318, %v2346
  %v2354 = vsub.f32 %v2319, %v2347
  %v2355 = vsub.f32 %v2320, %v2348
  %v2356 = vsub.f32 %v2321, %v2349
  %v2357 = vsub.f32 %v2322, %v2350
  %v2358 = vsub.f32 %v2323, %v2351
  %v2359 = vsub.f32 %v2324, %v2352
  %v2360 = vmul.f32 %v2353, %v2353
  %v2361 = vmul.f32 %v2354, %v2354
  %v2362 = vmul.f32 %v2355, %v2355
  %v2363 = vmul.f32 %v2356, %v2356
  %v2364 = vmul.f32 %v2357, %v2357
  %v2365 = vmul.f32 %v2358, %v2358
  %v2366 = vmul.f32 %v2359, %v2359
  %v2367 = vsel %vm74, %v2360, 0.0
  %2368 = vadd.xlane.f32.xlu0 %v2367
  %v2369 = vpop.xlane.xlu0 %2368
  %v2370 = vsel %vm74, %v2361, 0.0
  %2371 = vadd.xlane.f32.xlu0 %v2370
  %v2372 = vpop.xlane.xlu0 %2371
  %v2373 = vsel %vm74, %v2362, 0.0
  %2374 = vadd.xlane.f32.xlu0 %v2373
  %v2375 = vpop.xlane.xlu0 %2374
  %v2376 = vsel %vm74, %v2363, 0.0
  %2377 = vadd.xlane.f32.xlu0 %v2376
  %v2378 = vpop.xlane.xlu0 %2377
  %v2379 = vsel %vm74, %v2364, 0.0
  %2380 = vadd.xlane.f32.xlu0 %v2379
  %v2381 = vpop.xlane.xlu0 %2380
  %v2382 = vsel %vm74, %v2365, 0.0
  %2383 = vadd.xlane.f32.xlu0 %v2382
  %v2384 = vpop.xlane.xlu0 %2383
  %v2385 = vsel %vm74, %v2366, 0.0
  %2386 = vadd.xlane.f32.xlu0 %v2385
  %v2387 = vpop.xlane.xlu0 %2386
  %v2388 = vmul.f32 %v2369, %v1955
  %v2389 = vmul.f32 %v2372, %v1955
  %v2390 = vmul.f32 %v2375, %v1955
  %v2391 = vmul.f32 %v2378, %v1955
  %v2392 = vmul.f32 %v2381, %v1955
  %v2393 = vmul.f32 %v2384, %v1955
  %v2394 = vmul.f32 %v2387, %v1955
  %v2395 = vadd.f32 %v2388, 1e-05
  %v2396 = vadd.f32 %v2389, 1e-05
  %v2397 = vadd.f32 %v2390, 1e-05
  %v2398 = vadd.f32 %v2391, 1e-05
  %v2399 = vadd.f32 %v2392, 1e-05
  %v2400 = vadd.f32 %v2393, 1e-05
  %v2401 = vadd.f32 %v2394, 1e-05
  %v2402 = vrsqrt.pop %v2395
  %v2403 = vrsqrt.pop %v2396
  %v2404 = vrsqrt.pop %v2397
  %v2405 = vrsqrt.pop %v2398
  %v2406 = vrsqrt.pop %v2399
  %v2407 = vrsqrt.pop %v2400
  %v2408 = vrsqrt.pop %v2401
  %v2409 = vmul.f32 %v2353, %v2402
  %v2410 = vmul.f32 %v2354, %v2403
  %v2411 = vmul.f32 %v2355, %v2404
  %v2412 = vmul.f32 %v2356, %v2405
  %v2413 = vmul.f32 %v2357, %v2406
  %v2414 = vmul.f32 %v2358, %v2407
  %v2415 = vmul.f32 %v2359, %v2408
  %v2416 = vlaneseq
  %v2417 = vshrl.u32 %v2416, 7
  %v2418 = vsub.s32 0, %v2417
  %v2419 = vrot.slane %v64, %v2418
  %v2420 = vmul.f32 %v2409, %v2419
  %v2421 = vmul.f32 %v2410, %v2419
  %v2422 = vmul.f32 %v2411, %v2419
  %v2423 = vmul.f32 %v2412, %v2419
  %v2424 = vmul.f32 %v2413, %v2419
  %v2425 = vmul.f32 %v2414, %v2419
  %v2426 = vmul.f32 %v2415, %v2419
  %v2427 = vlaneseq
  %v2428 = vshrl.u32 %v2427, 7
  %v2429 = vsub.s32 0, %v2428
  %v2430 = vrot.slane %v65, %v2429
  %v2431 = vadd.f32 %v2420, %v2430
  %v2432 = vadd.f32 %v2421, %v2430
  %v2433 = vadd.f32 %v2422, %v2430
  %v2434 = vadd.f32 %v2423, %v2430
  %v2435 = vadd.f32 %v2424, %v2430
  %v2436 = vadd.f32 %v2425, %v2430
  %v2437 = vadd.f32 %v2426, %v2430
  %v2438 = vld [vmem:[%s2 + $0x8] sm:$0x1]
  %v2439 = vld [vmem:[%s2 + $0x9] sm:$0x1]
  %v2440 = vld [vmem:[%s2 + $0xa] sm:$0x1]
  %v2441 = vld [vmem:[%s2 + $0xb] sm:$0x1]
  %v2442 = vld [vmem:[%s2 + $0xc] sm:$0x1]
  %v2443 = vld [vmem:[%s2 + $0xd] sm:$0x1]
  %v2444 = vld [vmem:[%s2 + $0xe] sm:$0x1]
  %v2445 = vld [vmem:[%s2 + $0xf] sm:$0x1]
  %v2446 = vld [vmem:[%s7] sm:$0xff]
  %v2447 = vld [vmem:[%s7 + $0x8] sm:$0xff]
  %v2448 = vld [vmem:[%s7 + $0x10] sm:$0xff]
  %v2449 = vld [vmem:[%s7 + $0x18] sm:$0xff]
  %v2450 = vlaneseq
  %v2451 = vshrl.u32 %v2450, 7
  %v2452 = vsub.s32 0, %v2451
  %v2453 = vrot.slane %v2438, %v2452
  %v2455 = vsel %vm74, %v2431, 0
  %v2458 = vsel %vm74, %v2432, 0
  %v2461 = vsel %vm74, %v2433, 0
  %v2464 = vsel %vm74, %v2434, 0
  %v2467 = vsel %vm74, %v2435, 0
  %v2470 = vsel %vm74, %v2436, 0
  %v2473 = vsel %vm74, %v2437, 0
  %2475 = vmatprep.subr.mxu0 0.0
  %2476 = vmatpush1.msra.mxu0 0.0
  %2477 = vmatprep.subr.mxu0 0.0
  %2478 = vmatpush1.msra.mxu0 0.0
  %2479 = vmatprep.subr.mxu0 0.0
  %2480 = vmatpush1.msra.mxu0 0.0
  %2481 = vmatprep.subr.mxu0 0.0
  %2482 = vmatpush1.msra.mxu0 0.0
  %2483 = vmatprep.subr.mxu0 0.0
  %2484 = vmatpush1.msra.mxu0 0.0
  %2485 = vmatprep.subr.mxu0 0.0
  %2486 = vmatpush1.msra.mxu0 0.0
  %2487 = vmatprep.subr.mxu0 0.0
  %2488 = vmatpush1.msra.mxu0 0.0
  %2489 = vmatprep.subr.mxu0 0.0
  %2490 = vmatpush1.msra.mxu0 0.0
  %2491 = vmatprep.subr.mxu0 0.0
  %2492 = vmatpush1.msra.mxu0 0.0
  %2493 = vmatprep.subr.mxu0 0.0
  %2494 = vmatpush1.msra.mxu0 0.0
  %2495 = vmatprep.subr.mxu0 0.0
  %2496 = vmatpush1.msra.mxu0 0.0
  %2497 = vmatprep.subr.mxu0 0.0
  %2498 = vmatpush1.msra.mxu0 0.0
  %2499 = vmatprep.subr.mxu0 0.0
  %2500 = vmatpush1.msra.mxu0 %v2449
  %2501 = vmatprep.subr.mxu0 0.0
  %2502 = vmatpush1.msra.mxu0 %v2448
  %2503 = vmatprep.subr.mxu0 0.0
  %2504 = vmatpush1.msra.mxu0 %v2447
  %2505 = vmatprep.subr.mxu0 0.0
  %2506 = vmatpush1.msra.mxu0 %v2446
  %2507 = vmatprep.subr.mxu0 0.0
  %2508 = vmatpush2.msra.mxu0 0.0
  %2509 = vmatprep.subr.mxu0 0.0
  %2510 = vmatpush2.msra.mxu0 0.0
  %2511 = vmatprep.subr.mxu0 0.0
  %2512 = vmatpush2.msra.mxu0 0.0
  %2513 = vmatprep.subr.mxu0 0.0
  %2514 = vmatpush2.msra.mxu0 0.0
  %2515 = vmatprep.subr.mxu0 0.0
  %2516 = vmatpush2.msra.mxu0 0.0
  %2517 = vmatprep.subr.mxu0 0.0
  %2518 = vmatpush2.msra.mxu0 0.0
  %2519 = vmatprep.subr.mxu0 0.0
  %2520 = vmatpush2.msra.mxu0 0.0
  %2521 = vmatprep.subr.mxu0 0.0
  %2522 = vmatpush2.msra.mxu0 0.0
  %2523 = vmatprep.subr.mxu0 0.0
  %2524 = vmatpush2.msra.mxu0 0.0
  %2525 = vmatprep.subr.mxu0 0.0
  %2526 = vmatpush2.msra.mxu0 0.0
  %2527 = vmatprep.subr.mxu0 0.0
  %2528 = vmatpush2.msra.mxu0 0.0
  %2529 = vmatprep.subr.mxu0 0.0
  %2530 = vmatpush2.msra.mxu0 0.0
  %2531 = vmatprep.subr.mxu0 0.0
  %2532 = vmatpush2.msra.mxu0 0.0
  %2533 = vmatprep.subr.mxu0 0.0
  %2534 = vmatpush2.msra.mxu0 0.0
  %2535 = vmatprep.subr.mxu0 0.0
  %2536 = vmatpush2.msra.mxu0 0.0
  %2537 = vmatprep.subr.mxu0 0.0
  %2538 = vmatpush2.msra.mxu0 0.0
  %2539 = vmatprep.mubr.f32.mxu0 0.0
  %2540 = vmatmul.mubr.f32.gmra.mxu0 %v2455
  %v2541 = vpop.f32.mrf.mxu0
  %v2542 = vadd.f32 %v2453, %v2541
  %v2543 = vpop.f32.mrf.mxu0
  %2544 = vmatprep.mubr.f32.mxu0 0.0
  %2545 = vmatmul.mubr.f32.gmra.mxu0 %v2458
  %v2546 = vpop.f32.mrf.mxu0
  %v2547 = vadd.f32 %v2453, %v2546
  %v2548 = vpop.f32.mrf.mxu0
  %2549 = vmatprep.mubr.f32.mxu0 0.0
  %2550 = vmatmul.mubr.f32.gmra.mxu0 %v2461
  %v2551 = vpop.f32.mrf.mxu0
  %v2552 = vadd.f32 %v2453, %v2551
  %v2553 = vpop.f32.mrf.mxu0
  %2554 = vmatprep.mubr.f32.mxu0 0.0
  %2555 = vmatmul.mubr.f32.gmra.mxu0 %v2464
  %v2556 = vpop.f32.mrf.mxu0
  %v2557 = vadd.f32 %v2453, %v2556
  %v2558 = vpop.f32.mrf.mxu0
  %2559 = vmatprep.mubr.f32.mxu0 0.0
  %2560 = vmatmul.mubr.f32.gmra.mxu0 %v2467
  %v2561 = vpop.f32.mrf.mxu0
  %v2562 = vadd.f32 %v2453, %v2561
  %v2563 = vpop.f32.mrf.mxu0
  %2564 = vmatprep.mubr.f32.mxu0 0.0
  %2565 = vmatmul.mubr.f32.gmra.mxu0 %v2470
  %v2566 = vpop.f32.mrf.mxu0
  %v2567 = vadd.f32 %v2453, %v2566
  %v2568 = vpop.f32.mrf.mxu0
  %2569 = vmatprep.mubr.f32.mxu0 0.0
  %2570 = vmatmul.mubr.f32.gmra.mxu0 %v2473
  %v2571 = vpop.f32.mrf.mxu0
  %v2572 = vadd.f32 %v2453, %v2571
  %v2573 = vpop.f32.mrf.mxu0
  %2574 = vdwg.mxu0
  %2582 = vrot.lane.b32.xlu0 %v2542, 96
  %v2583 = vpop.permute.xlu0 %2582
  %2584 = vrot.lane.b32.xlu0 %v2547, 96
  %v2585 = vpop.permute.xlu0 %2584
  %2586 = vrot.lane.b32.xlu0 %v2552, 96
  %v2587 = vpop.permute.xlu0 %2586
  %2588 = vrot.lane.b32.xlu0 %v2557, 96
  %v2589 = vpop.permute.xlu0 %2588
  %2590 = vrot.lane.b32.xlu0 %v2562, 96
  %v2591 = vpop.permute.xlu0 %2590
  %2592 = vrot.lane.b32.xlu0 %v2567, 96
  %v2593 = vpop.permute.xlu0 %2592
  %2594 = vrot.lane.b32.xlu0 %v2572, 96
  %v2595 = vpop.permute.xlu0 %2594
  %v2596 = vsel %vm217, %v2542, 0
  %v2598 = vsel %vm217, %v2547, 0
  %v2600 = vsel %vm217, %v2552, 0
  %v2602 = vsel %vm217, %v2557, 0
  %v2604 = vsel %vm217, %v2562, 0
  %v2606 = vsel %vm217, %v2567, 0
  %v2608 = vsel %vm217, %v2572, 0
  %v2610 = vsel %vm217, %v2583, 0
  %v2612 = vsel %vm217, %v2585, 0
  %v2614 = vsel %vm217, %v2587, 0
  %v2616 = vsel %vm217, %v2589, 0
  %v2618 = vsel %vm217, %v2591, 0
  %v2620 = vsel %vm217, %v2593, 0
  %v2622 = vsel %vm217, %v2595, 0
  %2624 = vmatprep.subr.mxu0 0.0
  %2625 = vmatpush1.xpose.msra.mxu0 0.0
  %2626 = vmatprep.subr.mxu0 0.0
  %2627 = vmatpush1.xpose.msra.mxu0 0.0
  %2628 = vmatprep.subr.mxu0 0.0
  %2629 = vmatpush1.xpose.msra.mxu0 0.0
  %2630 = vmatprep.subr.mxu0 0.0
  %2631 = vmatpush1.xpose.msra.mxu0 0.0
  %2632 = vmatprep.subr.mxu0 0.0
  %2633 = vmatpush1.xpose.msra.mxu0 0.0
  %2634 = vmatprep.subr.mxu0 0.0
  %2635 = vmatpush1.xpose.msra.mxu0 0.0
  %2636 = vmatprep.subr.mxu0 0.0
  %2637 = vmatpush1.xpose.msra.mxu0 0.0
  %2638 = vmatprep.subr.mxu0 0.0
  %2639 = vmatpush1.xpose.msra.mxu0 0.0
  %2640 = vmatprep.subr.mxu0 0.0
  %2641 = vmatpush1.xpose.msra.mxu0 0.0
  %2642 = vmatprep.subr.mxu0 0.0
  %2643 = vmatpush1.xpose.msra.mxu0 %v2622
  %2644 = vmatprep.subr.mxu0 0.0
  %2645 = vmatpush1.xpose.msra.mxu0 %v2620
  %2646 = vmatprep.subr.mxu0 0.0
  %2647 = vmatpush1.xpose.msra.mxu0 %v2618
  %2648 = vmatprep.subr.mxu0 0.0
  %2649 = vmatpush1.xpose.msra.mxu0 %v2616
  %2650 = vmatprep.subr.mxu0 0.0
  %2651 = vmatpush1.xpose.msra.mxu0 %v2614
  %2652 = vmatprep.subr.mxu0 0.0
  %2653 = vmatpush1.xpose.msra.mxu0 %v2612
  %2654 = vmatprep.subr.mxu0 0.0
  %2655 = vmatpush1.xpose.msra.mxu0 %v2610
  %2656 = vmatprep.subr.mxu0 0.0
  %2657 = vmatpush2.xpose.msra.mxu0 0.0
  %2658 = vmatprep.subr.mxu0 0.0
  %2659 = vmatpush2.xpose.msra.mxu0 0.0
  %2660 = vmatprep.subr.mxu0 0.0
  %2661 = vmatpush2.xpose.msra.mxu0 0.0
  %2662 = vmatprep.subr.mxu0 0.0
  %2663 = vmatpush2.xpose.msra.mxu0 0.0
  %2664 = vmatprep.subr.mxu0 0.0
  %2665 = vmatpush2.xpose.msra.mxu0 0.0
  %2666 = vmatprep.subr.mxu0 0.0
  %2667 = vmatpush2.xpose.msra.mxu0 0.0
  %2668 = vmatprep.subr.mxu0 0.0
  %2669 = vmatpush2.xpose.msra.mxu0 0.0
  %2670 = vmatprep.subr.mxu0 0.0
  %2671 = vmatpush2.xpose.msra.mxu0 0.0
  %2672 = vmatprep.subr.mxu0 0.0
  %2673 = vmatpush2.xpose.msra.mxu0 0.0
  %2674 = vmatprep.subr.mxu0 0.0
  %2675 = vmatpush2.xpose.msra.mxu0 0.0
  %2676 = vmatprep.subr.mxu0 0.0
  %2677 = vmatpush2.xpose.msra.mxu0 0.0
  %2678 = vmatprep.subr.mxu0 0.0
  %2679 = vmatpush2.xpose.msra.mxu0 0.0
  %2680 = vmatprep.subr.mxu0 0.0
  %2681 = vmatpush2.xpose.msra.mxu0 0.0
  %2682 = vmatprep.subr.mxu0 0.0
  %2683 = vmatpush2.xpose.msra.mxu0 0.0
  %2684 = vmatprep.subr.mxu0 0.0
  %2685 = vmatpush2.xpose.msra.mxu0 0.0
  %2686 = vmatprep.subr.mxu0 0.0
  %2687 = vmatpush2.xpose.msra.mxu0 0.0
  %2688 = vmatprep.mubr.f32.mxu0 0.0
  %2689 = vmatmul.mubr.f32.gmra.mxu0 %v2596
  %v2690 = vpop.f32.mrf.mxu0
  %v2691 = vadd.f32 %v51, %v2690
  %v2692 = vpop.f32.mrf.mxu0
  %2693 = vmatprep.mubr.f32.mxu0 0.0
  %2694 = vmatmul.mubr.f32.gmra.mxu0 %v2598
  %v2695 = vpop.f32.mrf.mxu0
  %v2696 = vadd.f32 %v52, %v2695
  %v2697 = vpop.f32.mrf.mxu0
  %2698 = vmatprep.mubr.f32.mxu0 0.0
  %2699 = vmatmul.mubr.f32.gmra.mxu0 %v2600
  %v2700 = vpop.f32.mrf.mxu0
  %v2701 = vadd.f32 %v53, %v2700
  %v2702 = vpop.f32.mrf.mxu0
  %2703 = vmatprep.mubr.f32.mxu0 0.0
  %2704 = vmatmul.mubr.f32.gmra.mxu0 %v2602
  %v2705 = vpop.f32.mrf.mxu0
  %v2706 = vadd.f32 %v54, %v2705
  %v2707 = vpop.f32.mrf.mxu0
  %2708 = vmatprep.mubr.f32.mxu0 0.0
  %2709 = vmatmul.mubr.f32.gmra.mxu0 %v2604
  %v2710 = vpop.f32.mrf.mxu0
  %v2711 = vadd.f32 %v55, %v2710
  %v2712 = vpop.f32.mrf.mxu0
  %2713 = vmatprep.mubr.f32.mxu0 0.0
  %2714 = vmatmul.mubr.f32.gmra.mxu0 %v2606
  %v2715 = vpop.f32.mrf.mxu0
  %v2716 = vadd.f32 %v56, %v2715
  %v2717 = vpop.f32.mrf.mxu0
  %2718 = vmatprep.mubr.f32.mxu0 0.0
  %2719 = vmatmul.mubr.f32.gmra.mxu0 %v2608
  %v2720 = vpop.f32.mrf.mxu0
  %v2721 = vadd.f32 %v57, %v2720
  %v2722 = vpop.f32.mrf.mxu0
  %2723 = vdwg.mxu0
  %v2724 = vsel %vm346, %v2691, -inf
  %2725 = vmax.xlane.f32.xlu0 %v2724
  %v2726 = vpop.xlane.xlu0 %2725
  %v2727 = vsel %vm346, %v2696, -inf
  %2728 = vmax.xlane.f32.xlu0 %v2727
  %v2729 = vpop.xlane.xlu0 %2728
  %v2730 = vsel %vm346, %v2701, -inf
  %2731 = vmax.xlane.f32.xlu0 %v2730
  %v2732 = vpop.xlane.xlu0 %2731
  %v2733 = vsel %vm346, %v2706, -inf
  %2734 = vmax.xlane.f32.xlu0 %v2733
  %v2735 = vpop.xlane.xlu0 %2734
  %v2736 = vsel %vm346, %v2711, -inf
  %2737 = vmax.xlane.f32.xlu0 %v2736
  %v2738 = vpop.xlane.xlu0 %2737
  %v2739 = vsel %vm346, %v2716, -inf
  %2740 = vmax.xlane.f32.xlu0 %v2739
  %v2741 = vpop.xlane.xlu0 %2740
  %v2742 = vsel %vm346, %v2721, -inf
  %2743 = vmax.xlane.f32.xlu0 %v2742
  %v2744 = vpop.xlane.xlu0 %2743
  %v2745 = vsub.f32 %v2691, %v2726
  %v2746 = vsub.f32 %v2696, %v2729
  %v2747 = vsub.f32 %v2701, %v2732
  %v2748 = vsub.f32 %v2706, %v2735
  %v2749 = vsub.f32 %v2711, %v2738
  %v2750 = vsub.f32 %v2716, %v2741
  %v2751 = vsub.f32 %v2721, %v2744
  %v2752 = vmul.f32 %v2745, 1.442695
  %v2753 = vpow.pop %v2752
  %v2754 = vmul.f32 %v2746, 1.442695
  %v2755 = vpow.pop %v2754
  %v2756 = vmul.f32 %v2747, 1.442695
  %v2757 = vpow.pop %v2756
  %v2758 = vmul.f32 %v2748, 1.442695
  %v2759 = vpow.pop %v2758
  %v2760 = vmul.f32 %v2749, 1.442695
  %v2761 = vpow.pop %v2760
  %v2762 = vmul.f32 %v2750, 1.442695
  %v2763 = vpow.pop %v2762
  %v2764 = vmul.f32 %v2751, 1.442695
  %v2765 = vpow.pop %v2764
  %v2766 = vsel %vm346, %v2753, 0.0
  %2767 = vadd.xlane.f32.xlu0 %v2766
  %v2768 = vpop.xlane.xlu0 %2767
  %v2769 = vsel %vm346, %v2755, 0.0
  %2770 = vadd.xlane.f32.xlu0 %v2769
  %v2771 = vpop.xlane.xlu0 %2770
  %v2772 = vsel %vm346, %v2757, 0.0
  %2773 = vadd.xlane.f32.xlu0 %v2772
  %v2774 = vpop.xlane.xlu0 %2773
  %v2775 = vsel %vm346, %v2759, 0.0
  %2776 = vadd.xlane.f32.xlu0 %v2775
  %v2777 = vpop.xlane.xlu0 %2776
  %v2778 = vsel %vm346, %v2761, 0.0
  %2779 = vadd.xlane.f32.xlu0 %v2778
  %v2780 = vpop.xlane.xlu0 %2779
  %v2781 = vsel %vm346, %v2763, 0.0
  %2782 = vadd.xlane.f32.xlu0 %v2781
  %v2783 = vpop.xlane.xlu0 %2782
  %v2784 = vsel %vm346, %v2765, 0.0
  %2785 = vadd.xlane.f32.xlu0 %v2784
  %v2786 = vpop.xlane.xlu0 %2785
  %v2787 = vrcp.pop %v2768
  %v2788 = vrcp.pop %v2771
  %v2789 = vrcp.pop %v2774
  %v2790 = vrcp.pop %v2777
  %v2791 = vrcp.pop %v2780
  %v2792 = vrcp.pop %v2783
  %v2793 = vrcp.pop %v2786
  %v2794 = vmul.f32 %v2753, %v2787
  %v2795 = vmul.f32 %v2755, %v2788
  %v2796 = vmul.f32 %v2757, %v2789
  %v2797 = vmul.f32 %v2759, %v2790
  %v2798 = vmul.f32 %v2761, %v2791
  %v2799 = vmul.f32 %v2763, %v2792
  %v2800 = vmul.f32 %v2765, %v2793
  %2801 = vrot.lane.b32.xlu0 %v2542, 64
  %v2802 = vpop.permute.xlu0 %2801
  %2803 = vrot.lane.b32.xlu0 %v2547, 64
  %v2804 = vpop.permute.xlu0 %2803
  %2805 = vrot.lane.b32.xlu0 %v2552, 64
  %v2806 = vpop.permute.xlu0 %2805
  %2807 = vrot.lane.b32.xlu0 %v2557, 64
  %v2808 = vpop.permute.xlu0 %2807
  %2809 = vrot.lane.b32.xlu0 %v2562, 64
  %v2810 = vpop.permute.xlu0 %2809
  %2811 = vrot.lane.b32.xlu0 %v2567, 64
  %v2812 = vpop.permute.xlu0 %2811
  %2813 = vrot.lane.b32.xlu0 %v2572, 64
  %v2814 = vpop.permute.xlu0 %2813
  %v2823 = vsel %vm346, %v2794, 0
  %v2826 = vsel %vm346, %v2795, 0
  %v2829 = vsel %vm346, %v2796, 0
  %v2832 = vsel %vm346, %v2797, 0
  %v2835 = vsel %vm346, %v2798, 0
  %v2838 = vsel %vm346, %v2799, 0
  %v2841 = vsel %vm346, %v2800, 0
  %2843 = vmatprep.subr.mxu0 0.0
  %2844 = vmatpush1.msra.mxu0 0.0
  %2845 = vmatprep.subr.mxu0 0.0
  %2846 = vmatpush1.msra.mxu0 0.0
  %2847 = vmatprep.subr.mxu0 0.0
  %2848 = vmatpush1.msra.mxu0 0.0
  %2849 = vmatprep.subr.mxu0 0.0
  %2850 = vmatpush1.msra.mxu0 0.0
  %2851 = vmatprep.subr.mxu0 0.0
  %2852 = vmatpush1.msra.mxu0 0.0
  %2853 = vmatprep.subr.mxu0 0.0
  %2854 = vmatpush1.msra.mxu0 0.0
  %2855 = vmatprep.subr.mxu0 0.0
  %2856 = vmatpush1.msra.mxu0 0.0
  %2857 = vmatprep.subr.mxu0 0.0
  %2858 = vmatpush1.msra.mxu0 0.0
  %2859 = vmatprep.subr.mxu0 0.0
  %2860 = vmatpush1.msra.mxu0 0.0
  %2861 = vmatprep.subr.mxu0 0.0
  %2862 = vmatpush1.msra.mxu0 %v2814
  %2863 = vmatprep.subr.mxu0 0.0
  %2864 = vmatpush1.msra.mxu0 %v2812
  %2865 = vmatprep.subr.mxu0 0.0
  %2866 = vmatpush1.msra.mxu0 %v2810
  %2867 = vmatprep.subr.mxu0 0.0
  %2868 = vmatpush1.msra.mxu0 %v2808
  %2869 = vmatprep.subr.mxu0 0.0
  %2870 = vmatpush1.msra.mxu0 %v2806
  %2871 = vmatprep.subr.mxu0 0.0
  %2872 = vmatpush1.msra.mxu0 %v2804
  %2873 = vmatprep.subr.mxu0 0.0
  %2874 = vmatpush1.msra.mxu0 %v2802
  %2875 = vmatprep.subr.mxu0 0.0
  %2876 = vmatpush2.msra.mxu0 0.0
  %2877 = vmatprep.subr.mxu0 0.0
  %2878 = vmatpush2.msra.mxu0 0.0
  %2879 = vmatprep.subr.mxu0 0.0
  %2880 = vmatpush2.msra.mxu0 0.0
  %2881 = vmatprep.subr.mxu0 0.0
  %2882 = vmatpush2.msra.mxu0 0.0
  %2883 = vmatprep.subr.mxu0 0.0
  %2884 = vmatpush2.msra.mxu0 0.0
  %2885 = vmatprep.subr.mxu0 0.0
  %2886 = vmatpush2.msra.mxu0 0.0
  %2887 = vmatprep.subr.mxu0 0.0
  %2888 = vmatpush2.msra.mxu0 0.0
  %2889 = vmatprep.subr.mxu0 0.0
  %2890 = vmatpush2.msra.mxu0 0.0
  %2891 = vmatprep.subr.mxu0 0.0
  %2892 = vmatpush2.msra.mxu0 0.0
  %2893 = vmatprep.subr.mxu0 0.0
  %2894 = vmatpush2.msra.mxu0 0.0
  %2895 = vmatprep.subr.mxu0 0.0
  %2896 = vmatpush2.msra.mxu0 0.0
  %2897 = vmatprep.subr.mxu0 0.0
  %2898 = vmatpush2.msra.mxu0 0.0
  %2899 = vmatprep.subr.mxu0 0.0
  %2900 = vmatpush2.msra.mxu0 0.0
  %2901 = vmatprep.subr.mxu0 0.0
  %2902 = vmatpush2.msra.mxu0 0.0
  %2903 = vmatprep.subr.mxu0 0.0
  %2904 = vmatpush2.msra.mxu0 0.0
  %2905 = vmatprep.subr.mxu0 0.0
  %2906 = vmatpush2.msra.mxu0 0.0
  %2907 = vmatprep.mubr.f32.mxu0 0.0
  %2908 = vmatmul.mubr.f32.gmra.mxu0 %v2823
  %v2909 = vpop.f32.mrf.mxu0
  %v2910 = vadd.f32 0.0, %v2909
  %v2911 = vpop.f32.mrf.mxu0
  %2912 = vmatprep.mubr.f32.mxu0 0.0
  %2913 = vmatmul.mubr.f32.gmra.mxu0 %v2826
  %v2914 = vpop.f32.mrf.mxu0
  %v2915 = vadd.f32 0.0, %v2914
  %v2916 = vpop.f32.mrf.mxu0
  %2917 = vmatprep.mubr.f32.mxu0 0.0
  %2918 = vmatmul.mubr.f32.gmra.mxu0 %v2829
  %v2919 = vpop.f32.mrf.mxu0
  %v2920 = vadd.f32 0.0, %v2919
  %v2921 = vpop.f32.mrf.mxu0
  %2922 = vmatprep.mubr.f32.mxu0 0.0
  %2923 = vmatmul.mubr.f32.gmra.mxu0 %v2832
  %v2924 = vpop.f32.mrf.mxu0
  %v2925 = vadd.f32 0.0, %v2924
  %v2926 = vpop.f32.mrf.mxu0
  %2927 = vmatprep.mubr.f32.mxu0 0.0
  %2928 = vmatmul.mubr.f32.gmra.mxu0 %v2835
  %v2929 = vpop.f32.mrf.mxu0
  %v2930 = vadd.f32 0.0, %v2929
  %v2931 = vpop.f32.mrf.mxu0
  %2932 = vmatprep.mubr.f32.mxu0 0.0
  %2933 = vmatmul.mubr.f32.gmra.mxu0 %v2838
  %v2934 = vpop.f32.mrf.mxu0
  %v2935 = vadd.f32 0.0, %v2934
  %v2936 = vpop.f32.mrf.mxu0
  %2937 = vmatprep.mubr.f32.mxu0 0.0
  %2938 = vmatmul.mubr.f32.gmra.mxu0 %v2841
  %v2939 = vpop.f32.mrf.mxu0
  %v2940 = vadd.f32 0.0, %v2939
  %v2941 = vpop.f32.mrf.mxu0
  %2942 = vdwg.mxu0
  %2943 = vrot.lane.b32.xlu0 %v2542, 120
  %v2944 = vpop.permute.xlu0 %2943
  %2945 = vrot.lane.b32.xlu0 %v2547, 120
  %v2946 = vpop.permute.xlu0 %2945
  %2947 = vrot.lane.b32.xlu0 %v2552, 120
  %v2948 = vpop.permute.xlu0 %2947
  %2949 = vrot.lane.b32.xlu0 %v2557, 120
  %v2950 = vpop.permute.xlu0 %2949
  %2951 = vrot.lane.b32.xlu0 %v2562, 120
  %v2952 = vpop.permute.xlu0 %2951
  %2953 = vrot.lane.b32.xlu0 %v2567, 120
  %v2954 = vpop.permute.xlu0 %2953
  %2955 = vrot.lane.b32.xlu0 %v2572, 120
  %v2956 = vpop.permute.xlu0 %2955
  %2957 = vrot.lane.b32.xlu0 %v2542, 88
  %v2958 = vpop.permute.xlu0 %2957
  %2959 = vrot.lane.b32.xlu0 %v2547, 88
  %v2960 = vpop.permute.xlu0 %2959
  %2961 = vrot.lane.b32.xlu0 %v2552, 88
  %v2962 = vpop.permute.xlu0 %2961
  %2963 = vrot.lane.b32.xlu0 %v2557, 88
  %v2964 = vpop.permute.xlu0 %2963
  %2965 = vrot.lane.b32.xlu0 %v2562, 88
  %v2966 = vpop.permute.xlu0 %2965
  %2967 = vrot.lane.b32.xlu0 %v2567, 88
  %v2968 = vpop.permute.xlu0 %2967
  %2969 = vrot.lane.b32.xlu0 %v2572, 88
  %v2970 = vpop.permute.xlu0 %2969
  %v2971 = vsel %vm217, %v2944, 0
  %v2973 = vsel %vm217, %v2946, 0
  %v2975 = vsel %vm217, %v2948, 0
  %v2977 = vsel %vm217, %v2950, 0
  %v2979 = vsel %vm217, %v2952, 0
  %v2981 = vsel %vm217, %v2954, 0
  %v2983 = vsel %vm217, %v2956, 0
  %v2985 = vsel %vm217, %v2958, 0
  %v2987 = vsel %vm217, %v2960, 0
  %v2989 = vsel %vm217, %v2962, 0
  %v2991 = vsel %vm217, %v2964, 0
  %v2993 = vsel %vm217, %v2966, 0
  %v2995 = vsel %vm217, %v2968, 0
  %v2997 = vsel %vm217, %v2970, 0
  %2999 = vmatprep.subr.mxu0 0.0
  %3000 = vmatpush1.xpose.msra.mxu0 0.0
  %3001 = vmatprep.subr.mxu0 0.0
  %3002 = vmatpush1.xpose.msra.mxu0 0.0
  %3003 = vmatprep.subr.mxu0 0.0
  %3004 = vmatpush1.xpose.msra.mxu0 0.0
  %3005 = vmatprep.subr.mxu0 0.0
  %3006 = vmatpush1.xpose.msra.mxu0 0.0
  %3007 = vmatprep.subr.mxu0 0.0
  %3008 = vmatpush1.xpose.msra.mxu0 0.0
  %3009 = vmatprep.subr.mxu0 0.0
  %3010 = vmatpush1.xpose.msra.mxu0 0.0
  %3011 = vmatprep.subr.mxu0 0.0
  %3012 = vmatpush1.xpose.msra.mxu0 0.0
  %3013 = vmatprep.subr.mxu0 0.0
  %3014 = vmatpush1.xpose.msra.mxu0 0.0
  %3015 = vmatprep.subr.mxu0 0.0
  %3016 = vmatpush1.xpose.msra.mxu0 0.0
  %3017 = vmatprep.subr.mxu0 0.0
  %3018 = vmatpush1.xpose.msra.mxu0 %v2997
  %3019 = vmatprep.subr.mxu0 0.0
  %3020 = vmatpush1.xpose.msra.mxu0 %v2995
  %3021 = vmatprep.subr.mxu0 0.0
  %3022 = vmatpush1.xpose.msra.mxu0 %v2993
  %3023 = vmatprep.subr.mxu0 0.0
  %3024 = vmatpush1.xpose.msra.mxu0 %v2991
  %3025 = vmatprep.subr.mxu0 0.0
  %3026 = vmatpush1.xpose.msra.mxu0 %v2989
  %3027 = vmatprep.subr.mxu0 0.0
  %3028 = vmatpush1.xpose.msra.mxu0 %v2987
  %3029 = vmatprep.subr.mxu0 0.0
  %3030 = vmatpush1.xpose.msra.mxu0 %v2985
  %3031 = vmatprep.subr.mxu0 0.0
  %3032 = vmatpush2.xpose.msra.mxu0 0.0
  %3033 = vmatprep.subr.mxu0 0.0
  %3034 = vmatpush2.xpose.msra.mxu0 0.0
  %3035 = vmatprep.subr.mxu0 0.0
  %3036 = vmatpush2.xpose.msra.mxu0 0.0
  %3037 = vmatprep.subr.mxu0 0.0
  %3038 = vmatpush2.xpose.msra.mxu0 0.0
  %3039 = vmatprep.subr.mxu0 0.0
  %3040 = vmatpush2.xpose.msra.mxu0 0.0
  %3041 = vmatprep.subr.mxu0 0.0
  %3042 = vmatpush2.xpose.msra.mxu0 0.0
  %3043 = vmatprep.subr.mxu0 0.0
  %3044 = vmatpush2.xpose.msra.mxu0 0.0
  %3045 = vmatprep.subr.mxu0 0.0
  %3046 = vmatpush2.xpose.msra.mxu0 0.0
  %3047 = vmatprep.subr.mxu0 0.0
  %3048 = vmatpush2.xpose.msra.mxu0 0.0
  %3049 = vmatprep.subr.mxu0 0.0
  %3050 = vmatpush2.xpose.msra.mxu0 0.0
  %3051 = vmatprep.subr.mxu0 0.0
  %3052 = vmatpush2.xpose.msra.mxu0 0.0
  %3053 = vmatprep.subr.mxu0 0.0
  %3054 = vmatpush2.xpose.msra.mxu0 0.0
  %3055 = vmatprep.subr.mxu0 0.0
  %3056 = vmatpush2.xpose.msra.mxu0 0.0
  %3057 = vmatprep.subr.mxu0 0.0
  %3058 = vmatpush2.xpose.msra.mxu0 0.0
  %3059 = vmatprep.subr.mxu0 0.0
  %3060 = vmatpush2.xpose.msra.mxu0 0.0
  %3061 = vmatprep.subr.mxu0 0.0
  %3062 = vmatpush2.xpose.msra.mxu0 0.0
  %3063 = vmatprep.mubr.f32.mxu0 0.0
  %3064 = vmatmul.mubr.f32.gmra.mxu0 %v2971
  %v3065 = vpop.f32.mrf.mxu0
  %v3066 = vadd.f32 %v51, %v3065
  %v3067 = vpop.f32.mrf.mxu0
  %3068 = vmatprep.mubr.f32.mxu0 0.0
  %3069 = vmatmul.mubr.f32.gmra.mxu0 %v2973
  %v3070 = vpop.f32.mrf.mxu0
  %v3071 = vadd.f32 %v52, %v3070
  %v3072 = vpop.f32.mrf.mxu0
  %3073 = vmatprep.mubr.f32.mxu0 0.0
  %3074 = vmatmul.mubr.f32.gmra.mxu0 %v2975
  %v3075 = vpop.f32.mrf.mxu0
  %v3076 = vadd.f32 %v53, %v3075
  %v3077 = vpop.f32.mrf.mxu0
  %3078 = vmatprep.mubr.f32.mxu0 0.0
  %3079 = vmatmul.mubr.f32.gmra.mxu0 %v2977
  %v3080 = vpop.f32.mrf.mxu0
  %v3081 = vadd.f32 %v54, %v3080
  %v3082 = vpop.f32.mrf.mxu0
  %3083 = vmatprep.mubr.f32.mxu0 0.0
  %3084 = vmatmul.mubr.f32.gmra.mxu0 %v2979
  %v3085 = vpop.f32.mrf.mxu0
  %v3086 = vadd.f32 %v55, %v3085
  %v3087 = vpop.f32.mrf.mxu0
  %3088 = vmatprep.mubr.f32.mxu0 0.0
  %3089 = vmatmul.mubr.f32.gmra.mxu0 %v2981
  %v3090 = vpop.f32.mrf.mxu0
  %v3091 = vadd.f32 %v56, %v3090
  %v3092 = vpop.f32.mrf.mxu0
  %3093 = vmatprep.mubr.f32.mxu0 0.0
  %3094 = vmatmul.mubr.f32.gmra.mxu0 %v2983
  %v3095 = vpop.f32.mrf.mxu0
  %v3096 = vadd.f32 %v57, %v3095
  %v3097 = vpop.f32.mrf.mxu0
  %3098 = vdwg.mxu0
  %v3099 = vsel %vm346, %v3066, -inf
  %3100 = vmax.xlane.f32.xlu0 %v3099
  %v3101 = vpop.xlane.xlu0 %3100
  %v3102 = vsel %vm346, %v3071, -inf
  %3103 = vmax.xlane.f32.xlu0 %v3102
  %v3104 = vpop.xlane.xlu0 %3103
  %v3105 = vsel %vm346, %v3076, -inf
  %3106 = vmax.xlane.f32.xlu0 %v3105
  %v3107 = vpop.xlane.xlu0 %3106
  %v3108 = vsel %vm346, %v3081, -inf
  %3109 = vmax.xlane.f32.xlu0 %v3108
  %v3110 = vpop.xlane.xlu0 %3109
  %v3111 = vsel %vm346, %v3086, -inf
  %3112 = vmax.xlane.f32.xlu0 %v3111
  %v3113 = vpop.xlane.xlu0 %3112
  %v3114 = vsel %vm346, %v3091, -inf
  %3115 = vmax.xlane.f32.xlu0 %v3114
  %v3116 = vpop.xlane.xlu0 %3115
  %v3117 = vsel %vm346, %v3096, -inf
  %3118 = vmax.xlane.f32.xlu0 %v3117
  %v3119 = vpop.xlane.xlu0 %3118
  %v3120 = vsub.f32 %v3066, %v3101
  %v3121 = vsub.f32 %v3071, %v3104
  %v3122 = vsub.f32 %v3076, %v3107
  %v3123 = vsub.f32 %v3081, %v3110
  %v3124 = vsub.f32 %v3086, %v3113
  %v3125 = vsub.f32 %v3091, %v3116
  %v3126 = vsub.f32 %v3096, %v3119
  %v3127 = vmul.f32 %v3120, 1.442695
  %v3128 = vpow.pop %v3127
  %v3129 = vmul.f32 %v3121, 1.442695
  %v3130 = vpow.pop %v3129
  %v3131 = vmul.f32 %v3122, 1.442695
  %v3132 = vpow.pop %v3131
  %v3133 = vmul.f32 %v3123, 1.442695
  %v3134 = vpow.pop %v3133
  %v3135 = vmul.f32 %v3124, 1.442695
  %v3136 = vpow.pop %v3135
  %v3137 = vmul.f32 %v3125, 1.442695
  %v3138 = vpow.pop %v3137
  %v3139 = vmul.f32 %v3126, 1.442695
  %v3140 = vpow.pop %v3139
  %v3141 = vsel %vm346, %v3128, 0.0
  %3142 = vadd.xlane.f32.xlu0 %v3141
  %v3143 = vpop.xlane.xlu0 %3142
  %v3144 = vsel %vm346, %v3130, 0.0
  %3145 = vadd.xlane.f32.xlu0 %v3144
  %v3146 = vpop.xlane.xlu0 %3145
  %v3147 = vsel %vm346, %v3132, 0.0
  %3148 = vadd.xlane.f32.xlu0 %v3147
  %v3149 = vpop.xlane.xlu0 %3148
  %v3150 = vsel %vm346, %v3134, 0.0
  %3151 = vadd.xlane.f32.xlu0 %v3150
  %v3152 = vpop.xlane.xlu0 %3151
  %v3153 = vsel %vm346, %v3136, 0.0
  %3154 = vadd.xlane.f32.xlu0 %v3153
  %v3155 = vpop.xlane.xlu0 %3154
  %v3156 = vsel %vm346, %v3138, 0.0
  %3157 = vadd.xlane.f32.xlu0 %v3156
  %v3158 = vpop.xlane.xlu0 %3157
  %v3159 = vsel %vm346, %v3140, 0.0
  %3160 = vadd.xlane.f32.xlu0 %v3159
  %v3161 = vpop.xlane.xlu0 %3160
  %v3162 = vrcp.pop %v3143
  %v3163 = vrcp.pop %v3146
  %v3164 = vrcp.pop %v3149
  %v3165 = vrcp.pop %v3152
  %v3166 = vrcp.pop %v3155
  %v3167 = vrcp.pop %v3158
  %v3168 = vrcp.pop %v3161
  %v3169 = vmul.f32 %v3128, %v3162
  %v3170 = vmul.f32 %v3130, %v3163
  %v3171 = vmul.f32 %v3132, %v3164
  %v3172 = vmul.f32 %v3134, %v3165
  %v3173 = vmul.f32 %v3136, %v3166
  %v3174 = vmul.f32 %v3138, %v3167
  %v3175 = vmul.f32 %v3140, %v3168
  %3176 = vrot.lane.b32.xlu0 %v2542, 56
  %v3177 = vpop.permute.xlu0 %3176
  %3178 = vrot.lane.b32.xlu0 %v2547, 56
  %v3179 = vpop.permute.xlu0 %3178
  %3180 = vrot.lane.b32.xlu0 %v2552, 56
  %v3181 = vpop.permute.xlu0 %3180
  %3182 = vrot.lane.b32.xlu0 %v2557, 56
  %v3183 = vpop.permute.xlu0 %3182
  %3184 = vrot.lane.b32.xlu0 %v2562, 56
  %v3185 = vpop.permute.xlu0 %3184
  %3186 = vrot.lane.b32.xlu0 %v2567, 56
  %v3187 = vpop.permute.xlu0 %3186
  %3188 = vrot.lane.b32.xlu0 %v2572, 56
  %v3189 = vpop.permute.xlu0 %3188
  %v3198 = vsel %vm346, %v3169, 0
  %v3201 = vsel %vm346, %v3170, 0
  %v3204 = vsel %vm346, %v3171, 0
  %v3207 = vsel %vm346, %v3172, 0
  %v3210 = vsel %vm346, %v3173, 0
  %v3213 = vsel %vm346, %v3174, 0
  %v3216 = vsel %vm346, %v3175, 0
  %3218 = vmatprep.subr.mxu0 0.0
  %3219 = vmatpush1.msra.mxu0 0.0
  %3220 = vmatprep.subr.mxu0 0.0
  %3221 = vmatpush1.msra.mxu0 0.0
  %3222 = vmatprep.subr.mxu0 0.0
  %3223 = vmatpush1.msra.mxu0 0.0
  %3224 = vmatprep.subr.mxu0 0.0
  %3225 = vmatpush1.msra.mxu0 0.0
  %3226 = vmatprep.subr.mxu0 0.0
  %3227 = vmatpush1.msra.mxu0 0.0
  %3228 = vmatprep.subr.mxu0 0.0
  %3229 = vmatpush1.msra.mxu0 0.0
  %3230 = vmatprep.subr.mxu0 0.0
  %3231 = vmatpush1.msra.mxu0 0.0
  %3232 = vmatprep.subr.mxu0 0.0
  %3233 = vmatpush1.msra.mxu0 0.0
  %3234 = vmatprep.subr.mxu0 0.0
  %3235 = vmatpush1.msra.mxu0 0.0
  %3236 = vmatprep.subr.mxu0 0.0
  %3237 = vmatpush1.msra.mxu0 %v3189
  %3238 = vmatprep.subr.mxu0 0.0
  %3239 = vmatpush1.msra.mxu0 %v3187
  %3240 = vmatprep.subr.mxu0 0.0
  %3241 = vmatpush1.msra.mxu0 %v3185
  %3242 = vmatprep.subr.mxu0 0.0
  %3243 = vmatpush1.msra.mxu0 %v3183
  %3244 = vmatprep.subr.mxu0 0.0
  %3245 = vmatpush1.msra.mxu0 %v3181
  %3246 = vmatprep.subr.mxu0 0.0
  %3247 = vmatpush1.msra.mxu0 %v3179
  %3248 = vmatprep.subr.mxu0 0.0
  %3249 = vmatpush1.msra.mxu0 %v3177
  %3250 = vmatprep.subr.mxu0 0.0
  %3251 = vmatpush2.msra.mxu0 0.0
  %3252 = vmatprep.subr.mxu0 0.0
  %3253 = vmatpush2.msra.mxu0 0.0
  %3254 = vmatprep.subr.mxu0 0.0
  %3255 = vmatpush2.msra.mxu0 0.0
  %3256 = vmatprep.subr.mxu0 0.0
  %3257 = vmatpush2.msra.mxu0 0.0
  %3258 = vmatprep.subr.mxu0 0.0
  %3259 = vmatpush2.msra.mxu0 0.0
  %3260 = vmatprep.subr.mxu0 0.0
  %3261 = vmatpush2.msra.mxu0 0.0
  %3262 = vmatprep.subr.mxu0 0.0
  %3263 = vmatpush2.msra.mxu0 0.0
  %3264 = vmatprep.subr.mxu0 0.0
  %3265 = vmatpush2.msra.mxu0 0.0
  %3266 = vmatprep.subr.mxu0 0.0
  %3267 = vmatpush2.msra.mxu0 0.0
  %3268 = vmatprep.subr.mxu0 0.0
  %3269 = vmatpush2.msra.mxu0 0.0
  %3270 = vmatprep.subr.mxu0 0.0
  %3271 = vmatpush2.msra.mxu0 0.0
  %3272 = vmatprep.subr.mxu0 0.0
  %3273 = vmatpush2.msra.mxu0 0.0
  %3274 = vmatprep.subr.mxu0 0.0
  %3275 = vmatpush2.msra.mxu0 0.0
  %3276 = vmatprep.subr.mxu0 0.0
  %3277 = vmatpush2.msra.mxu0 0.0
  %3278 = vmatprep.subr.mxu0 0.0
  %3279 = vmatpush2.msra.mxu0 0.0
  %3280 = vmatprep.subr.mxu0 0.0
  %3281 = vmatpush2.msra.mxu0 0.0
  %3282 = vmatprep.mubr.f32.mxu0 0.0
  %3283 = vmatmul.mubr.f32.gmra.mxu0 %v3198
  %v3284 = vpop.f32.mrf.mxu0
  %v3285 = vadd.f32 0.0, %v3284
  %v3286 = vpop.f32.mrf.mxu0
  %3287 = vmatprep.mubr.f32.mxu0 0.0
  %3288 = vmatmul.mubr.f32.gmra.mxu0 %v3201
  %v3289 = vpop.f32.mrf.mxu0
  %v3290 = vadd.f32 0.0, %v3289
  %v3291 = vpop.f32.mrf.mxu0
  %3292 = vmatprep.mubr.f32.mxu0 0.0
  %3293 = vmatmul.mubr.f32.gmra.mxu0 %v3204
  %v3294 = vpop.f32.mrf.mxu0
  %v3295 = vadd.f32 0.0, %v3294
  %v3296 = vpop.f32.mrf.mxu0
  %3297 = vmatprep.mubr.f32.mxu0 0.0
  %3298 = vmatmul.mubr.f32.gmra.mxu0 %v3207
  %v3299 = vpop.f32.mrf.mxu0
  %v3300 = vadd.f32 0.0, %v3299
  %v3301 = vpop.f32.mrf.mxu0
  %3302 = vmatprep.mubr.f32.mxu0 0.0
  %3303 = vmatmul.mubr.f32.gmra.mxu0 %v3210
  %v3304 = vpop.f32.mrf.mxu0
  %v3305 = vadd.f32 0.0, %v3304
  %v3306 = vpop.f32.mrf.mxu0
  %3307 = vmatprep.mubr.f32.mxu0 0.0
  %3308 = vmatmul.mubr.f32.gmra.mxu0 %v3213
  %v3309 = vpop.f32.mrf.mxu0
  %v3310 = vadd.f32 0.0, %v3309
  %v3311 = vpop.f32.mrf.mxu0
  %3312 = vmatprep.mubr.f32.mxu0 0.0
  %3313 = vmatmul.mubr.f32.gmra.mxu0 %v3216
  %v3314 = vpop.f32.mrf.mxu0
  %v3315 = vadd.f32 0.0, %v3314
  %v3316 = vpop.f32.mrf.mxu0
  %3317 = vdwg.mxu0
  %3318 = vrot.lane.b32.xlu0 %v2542, 112
  %v3319 = vpop.permute.xlu0 %3318
  %3320 = vrot.lane.b32.xlu0 %v2547, 112
  %v3321 = vpop.permute.xlu0 %3320
  %3322 = vrot.lane.b32.xlu0 %v2552, 112
  %v3323 = vpop.permute.xlu0 %3322
  %3324 = vrot.lane.b32.xlu0 %v2557, 112
  %v3325 = vpop.permute.xlu0 %3324
  %3326 = vrot.lane.b32.xlu0 %v2562, 112
  %v3327 = vpop.permute.xlu0 %3326
  %3328 = vrot.lane.b32.xlu0 %v2567, 112
  %v3329 = vpop.permute.xlu0 %3328
  %3330 = vrot.lane.b32.xlu0 %v2572, 112
  %v3331 = vpop.permute.xlu0 %3330
  %3332 = vrot.lane.b32.xlu0 %v2542, 80
  %v3333 = vpop.permute.xlu0 %3332
  %3334 = vrot.lane.b32.xlu0 %v2547, 80
  %v3335 = vpop.permute.xlu0 %3334
  %3336 = vrot.lane.b32.xlu0 %v2552, 80
  %v3337 = vpop.permute.xlu0 %3336
  %3338 = vrot.lane.b32.xlu0 %v2557, 80
  %v3339 = vpop.permute.xlu0 %3338
  %3340 = vrot.lane.b32.xlu0 %v2562, 80
  %v3341 = vpop.permute.xlu0 %3340
  %3342 = vrot.lane.b32.xlu0 %v2567, 80
  %v3343 = vpop.permute.xlu0 %3342
  %3344 = vrot.lane.b32.xlu0 %v2572, 80
  %v3345 = vpop.permute.xlu0 %3344
  %v3346 = vsel %vm217, %v3319, 0
  %v3348 = vsel %vm217, %v3321, 0
  %v3350 = vsel %vm217, %v3323, 0
  %v3352 = vsel %vm217, %v3325, 0
  %v3354 = vsel %vm217, %v3327, 0
  %v3356 = vsel %vm217, %v3329, 0
  %v3358 = vsel %vm217, %v3331, 0
  %v3360 = vsel %vm217, %v3333, 0
  %v3362 = vsel %vm217, %v3335, 0
  %v3364 = vsel %vm217, %v3337, 0
  %v3366 = vsel %vm217, %v3339, 0
  %v3368 = vsel %vm217, %v3341, 0
  %v3370 = vsel %vm217, %v3343, 0
  %v3372 = vsel %vm217, %v3345, 0
  %3374 = vmatprep.subr.mxu0 0.0
  %3375 = vmatpush1.xpose.msra.mxu0 0.0
  %3376 = vmatprep.subr.mxu0 0.0
  %3377 = vmatpush1.xpose.msra.mxu0 0.0
  %3378 = vmatprep.subr.mxu0 0.0
  %3379 = vmatpush1.xpose.msra.mxu0 0.0
  %3380 = vmatprep.subr.mxu0 0.0
  %3381 = vmatpush1.xpose.msra.mxu0 0.0
  %3382 = vmatprep.subr.mxu0 0.0
  %3383 = vmatpush1.xpose.msra.mxu0 0.0
  %3384 = vmatprep.subr.mxu0 0.0
  %3385 = vmatpush1.xpose.msra.mxu0 0.0
  %3386 = vmatprep.subr.mxu0 0.0
  %3387 = vmatpush1.xpose.msra.mxu0 0.0
  %3388 = vmatprep.subr.mxu0 0.0
  %3389 = vmatpush1.xpose.msra.mxu0 0.0
  %3390 = vmatprep.subr.mxu0 0.0
  %3391 = vmatpush1.xpose.msra.mxu0 0.0
  %3392 = vmatprep.subr.mxu0 0.0
  %3393 = vmatpush1.xpose.msra.mxu0 %v3372
  %3394 = vmatprep.subr.mxu0 0.0
  %3395 = vmatpush1.xpose.msra.mxu0 %v3370
  %3396 = vmatprep.subr.mxu0 0.0
  %3397 = vmatpush1.xpose.msra.mxu0 %v3368
  %3398 = vmatprep.subr.mxu0 0.0
  %3399 = vmatpush1.xpose.msra.mxu0 %v3366
  %3400 = vmatprep.subr.mxu0 0.0
  %3401 = vmatpush1.xpose.msra.mxu0 %v3364
  %3402 = vmatprep.subr.mxu0 0.0
  %3403 = vmatpush1.xpose.msra.mxu0 %v3362
  %3404 = vmatprep.subr.mxu0 0.0
  %3405 = vmatpush1.xpose.msra.mxu0 %v3360
  %3406 = vmatprep.subr.mxu0 0.0
  %3407 = vmatpush2.xpose.msra.mxu0 0.0
  %3408 = vmatprep.subr.mxu0 0.0
  %3409 = vmatpush2.xpose.msra.mxu0 0.0
  %3410 = vmatprep.subr.mxu0 0.0
  %3411 = vmatpush2.xpose.msra.mxu0 0.0
  %3412 = vmatprep.subr.mxu0 0.0
  %3413 = vmatpush2.xpose.msra.mxu0 0.0
  %3414 = vmatprep.subr.mxu0 0.0
  %3415 = vmatpush2.xpose.msra.mxu0 0.0
  %3416 = vmatprep.subr.mxu0 0.0
  %3417 = vmatpush2.xpose.msra.mxu0 0.0
  %3418 = vmatprep.subr.mxu0 0.0
  %3419 = vmatpush2.xpose.msra.mxu0 0.0
  %3420 = vmatprep.subr.mxu0 0.0
  %3421 = vmatpush2.xpose.msra.mxu0 0.0
  %3422 = vmatprep.subr.mxu0 0.0
  %3423 = vmatpush2.xpose.msra.mxu0 0.0
  %3424 = vmatprep.subr.mxu0 0.0
  %3425 = vmatpush2.xpose.msra.mxu0 0.0
  %3426 = vmatprep.subr.mxu0 0.0
  %3427 = vmatpush2.xpose.msra.mxu0 0.0
  %3428 = vmatprep.subr.mxu0 0.0
  %3429 = vmatpush2.xpose.msra.mxu0 0.0
  %3430 = vmatprep.subr.mxu0 0.0
  %3431 = vmatpush2.xpose.msra.mxu0 0.0
  %3432 = vmatprep.subr.mxu0 0.0
  %3433 = vmatpush2.xpose.msra.mxu0 0.0
  %3434 = vmatprep.subr.mxu0 0.0
  %3435 = vmatpush2.xpose.msra.mxu0 0.0
  %3436 = vmatprep.subr.mxu0 0.0
  %3437 = vmatpush2.xpose.msra.mxu0 0.0
  %3438 = vmatprep.mubr.f32.mxu0 0.0
  %3439 = vmatmul.mubr.f32.gmra.mxu0 %v3346
  %v3440 = vpop.f32.mrf.mxu0
  %v3441 = vadd.f32 %v51, %v3440
  %v3442 = vpop.f32.mrf.mxu0
  %3443 = vmatprep.mubr.f32.mxu0 0.0
  %3444 = vmatmul.mubr.f32.gmra.mxu0 %v3348
  %v3445 = vpop.f32.mrf.mxu0
  %v3446 = vadd.f32 %v52, %v3445
  %v3447 = vpop.f32.mrf.mxu0
  %3448 = vmatprep.mubr.f32.mxu0 0.0
  %3449 = vmatmul.mubr.f32.gmra.mxu0 %v3350
  %v3450 = vpop.f32.mrf.mxu0
  %v3451 = vadd.f32 %v53, %v3450
  %v3452 = vpop.f32.mrf.mxu0
  %3453 = vmatprep.mubr.f32.mxu0 0.0
  %3454 = vmatmul.mubr.f32.gmra.mxu0 %v3352
  %v3455 = vpop.f32.mrf.mxu0
  %v3456 = vadd.f32 %v54, %v3455
  %v3457 = vpop.f32.mrf.mxu0
  %3458 = vmatprep.mubr.f32.mxu0 0.0
  %3459 = vmatmul.mubr.f32.gmra.mxu0 %v3354
  %v3460 = vpop.f32.mrf.mxu0
  %v3461 = vadd.f32 %v55, %v3460
  %v3462 = vpop.f32.mrf.mxu0
  %3463 = vmatprep.mubr.f32.mxu0 0.0
  %3464 = vmatmul.mubr.f32.gmra.mxu0 %v3356
  %v3465 = vpop.f32.mrf.mxu0
  %v3466 = vadd.f32 %v56, %v3465
  %v3467 = vpop.f32.mrf.mxu0
  %3468 = vmatprep.mubr.f32.mxu0 0.0
  %3469 = vmatmul.mubr.f32.gmra.mxu0 %v3358
  %v3470 = vpop.f32.mrf.mxu0
  %v3471 = vadd.f32 %v57, %v3470
  %v3472 = vpop.f32.mrf.mxu0
  %3473 = vdwg.mxu0
  %v3474 = vsel %vm346, %v3441, -inf
  %3475 = vmax.xlane.f32.xlu0 %v3474
  %v3476 = vpop.xlane.xlu0 %3475
  %v3477 = vsel %vm346, %v3446, -inf
  %3478 = vmax.xlane.f32.xlu0 %v3477
  %v3479 = vpop.xlane.xlu0 %3478
  %v3480 = vsel %vm346, %v3451, -inf
  %3481 = vmax.xlane.f32.xlu0 %v3480
  %v3482 = vpop.xlane.xlu0 %3481
  %v3483 = vsel %vm346, %v3456, -inf
  %3484 = vmax.xlane.f32.xlu0 %v3483
  %v3485 = vpop.xlane.xlu0 %3484
  %v3486 = vsel %vm346, %v3461, -inf
  %3487 = vmax.xlane.f32.xlu0 %v3486
  %v3488 = vpop.xlane.xlu0 %3487
  %v3489 = vsel %vm346, %v3466, -inf
  %3490 = vmax.xlane.f32.xlu0 %v3489
  %v3491 = vpop.xlane.xlu0 %3490
  %v3492 = vsel %vm346, %v3471, -inf
  %3493 = vmax.xlane.f32.xlu0 %v3492
  %v3494 = vpop.xlane.xlu0 %3493
  %v3495 = vsub.f32 %v3441, %v3476
  %v3496 = vsub.f32 %v3446, %v3479
  %v3497 = vsub.f32 %v3451, %v3482
  %v3498 = vsub.f32 %v3456, %v3485
  %v3499 = vsub.f32 %v3461, %v3488
  %v3500 = vsub.f32 %v3466, %v3491
  %v3501 = vsub.f32 %v3471, %v3494
  %v3502 = vmul.f32 %v3495, 1.442695
  %v3503 = vpow.pop %v3502
  %v3504 = vmul.f32 %v3496, 1.442695
  %v3505 = vpow.pop %v3504
  %v3506 = vmul.f32 %v3497, 1.442695
  %v3507 = vpow.pop %v3506
  %v3508 = vmul.f32 %v3498, 1.442695
  %v3509 = vpow.pop %v3508
  %v3510 = vmul.f32 %v3499, 1.442695
  %v3511 = vpow.pop %v3510
  %v3512 = vmul.f32 %v3500, 1.442695
  %v3513 = vpow.pop %v3512
  %v3514 = vmul.f32 %v3501, 1.442695
  %v3515 = vpow.pop %v3514
  %v3516 = vsel %vm346, %v3503, 0.0
  %3517 = vadd.xlane.f32.xlu0 %v3516
  %v3518 = vpop.xlane.xlu0 %3517
  %v3519 = vsel %vm346, %v3505, 0.0
  %3520 = vadd.xlane.f32.xlu0 %v3519
  %v3521 = vpop.xlane.xlu0 %3520
  %v3522 = vsel %vm346, %v3507, 0.0
  %3523 = vadd.xlane.f32.xlu0 %v3522
  %v3524 = vpop.xlane.xlu0 %3523
  %v3525 = vsel %vm346, %v3509, 0.0
  %3526 = vadd.xlane.f32.xlu0 %v3525
  %v3527 = vpop.xlane.xlu0 %3526
  %v3528 = vsel %vm346, %v3511, 0.0
  %3529 = vadd.xlane.f32.xlu0 %v3528
  %v3530 = vpop.xlane.xlu0 %3529
  %v3531 = vsel %vm346, %v3513, 0.0
  %3532 = vadd.xlane.f32.xlu0 %v3531
  %v3533 = vpop.xlane.xlu0 %3532
  %v3534 = vsel %vm346, %v3515, 0.0
  %3535 = vadd.xlane.f32.xlu0 %v3534
  %v3536 = vpop.xlane.xlu0 %3535
  %v3537 = vrcp.pop %v3518
  %v3538 = vrcp.pop %v3521
  %v3539 = vrcp.pop %v3524
  %v3540 = vrcp.pop %v3527
  %v3541 = vrcp.pop %v3530
  %v3542 = vrcp.pop %v3533
  %v3543 = vrcp.pop %v3536
  %v3544 = vmul.f32 %v3503, %v3537
  %v3545 = vmul.f32 %v3505, %v3538
  %v3546 = vmul.f32 %v3507, %v3539
  %v3547 = vmul.f32 %v3509, %v3540
  %v3548 = vmul.f32 %v3511, %v3541
  %v3549 = vmul.f32 %v3513, %v3542
  %v3550 = vmul.f32 %v3515, %v3543
  %3551 = vrot.lane.b32.xlu0 %v2542, 48
  %v3552 = vpop.permute.xlu0 %3551
  %3553 = vrot.lane.b32.xlu0 %v2547, 48
  %v3554 = vpop.permute.xlu0 %3553
  %3555 = vrot.lane.b32.xlu0 %v2552, 48
  %v3556 = vpop.permute.xlu0 %3555
  %3557 = vrot.lane.b32.xlu0 %v2557, 48
  %v3558 = vpop.permute.xlu0 %3557
  %3559 = vrot.lane.b32.xlu0 %v2562, 48
  %v3560 = vpop.permute.xlu0 %3559
  %3561 = vrot.lane.b32.xlu0 %v2567, 48
  %v3562 = vpop.permute.xlu0 %3561
  %3563 = vrot.lane.b32.xlu0 %v2572, 48
  %v3564 = vpop.permute.xlu0 %3563
  %v3573 = vsel %vm346, %v3544, 0
  %v3576 = vsel %vm346, %v3545, 0
  %v3579 = vsel %vm346, %v3546, 0
  %v3582 = vsel %vm346, %v3547, 0
  %v3585 = vsel %vm346, %v3548, 0
  %v3588 = vsel %vm346, %v3549, 0
  %v3591 = vsel %vm346, %v3550, 0
  %3593 = vmatprep.subr.mxu0 0.0
  %3594 = vmatpush1.msra.mxu0 0.0
  %3595 = vmatprep.subr.mxu0 0.0
  %3596 = vmatpush1.msra.mxu0 0.0
  %3597 = vmatprep.subr.mxu0 0.0
  %3598 = vmatpush1.msra.mxu0 0.0
  %3599 = vmatprep.subr.mxu0 0.0
  %3600 = vmatpush1.msra.mxu0 0.0
  %3601 = vmatprep.subr.mxu0 0.0
  %3602 = vmatpush1.msra.mxu0 0.0
  %3603 = vmatprep.subr.mxu0 0.0
  %3604 = vmatpush1.msra.mxu0 0.0
  %3605 = vmatprep.subr.mxu0 0.0
  %3606 = vmatpush1.msra.mxu0 0.0
  %3607 = vmatprep.subr.mxu0 0.0
  %3608 = vmatpush1.msra.mxu0 0.0
  %3609 = vmatprep.subr.mxu0 0.0
  %3610 = vmatpush1.msra.mxu0 0.0
  %3611 = vmatprep.subr.mxu0 0.0
  %3612 = vmatpush1.msra.mxu0 %v3564
  %3613 = vmatprep.subr.mxu0 0.0
  %3614 = vmatpush1.msra.mxu0 %v3562
  %3615 = vmatprep.subr.mxu0 0.0
  %3616 = vmatpush1.msra.mxu0 %v3560
  %3617 = vmatprep.subr.mxu0 0.0
  %3618 = vmatpush1.msra.mxu0 %v3558
  %3619 = vmatprep.subr.mxu0 0.0
  %3620 = vmatpush1.msra.mxu0 %v3556
  %3621 = vmatprep.subr.mxu0 0.0
  %3622 = vmatpush1.msra.mxu0 %v3554
  %3623 = vmatprep.subr.mxu0 0.0
  %3624 = vmatpush1.msra.mxu0 %v3552
  %3625 = vmatprep.subr.mxu0 0.0
  %3626 = vmatpush2.msra.mxu0 0.0
  %3627 = vmatprep.subr.mxu0 0.0
  %3628 = vmatpush2.msra.mxu0 0.0
  %3629 = vmatprep.subr.mxu0 0.0
  %3630 = vmatpush2.msra.mxu0 0.0
  %3631 = vmatprep.subr.mxu0 0.0
  %3632 = vmatpush2.msra.mxu0 0.0
  %3633 = vmatprep.subr.mxu0 0.0
  %3634 = vmatpush2.msra.mxu0 0.0
  %3635 = vmatprep.subr.mxu0 0.0
  %3636 = vmatpush2.msra.mxu0 0.0
  %3637 = vmatprep.subr.mxu0 0.0
  %3638 = vmatpush2.msra.mxu0 0.0
  %3639 = vmatprep.subr.mxu0 0.0
  %3640 = vmatpush2.msra.mxu0 0.0
  %3641 = vmatprep.subr.mxu0 0.0
  %3642 = vmatpush2.msra.mxu0 0.0
  %3643 = vmatprep.subr.mxu0 0.0
  %3644 = vmatpush2.msra.mxu0 0.0
  %3645 = vmatprep.subr.mxu0 0.0
  %3646 = vmatpush2.msra.mxu0 0.0
  %3647 = vmatprep.subr.mxu0 0.0
  %3648 = vmatpush2.msra.mxu0 0.0
  %3649 = vmatprep.subr.mxu0 0.0
  %3650 = vmatpush2.msra.mxu0 0.0
  %3651 = vmatprep.subr.mxu0 0.0
  %3652 = vmatpush2.msra.mxu0 0.0
  %3653 = vmatprep.subr.mxu0 0.0
  %3654 = vmatpush2.msra.mxu0 0.0
  %3655 = vmatprep.subr.mxu0 0.0
  %3656 = vmatpush2.msra.mxu0 0.0
  %3657 = vmatprep.mubr.f32.mxu0 0.0
  %3658 = vmatmul.mubr.f32.gmra.mxu0 %v3573
  %v3659 = vpop.f32.mrf.mxu0
  %v3660 = vadd.f32 0.0, %v3659
  %v3661 = vpop.f32.mrf.mxu0
  %3662 = vmatprep.mubr.f32.mxu0 0.0
  %3663 = vmatmul.mubr.f32.gmra.mxu0 %v3576
  %v3664 = vpop.f32.mrf.mxu0
  %v3665 = vadd.f32 0.0, %v3664
  %v3666 = vpop.f32.mrf.mxu0
  %3667 = vmatprep.mubr.f32.mxu0 0.0
  %3668 = vmatmul.mubr.f32.gmra.mxu0 %v3579
  %v3669 = vpop.f32.mrf.mxu0
  %v3670 = vadd.f32 0.0, %v3669
  %v3671 = vpop.f32.mrf.mxu0
  %3672 = vmatprep.mubr.f32.mxu0 0.0
  %3673 = vmatmul.mubr.f32.gmra.mxu0 %v3582
  %v3674 = vpop.f32.mrf.mxu0
  %v3675 = vadd.f32 0.0, %v3674
  %v3676 = vpop.f32.mrf.mxu0
  %3677 = vmatprep.mubr.f32.mxu0 0.0
  %3678 = vmatmul.mubr.f32.gmra.mxu0 %v3585
  %v3679 = vpop.f32.mrf.mxu0
  %v3680 = vadd.f32 0.0, %v3679
  %v3681 = vpop.f32.mrf.mxu0
  %3682 = vmatprep.mubr.f32.mxu0 0.0
  %3683 = vmatmul.mubr.f32.gmra.mxu0 %v3588
  %v3684 = vpop.f32.mrf.mxu0
  %v3685 = vadd.f32 0.0, %v3684
  %v3686 = vpop.f32.mrf.mxu0
  %3687 = vmatprep.mubr.f32.mxu0 0.0
  %3688 = vmatmul.mubr.f32.gmra.mxu0 %v3591
  %v3689 = vpop.f32.mrf.mxu0
  %v3690 = vadd.f32 0.0, %v3689
  %v3691 = vpop.f32.mrf.mxu0
  %3692 = vdwg.mxu0
  %3693 = vrot.lane.b32.xlu0 %v2542, 104
  %v3694 = vpop.permute.xlu0 %3693
  %3695 = vrot.lane.b32.xlu0 %v2547, 104
  %v3696 = vpop.permute.xlu0 %3695
  %3697 = vrot.lane.b32.xlu0 %v2552, 104
  %v3698 = vpop.permute.xlu0 %3697
  %3699 = vrot.lane.b32.xlu0 %v2557, 104
  %v3700 = vpop.permute.xlu0 %3699
  %3701 = vrot.lane.b32.xlu0 %v2562, 104
  %v3702 = vpop.permute.xlu0 %3701
  %3703 = vrot.lane.b32.xlu0 %v2567, 104
  %v3704 = vpop.permute.xlu0 %3703
  %3705 = vrot.lane.b32.xlu0 %v2572, 104
  %v3706 = vpop.permute.xlu0 %3705
  %3707 = vrot.lane.b32.xlu0 %v2542, 72
  %v3708 = vpop.permute.xlu0 %3707
  %3709 = vrot.lane.b32.xlu0 %v2547, 72
  %v3710 = vpop.permute.xlu0 %3709
  %3711 = vrot.lane.b32.xlu0 %v2552, 72
  %v3712 = vpop.permute.xlu0 %3711
  %3713 = vrot.lane.b32.xlu0 %v2557, 72
  %v3714 = vpop.permute.xlu0 %3713
  %3715 = vrot.lane.b32.xlu0 %v2562, 72
  %v3716 = vpop.permute.xlu0 %3715
  %3717 = vrot.lane.b32.xlu0 %v2567, 72
  %v3718 = vpop.permute.xlu0 %3717
  %3719 = vrot.lane.b32.xlu0 %v2572, 72
  %v3720 = vpop.permute.xlu0 %3719
  %v3721 = vsel %vm217, %v3694, 0
  %v3723 = vsel %vm217, %v3696, 0
  %v3725 = vsel %vm217, %v3698, 0
  %v3727 = vsel %vm217, %v3700, 0
  %v3729 = vsel %vm217, %v3702, 0
  %v3731 = vsel %vm217, %v3704, 0
  %v3733 = vsel %vm217, %v3706, 0
  %v3735 = vsel %vm217, %v3708, 0
  %v3737 = vsel %vm217, %v3710, 0
  %v3739 = vsel %vm217, %v3712, 0
  %v3741 = vsel %vm217, %v3714, 0
  %v3743 = vsel %vm217, %v3716, 0
  %v3745 = vsel %vm217, %v3718, 0
  %v3747 = vsel %vm217, %v3720, 0
  %3749 = vmatprep.subr.mxu0 0.0
  %3750 = vmatpush1.xpose.msra.mxu0 0.0
  %3751 = vmatprep.subr.mxu0 0.0
  %3752 = vmatpush1.xpose.msra.mxu0 0.0
  %3753 = vmatprep.subr.mxu0 0.0
  %3754 = vmatpush1.xpose.msra.mxu0 0.0
  %3755 = vmatprep.subr.mxu0 0.0
  %3756 = vmatpush1.xpose.msra.mxu0 0.0
  %3757 = vmatprep.subr.mxu0 0.0
  %3758 = vmatpush1.xpose.msra.mxu0 0.0
  %3759 = vmatprep.subr.mxu0 0.0
  %3760 = vmatpush1.xpose.msra.mxu0 0.0
  %3761 = vmatprep.subr.mxu0 0.0
  %3762 = vmatpush1.xpose.msra.mxu0 0.0
  %3763 = vmatprep.subr.mxu0 0.0
  %3764 = vmatpush1.xpose.msra.mxu0 0.0
  %3765 = vmatprep.subr.mxu0 0.0
  %3766 = vmatpush1.xpose.msra.mxu0 0.0
  %3767 = vmatprep.subr.mxu0 0.0
  %3768 = vmatpush1.xpose.msra.mxu0 %v3747
  %3769 = vmatprep.subr.mxu0 0.0
  %3770 = vmatpush1.xpose.msra.mxu0 %v3745
  %3771 = vmatprep.subr.mxu0 0.0
  %3772 = vmatpush1.xpose.msra.mxu0 %v3743
  %3773 = vmatprep.subr.mxu0 0.0
  %3774 = vmatpush1.xpose.msra.mxu0 %v3741
  %3775 = vmatprep.subr.mxu0 0.0
  %3776 = vmatpush1.xpose.msra.mxu0 %v3739
  %3777 = vmatprep.subr.mxu0 0.0
  %3778 = vmatpush1.xpose.msra.mxu0 %v3737
  %3779 = vmatprep.subr.mxu0 0.0
  %3780 = vmatpush1.xpose.msra.mxu0 %v3735
  %3781 = vmatprep.subr.mxu0 0.0
  %3782 = vmatpush2.xpose.msra.mxu0 0.0
  %3783 = vmatprep.subr.mxu0 0.0
  %3784 = vmatpush2.xpose.msra.mxu0 0.0
  %3785 = vmatprep.subr.mxu0 0.0
  %3786 = vmatpush2.xpose.msra.mxu0 0.0
  %3787 = vmatprep.subr.mxu0 0.0
  %3788 = vmatpush2.xpose.msra.mxu0 0.0
  %3789 = vmatprep.subr.mxu0 0.0
  %3790 = vmatpush2.xpose.msra.mxu0 0.0
  %3791 = vmatprep.subr.mxu0 0.0
  %3792 = vmatpush2.xpose.msra.mxu0 0.0
  %3793 = vmatprep.subr.mxu0 0.0
  %3794 = vmatpush2.xpose.msra.mxu0 0.0
  %3795 = vmatprep.subr.mxu0 0.0
  %3796 = vmatpush2.xpose.msra.mxu0 0.0
  %3797 = vmatprep.subr.mxu0 0.0
  %3798 = vmatpush2.xpose.msra.mxu0 0.0
  %3799 = vmatprep.subr.mxu0 0.0
  %3800 = vmatpush2.xpose.msra.mxu0 0.0
  %3801 = vmatprep.subr.mxu0 0.0
  %3802 = vmatpush2.xpose.msra.mxu0 0.0
  %3803 = vmatprep.subr.mxu0 0.0
  %3804 = vmatpush2.xpose.msra.mxu0 0.0
  %3805 = vmatprep.subr.mxu0 0.0
  %3806 = vmatpush2.xpose.msra.mxu0 0.0
  %3807 = vmatprep.subr.mxu0 0.0
  %3808 = vmatpush2.xpose.msra.mxu0 0.0
  %3809 = vmatprep.subr.mxu0 0.0
  %3810 = vmatpush2.xpose.msra.mxu0 0.0
  %3811 = vmatprep.subr.mxu0 0.0
  %3812 = vmatpush2.xpose.msra.mxu0 0.0
  %3813 = vmatprep.mubr.f32.mxu0 0.0
  %3814 = vmatmul.mubr.f32.gmra.mxu0 %v3721
  %v3815 = vpop.f32.mrf.mxu0
  %v3816 = vadd.f32 %v51, %v3815
  %v3817 = vpop.f32.mrf.mxu0
  %3818 = vmatprep.mubr.f32.mxu0 0.0
  %3819 = vmatmul.mubr.f32.gmra.mxu0 %v3723
  %v3820 = vpop.f32.mrf.mxu0
  %v3821 = vadd.f32 %v52, %v3820
  %v3822 = vpop.f32.mrf.mxu0
  %3823 = vmatprep.mubr.f32.mxu0 0.0
  %3824 = vmatmul.mubr.f32.gmra.mxu0 %v3725
  %v3825 = vpop.f32.mrf.mxu0
  %v3826 = vadd.f32 %v53, %v3825
  %v3827 = vpop.f32.mrf.mxu0
  %3828 = vmatprep.mubr.f32.mxu0 0.0
  %3829 = vmatmul.mubr.f32.gmra.mxu0 %v3727
  %v3830 = vpop.f32.mrf.mxu0
  %v3831 = vadd.f32 %v54, %v3830
  %v3832 = vpop.f32.mrf.mxu0
  %3833 = vmatprep.mubr.f32.mxu0 0.0
  %3834 = vmatmul.mubr.f32.gmra.mxu0 %v3729
  %v3835 = vpop.f32.mrf.mxu0
  %v3836 = vadd.f32 %v55, %v3835
  %v3837 = vpop.f32.mrf.mxu0
  %3838 = vmatprep.mubr.f32.mxu0 0.0
  %3839 = vmatmul.mubr.f32.gmra.mxu0 %v3731
  %v3840 = vpop.f32.mrf.mxu0
  %v3841 = vadd.f32 %v56, %v3840
  %v3842 = vpop.f32.mrf.mxu0
  %3843 = vmatprep.mubr.f32.mxu0 0.0
  %3844 = vmatmul.mubr.f32.gmra.mxu0 %v3733
  %v3845 = vpop.f32.mrf.mxu0
  %v3846 = vadd.f32 %v57, %v3845
  %v3847 = vpop.f32.mrf.mxu0
  %3848 = vdwg.mxu0
  %v3849 = vsel %vm346, %v3816, -inf
  %3850 = vmax.xlane.f32.xlu0 %v3849
  %v3851 = vpop.xlane.xlu0 %3850
  %v3852 = vsel %vm346, %v3821, -inf
  %3853 = vmax.xlane.f32.xlu0 %v3852
  %v3854 = vpop.xlane.xlu0 %3853
  %v3855 = vsel %vm346, %v3826, -inf
  %3856 = vmax.xlane.f32.xlu0 %v3855
  %v3857 = vpop.xlane.xlu0 %3856
  %v3858 = vsel %vm346, %v3831, -inf
  %3859 = vmax.xlane.f32.xlu0 %v3858
  %v3860 = vpop.xlane.xlu0 %3859
  %v3861 = vsel %vm346, %v3836, -inf
  %3862 = vmax.xlane.f32.xlu0 %v3861
  %v3863 = vpop.xlane.xlu0 %3862
  %v3864 = vsel %vm346, %v3841, -inf
  %3865 = vmax.xlane.f32.xlu0 %v3864
  %v3866 = vpop.xlane.xlu0 %3865
  %v3867 = vsel %vm346, %v3846, -inf
  %3868 = vmax.xlane.f32.xlu0 %v3867
  %v3869 = vpop.xlane.xlu0 %3868
  %v3870 = vsub.f32 %v3816, %v3851
  %v3871 = vsub.f32 %v3821, %v3854
  %v3872 = vsub.f32 %v3826, %v3857
  %v3873 = vsub.f32 %v3831, %v3860
  %v3874 = vsub.f32 %v3836, %v3863
  %v3875 = vsub.f32 %v3841, %v3866
  %v3876 = vsub.f32 %v3846, %v3869
  %v3877 = vmul.f32 %v3870, 1.442695
  %v3878 = vpow.pop %v3877
  %v3879 = vmul.f32 %v3871, 1.442695
  %v3880 = vpow.pop %v3879
  %v3881 = vmul.f32 %v3872, 1.442695
  %v3882 = vpow.pop %v3881
  %v3883 = vmul.f32 %v3873, 1.442695
  %v3884 = vpow.pop %v3883
  %v3885 = vmul.f32 %v3874, 1.442695
  %v3886 = vpow.pop %v3885
  %v3887 = vmul.f32 %v3875, 1.442695
  %v3888 = vpow.pop %v3887
  %v3889 = vmul.f32 %v3876, 1.442695
  %v3890 = vpow.pop %v3889
  %v3891 = vsel %vm346, %v3878, 0.0
  %3892 = vadd.xlane.f32.xlu0 %v3891
  %v3893 = vpop.xlane.xlu0 %3892
  %v3894 = vsel %vm346, %v3880, 0.0
  %3895 = vadd.xlane.f32.xlu0 %v3894
  %v3896 = vpop.xlane.xlu0 %3895
  %v3897 = vsel %vm346, %v3882, 0.0
  %3898 = vadd.xlane.f32.xlu0 %v3897
  %v3899 = vpop.xlane.xlu0 %3898
  %v3900 = vsel %vm346, %v3884, 0.0
  %3901 = vadd.xlane.f32.xlu0 %v3900
  %v3902 = vpop.xlane.xlu0 %3901
  %v3903 = vsel %vm346, %v3886, 0.0
  %3904 = vadd.xlane.f32.xlu0 %v3903
  %v3905 = vpop.xlane.xlu0 %3904
  %v3906 = vsel %vm346, %v3888, 0.0
  %3907 = vadd.xlane.f32.xlu0 %v3906
  %v3908 = vpop.xlane.xlu0 %3907
  %v3909 = vsel %vm346, %v3890, 0.0
  %3910 = vadd.xlane.f32.xlu0 %v3909
  %v3911 = vpop.xlane.xlu0 %3910
  %v3912 = vrcp.pop %v3893
  %v3913 = vrcp.pop %v3896
  %v3914 = vrcp.pop %v3899
  %v3915 = vrcp.pop %v3902
  %v3916 = vrcp.pop %v3905
  %v3917 = vrcp.pop %v3908
  %v3918 = vrcp.pop %v3911
  %v3919 = vmul.f32 %v3878, %v3912
  %v3920 = vmul.f32 %v3880, %v3913
  %v3921 = vmul.f32 %v3882, %v3914
  %v3922 = vmul.f32 %v3884, %v3915
  %v3923 = vmul.f32 %v3886, %v3916
  %v3924 = vmul.f32 %v3888, %v3917
  %v3925 = vmul.f32 %v3890, %v3918
  %3926 = vrot.lane.b32.xlu0 %v2542, 40
  %v3927 = vpop.permute.xlu0 %3926
  %3928 = vrot.lane.b32.xlu0 %v2547, 40
  %v3929 = vpop.permute.xlu0 %3928
  %3930 = vrot.lane.b32.xlu0 %v2552, 40
  %v3931 = vpop.permute.xlu0 %3930
  %3932 = vrot.lane.b32.xlu0 %v2557, 40
  %v3933 = vpop.permute.xlu0 %3932
  %3934 = vrot.lane.b32.xlu0 %v2562, 40
  %v3935 = vpop.permute.xlu0 %3934
  %3936 = vrot.lane.b32.xlu0 %v2567, 40
  %v3937 = vpop.permute.xlu0 %3936
  %3938 = vrot.lane.b32.xlu0 %v2572, 40
  %v3939 = vpop.permute.xlu0 %3938
  %v3948 = vsel %vm346, %v3919, 0
  %v3951 = vsel %vm346, %v3920, 0
  %v3954 = vsel %vm346, %v3921, 0
  %v3957 = vsel %vm346, %v3922, 0
  %v3960 = vsel %vm346, %v3923, 0
  %v3963 = vsel %vm346, %v3924, 0
  %v3966 = vsel %vm346, %v3925, 0
  %3968 = vmatprep.subr.mxu0 0.0
  %3969 = vmatpush1.msra.mxu0 0.0
  %3970 = vmatprep.subr.mxu0 0.0
  %3971 = vmatpush1.msra.mxu0 0.0
  %3972 = vmatprep.subr.mxu0 0.0
  %3973 = vmatpush1.msra.mxu0 0.0
  %3974 = vmatprep.subr.mxu0 0.0
  %3975 = vmatpush1.msra.mxu0 0.0
  %3976 = vmatprep.subr.mxu0 0.0
  %3977 = vmatpush1.msra.mxu0 0.0
  %3978 = vmatprep.subr.mxu0 0.0
  %3979 = vmatpush1.msra.mxu0 0.0
  %3980 = vmatprep.subr.mxu0 0.0
  %3981 = vmatpush1.msra.mxu0 0.0
  %3982 = vmatprep.subr.mxu0 0.0
  %3983 = vmatpush1.msra.mxu0 0.0
  %3984 = vmatprep.subr.mxu0 0.0
  %3985 = vmatpush1.msra.mxu0 0.0
  %3986 = vmatprep.subr.mxu0 0.0
  %3987 = vmatpush1.msra.mxu0 %v3939
  %3988 = vmatprep.subr.mxu0 0.0
  %3989 = vmatpush1.msra.mxu0 %v3937
  %3990 = vmatprep.subr.mxu0 0.0
  %3991 = vmatpush1.msra.mxu0 %v3935
  %3992 = vmatprep.subr.mxu0 0.0
  %3993 = vmatpush1.msra.mxu0 %v3933
  %3994 = vmatprep.subr.mxu0 0.0
  %3995 = vmatpush1.msra.mxu0 %v3931
  %3996 = vmatprep.subr.mxu0 0.0
  %3997 = vmatpush1.msra.mxu0 %v3929
  %3998 = vmatprep.subr.mxu0 0.0
  %3999 = vmatpush1.msra.mxu0 %v3927
  %4000 = vmatprep.subr.mxu0 0.0
  %4001 = vmatpush2.msra.mxu0 0.0
  %4002 = vmatprep.subr.mxu0 0.0
  %4003 = vmatpush2.msra.mxu0 0.0
  %4004 = vmatprep.subr.mxu0 0.0
  %4005 = vmatpush2.msra.mxu0 0.0
  %4006 = vmatprep.subr.mxu0 0.0
  %4007 = vmatpush2.msra.mxu0 0.0
  %4008 = vmatprep.subr.mxu0 0.0
  %4009 = vmatpush2.msra.mxu0 0.0
  %4010 = vmatprep.subr.mxu0 0.0
  %4011 = vmatpush2.msra.mxu0 0.0
  %4012 = vmatprep.subr.mxu0 0.0
  %4013 = vmatpush2.msra.mxu0 0.0
  %4014 = vmatprep.subr.mxu0 0.0
  %4015 = vmatpush2.msra.mxu0 0.0
  %4016 = vmatprep.subr.mxu0 0.0
  %4017 = vmatpush2.msra.mxu0 0.0
  %4018 = vmatprep.subr.mxu0 0.0
  %4019 = vmatpush2.msra.mxu0 0.0
  %4020 = vmatprep.subr.mxu0 0.0
  %4021 = vmatpush2.msra.mxu0 0.0
  %4022 = vmatprep.subr.mxu0 0.0
  %4023 = vmatpush2.msra.mxu0 0.0
  %4024 = vmatprep.subr.mxu0 0.0
  %4025 = vmatpush2.msra.mxu0 0.0
  %4026 = vmatprep.subr.mxu0 0.0
  %4027 = vmatpush2.msra.mxu0 0.0
  %4028 = vmatprep.subr.mxu0 0.0
  %4029 = vmatpush2.msra.mxu0 0.0
  %4030 = vmatprep.subr.mxu0 0.0
  %4031 = vmatpush2.msra.mxu0 0.0
  %4032 = vmatprep.mubr.f32.mxu0 0.0
  %4033 = vmatmul.mubr.f32.gmra.mxu0 %v3948
  %v4034 = vpop.f32.mrf.mxu0
  %v4035 = vadd.f32 0.0, %v4034
  %v4036 = vpop.f32.mrf.mxu0
  %4037 = vmatprep.mubr.f32.mxu0 0.0
  %4038 = vmatmul.mubr.f32.gmra.mxu0 %v3951
  %v4039 = vpop.f32.mrf.mxu0
  %v4040 = vadd.f32 0.0, %v4039
  %v4041 = vpop.f32.mrf.mxu0
  %4042 = vmatprep.mubr.f32.mxu0 0.0
  %4043 = vmatmul.mubr.f32.gmra.mxu0 %v3954
  %v4044 = vpop.f32.mrf.mxu0
  %v4045 = vadd.f32 0.0, %v4044
  %v4046 = vpop.f32.mrf.mxu0
  %4047 = vmatprep.mubr.f32.mxu0 0.0
  %4048 = vmatmul.mubr.f32.gmra.mxu0 %v3957
  %v4049 = vpop.f32.mrf.mxu0
  %v4050 = vadd.f32 0.0, %v4049
  %v4051 = vpop.f32.mrf.mxu0
  %4052 = vmatprep.mubr.f32.mxu0 0.0
  %4053 = vmatmul.mubr.f32.gmra.mxu0 %v3960
  %v4054 = vpop.f32.mrf.mxu0
  %v4055 = vadd.f32 0.0, %v4054
  %v4056 = vpop.f32.mrf.mxu0
  %4057 = vmatprep.mubr.f32.mxu0 0.0
  %4058 = vmatmul.mubr.f32.gmra.mxu0 %v3963
  %v4059 = vpop.f32.mrf.mxu0
  %v4060 = vadd.f32 0.0, %v4059
  %v4061 = vpop.f32.mrf.mxu0
  %4062 = vmatprep.mubr.f32.mxu0 0.0
  %4063 = vmatmul.mubr.f32.gmra.mxu0 %v3966
  %v4064 = vpop.f32.mrf.mxu0
  %v4065 = vadd.f32 0.0, %v4064
  %v4066 = vpop.f32.mrf.mxu0
  %4067 = vdwg.mxu0
  %4075 = vrot.lane.b32.xlu0 %v3285, 8
  %v4076 = vpop.permute.xlu0 %4075
  %4077 = vrot.lane.b32.xlu0 %v3290, 8
  %v4078 = vpop.permute.xlu0 %4077
  %4079 = vrot.lane.b32.xlu0 %v3295, 8
  %v4080 = vpop.permute.xlu0 %4079
  %4081 = vrot.lane.b32.xlu0 %v3300, 8
  %v4082 = vpop.permute.xlu0 %4081
  %4083 = vrot.lane.b32.xlu0 %v3305, 8
  %v4084 = vpop.permute.xlu0 %4083
  %4085 = vrot.lane.b32.xlu0 %v3310, 8
  %v4086 = vpop.permute.xlu0 %4085
  %4087 = vrot.lane.b32.xlu0 %v3315, 8
  %v4088 = vpop.permute.xlu0 %4087
  %4103 = vrot.lane.b32.xlu0 %v3660, 16
  %v4104 = vpop.permute.xlu0 %4103
  %4105 = vrot.lane.b32.xlu0 %v3665, 16
  %v4106 = vpop.permute.xlu0 %4105
  %4107 = vrot.lane.b32.xlu0 %v3670, 16
  %v4108 = vpop.permute.xlu0 %4107
  %4109 = vrot.lane.b32.xlu0 %v3675, 16
  %v4110 = vpop.permute.xlu0 %4109
  %4111 = vrot.lane.b32.xlu0 %v3680, 16
  %v4112 = vpop.permute.xlu0 %4111
  %4113 = vrot.lane.b32.xlu0 %v3685, 16
  %v4114 = vpop.permute.xlu0 %4113
  %4115 = vrot.lane.b32.xlu0 %v3690, 16
  %v4116 = vpop.permute.xlu0 %4115
  %4131 = vrot.lane.b32.xlu0 %v4035, 24
  %v4132 = vpop.permute.xlu0 %4131
  %4133 = vrot.lane.b32.xlu0 %v4040, 24
  %v4134 = vpop.permute.xlu0 %4133
  %4135 = vrot.lane.b32.xlu0 %v4045, 24
  %v4136 = vpop.permute.xlu0 %4135
  %4137 = vrot.lane.b32.xlu0 %v4050, 24
  %v4138 = vpop.permute.xlu0 %4137
  %4139 = vrot.lane.b32.xlu0 %v4055, 24
  %v4140 = vpop.permute.xlu0 %4139
  %4141 = vrot.lane.b32.xlu0 %v4060, 24
  %v4142 = vpop.permute.xlu0 %4141
  %4143 = vrot.lane.b32.xlu0 %v4065, 24
  %v4144 = vpop.permute.xlu0 %4143
  %v4152 = vsel %vm217, %v2910, %v4076
  %v4153 = vsel %vm217, %v2915, %v4078
  %v4154 = vsel %vm217, %v2920, %v4080
  %v4155 = vsel %vm217, %v2925, %v4082
  %v4156 = vsel %vm217, %v2930, %v4084
  %v4157 = vsel %vm217, %v2935, %v4086
  %v4158 = vsel %vm217, %v2940, %v4088
  %v4159 = vsel %vm1782, %v4152, %v4104
  %v4160 = vsel %vm1782, %v4153, %v4106
  %v4161 = vsel %vm1782, %v4154, %v4108
  %v4162 = vsel %vm1782, %v4155, %v4110
  %v4163 = vsel %vm1782, %v4156, %v4112
  %v4164 = vsel %vm1782, %v4157, %v4114
  %v4165 = vsel %vm1782, %v4158, %v4116
  %v4166 = vsel %vm1790, %v4159, %v4132
  %v4167 = vsel %vm1790, %v4160, %v4134
  %v4168 = vsel %vm1790, %v4161, %v4136
  %v4169 = vsel %vm1790, %v4162, %v4138
  %v4170 = vsel %vm1790, %v4163, %v4140
  %v4171 = vsel %vm1790, %v4164, %v4142
  %v4172 = vsel %vm1790, %v4165, %v4144
  %v4173 = vld [vmem:[%s8] sm:$0xff]
  %v4174 = vld [vmem:[%s8 + $0x8] sm:$0xff]
  %v4175 = vld [vmem:[%s8 + $0x10] sm:$0xff]
  %v4176 = vld [vmem:[%s8 + $0x18] sm:$0xff]
  %v4177 = vlaneseq
  %v4178 = vshrl.u32 %v4177, 7
  %v4179 = vsub.s32 0, %v4178
  %v4180 = vrot.slane %v2439, %v4179
  %v4182 = vsel %vm74, %v4166, 0
  %v4185 = vsel %vm74, %v4167, 0
  %v4188 = vsel %vm74, %v4168, 0
  %v4191 = vsel %vm74, %v4169, 0
  %v4194 = vsel %vm74, %v4170, 0
  %v4197 = vsel %vm74, %v4171, 0
  %v4200 = vsel %vm74, %v4172, 0
  %4202 = vmatprep.subr.mxu0 0.0
  %4203 = vmatpush1.msra.mxu0 0.0
  %4204 = vmatprep.subr.mxu0 0.0
  %4205 = vmatpush1.msra.mxu0 0.0
  %4206 = vmatprep.subr.mxu0 0.0
  %4207 = vmatpush1.msra.mxu0 0.0
  %4208 = vmatprep.subr.mxu0 0.0
  %4209 = vmatpush1.msra.mxu0 0.0
  %4210 = vmatprep.subr.mxu0 0.0
  %4211 = vmatpush1.msra.mxu0 0.0
  %4212 = vmatprep.subr.mxu0 0.0
  %4213 = vmatpush1.msra.mxu0 0.0
  %4214 = vmatprep.subr.mxu0 0.0
  %4215 = vmatpush1.msra.mxu0 0.0
  %4216 = vmatprep.subr.mxu0 0.0
  %4217 = vmatpush1.msra.mxu0 0.0
  %4218 = vmatprep.subr.mxu0 0.0
  %4219 = vmatpush1.msra.mxu0 0.0
  %4220 = vmatprep.subr.mxu0 0.0
  %4221 = vmatpush1.msra.mxu0 0.0
  %4222 = vmatprep.subr.mxu0 0.0
  %4223 = vmatpush1.msra.mxu0 0.0
  %4224 = vmatprep.subr.mxu0 0.0
  %4225 = vmatpush1.msra.mxu0 0.0
  %4226 = vmatprep.subr.mxu0 0.0
  %4227 = vmatpush1.msra.mxu0 %v4176
  %4228 = vmatprep.subr.mxu0 0.0
  %4229 = vmatpush1.msra.mxu0 %v4175
  %4230 = vmatprep.subr.mxu0 0.0
  %4231 = vmatpush1.msra.mxu0 %v4174
  %4232 = vmatprep.subr.mxu0 0.0
  %4233 = vmatpush1.msra.mxu0 %v4173
  %4234 = vmatprep.subr.mxu0 0.0
  %4235 = vmatpush2.msra.mxu0 0.0
  %4236 = vmatprep.subr.mxu0 0.0
  %4237 = vmatpush2.msra.mxu0 0.0
  %4238 = vmatprep.subr.mxu0 0.0
  %4239 = vmatpush2.msra.mxu0 0.0
  %4240 = vmatprep.subr.mxu0 0.0
  %4241 = vmatpush2.msra.mxu0 0.0
  %4242 = vmatprep.subr.mxu0 0.0
  %4243 = vmatpush2.msra.mxu0 0.0
  %4244 = vmatprep.subr.mxu0 0.0
  %4245 = vmatpush2.msra.mxu0 0.0
  %4246 = vmatprep.subr.mxu0 0.0
  %4247 = vmatpush2.msra.mxu0 0.0
  %4248 = vmatprep.subr.mxu0 0.0
  %4249 = vmatpush2.msra.mxu0 0.0
  %4250 = vmatprep.subr.mxu0 0.0
  %4251 = vmatpush2.msra.mxu0 0.0
  %4252 = vmatprep.subr.mxu0 0.0
  %4253 = vmatpush2.msra.mxu0 0.0
  %4254 = vmatprep.subr.mxu0 0.0
  %4255 = vmatpush2.msra.mxu0 0.0
  %4256 = vmatprep.subr.mxu0 0.0
  %4257 = vmatpush2.msra.mxu0 0.0
  %4258 = vmatprep.subr.mxu0 0.0
  %4259 = vmatpush2.msra.mxu0 0.0
  %4260 = vmatprep.subr.mxu0 0.0
  %4261 = vmatpush2.msra.mxu0 0.0
  %4262 = vmatprep.subr.mxu0 0.0
  %4263 = vmatpush2.msra.mxu0 0.0
  %4264 = vmatprep.subr.mxu0 0.0
  %4265 = vmatpush2.msra.mxu0 0.0
  %4266 = vmatprep.mubr.f32.mxu0 0.0
  %4267 = vmatmul.mubr.f32.gmra.mxu0 %v4182
  %v4268 = vpop.f32.mrf.mxu0
  %v4269 = vadd.f32 %v4180, %v4268
  %v4270 = vpop.f32.mrf.mxu0
  %4271 = vmatprep.mubr.f32.mxu0 0.0
  %4272 = vmatmul.mubr.f32.gmra.mxu0 %v4185
  %v4273 = vpop.f32.mrf.mxu0
  %v4274 = vadd.f32 %v4180, %v4273
  %v4275 = vpop.f32.mrf.mxu0
  %4276 = vmatprep.mubr.f32.mxu0 0.0
  %4277 = vmatmul.mubr.f32.gmra.mxu0 %v4188
  %v4278 = vpop.f32.mrf.mxu0
  %v4279 = vadd.f32 %v4180, %v4278
  %v4280 = vpop.f32.mrf.mxu0
  %4281 = vmatprep.mubr.f32.mxu0 0.0
  %4282 = vmatmul.mubr.f32.gmra.mxu0 %v4191
  %v4283 = vpop.f32.mrf.mxu0
  %v4284 = vadd.f32 %v4180, %v4283
  %v4285 = vpop.f32.mrf.mxu0
  %4286 = vmatprep.mubr.f32.mxu0 0.0
  %4287 = vmatmul.mubr.f32.gmra.mxu0 %v4194
  %v4288 = vpop.f32.mrf.mxu0
  %v4289 = vadd.f32 %v4180, %v4288
  %v4290 = vpop.f32.mrf.mxu0
  %4291 = vmatprep.mubr.f32.mxu0 0.0
  %4292 = vmatmul.mubr.f32.gmra.mxu0 %v4197
  %v4293 = vpop.f32.mrf.mxu0
  %v4294 = vadd.f32 %v4180, %v4293
  %v4295 = vpop.f32.mrf.mxu0
  %4296 = vmatprep.mubr.f32.mxu0 0.0
  %4297 = vmatmul.mubr.f32.gmra.mxu0 %v4200
  %v4298 = vpop.f32.mrf.mxu0
  %v4299 = vadd.f32 %v4180, %v4298
  %v4300 = vpop.f32.mrf.mxu0
  %4301 = vdwg.mxu0
  %v4302 = vadd.f32 %v2431, %v4269
  %v4303 = vadd.f32 %v2432, %v4274
  %v4304 = vadd.f32 %v2433, %v4279
  %v4305 = vadd.f32 %v2434, %v4284
  %v4306 = vadd.f32 %v2435, %v4289
  %v4307 = vadd.f32 %v2436, %v4294
  %v4308 = vadd.f32 %v2437, %v4299
  %v4309 = vsel %vm74, %v4302, 0.0
  %4310 = vadd.xlane.f32.xlu0 %v4309
  %v4311 = vpop.xlane.xlu0 %4310
  %v4312 = vsel %vm74, %v4303, 0.0
  %4313 = vadd.xlane.f32.xlu0 %v4312
  %v4314 = vpop.xlane.xlu0 %4313
  %v4315 = vsel %vm74, %v4304, 0.0
  %4316 = vadd.xlane.f32.xlu0 %v4315
  %v4317 = vpop.xlane.xlu0 %4316
  %v4318 = vsel %vm74, %v4305, 0.0
  %4319 = vadd.xlane.f32.xlu0 %v4318
  %v4320 = vpop.xlane.xlu0 %4319
  %v4321 = vsel %vm74, %v4306, 0.0
  %4322 = vadd.xlane.f32.xlu0 %v4321
  %v4323 = vpop.xlane.xlu0 %4322
  %v4324 = vsel %vm74, %v4307, 0.0
  %4325 = vadd.xlane.f32.xlu0 %v4324
  %v4326 = vpop.xlane.xlu0 %4325
  %v4327 = vsel %vm74, %v4308, 0.0
  %4328 = vadd.xlane.f32.xlu0 %v4327
  %v4329 = vpop.xlane.xlu0 %4328
  %v4330 = vmul.f32 %v4311, %v1955
  %v4331 = vmul.f32 %v4314, %v1955
  %v4332 = vmul.f32 %v4317, %v1955
  %v4333 = vmul.f32 %v4320, %v1955
  %v4334 = vmul.f32 %v4323, %v1955
  %v4335 = vmul.f32 %v4326, %v1955
  %v4336 = vmul.f32 %v4329, %v1955
  %v4337 = vsub.f32 %v4302, %v4330
  %v4338 = vsub.f32 %v4303, %v4331
  %v4339 = vsub.f32 %v4304, %v4332
  %v4340 = vsub.f32 %v4305, %v4333
  %v4341 = vsub.f32 %v4306, %v4334
  %v4342 = vsub.f32 %v4307, %v4335
  %v4343 = vsub.f32 %v4308, %v4336
  %v4344 = vmul.f32 %v4337, %v4337
  %v4345 = vmul.f32 %v4338, %v4338
  %v4346 = vmul.f32 %v4339, %v4339
  %v4347 = vmul.f32 %v4340, %v4340
  %v4348 = vmul.f32 %v4341, %v4341
  %v4349 = vmul.f32 %v4342, %v4342
  %v4350 = vmul.f32 %v4343, %v4343
  %v4351 = vsel %vm74, %v4344, 0.0
  %4352 = vadd.xlane.f32.xlu0 %v4351
  %v4353 = vpop.xlane.xlu0 %4352
  %v4354 = vsel %vm74, %v4345, 0.0
  %4355 = vadd.xlane.f32.xlu0 %v4354
  %v4356 = vpop.xlane.xlu0 %4355
  %v4357 = vsel %vm74, %v4346, 0.0
  %4358 = vadd.xlane.f32.xlu0 %v4357
  %v4359 = vpop.xlane.xlu0 %4358
  %v4360 = vsel %vm74, %v4347, 0.0
  %4361 = vadd.xlane.f32.xlu0 %v4360
  %v4362 = vpop.xlane.xlu0 %4361
  %v4363 = vsel %vm74, %v4348, 0.0
  %4364 = vadd.xlane.f32.xlu0 %v4363
  %v4365 = vpop.xlane.xlu0 %4364
  %v4366 = vsel %vm74, %v4349, 0.0
  %4367 = vadd.xlane.f32.xlu0 %v4366
  %v4368 = vpop.xlane.xlu0 %4367
  %v4369 = vsel %vm74, %v4350, 0.0
  %4370 = vadd.xlane.f32.xlu0 %v4369
  %v4371 = vpop.xlane.xlu0 %4370
  %v4372 = vmul.f32 %v4353, %v1955
  %v4373 = vmul.f32 %v4356, %v1955
  %v4374 = vmul.f32 %v4359, %v1955
  %v4375 = vmul.f32 %v4362, %v1955
  %v4376 = vmul.f32 %v4365, %v1955
  %v4377 = vmul.f32 %v4368, %v1955
  %v4378 = vmul.f32 %v4371, %v1955
  %v4379 = vadd.f32 %v4372, 1e-05
  %v4380 = vadd.f32 %v4373, 1e-05
  %v4381 = vadd.f32 %v4374, 1e-05
  %v4382 = vadd.f32 %v4375, 1e-05
  %v4383 = vadd.f32 %v4376, 1e-05
  %v4384 = vadd.f32 %v4377, 1e-05
  %v4385 = vadd.f32 %v4378, 1e-05
  %v4386 = vrsqrt.pop %v4379
  %v4387 = vrsqrt.pop %v4380
  %v4388 = vrsqrt.pop %v4381
  %v4389 = vrsqrt.pop %v4382
  %v4390 = vrsqrt.pop %v4383
  %v4391 = vrsqrt.pop %v4384
  %v4392 = vrsqrt.pop %v4385
  %v4393 = vmul.f32 %v4337, %v4386
  %v4394 = vmul.f32 %v4338, %v4387
  %v4395 = vmul.f32 %v4339, %v4388
  %v4396 = vmul.f32 %v4340, %v4389
  %v4397 = vmul.f32 %v4341, %v4390
  %v4398 = vmul.f32 %v4342, %v4391
  %v4399 = vmul.f32 %v4343, %v4392
  %v4400 = vlaneseq
  %v4401 = vshrl.u32 %v4400, 7
  %v4402 = vsub.s32 0, %v4401
  %v4403 = vrot.slane %v2440, %v4402
  %v4404 = vmul.f32 %v4393, %v4403
  %v4405 = vmul.f32 %v4394, %v4403
  %v4406 = vmul.f32 %v4395, %v4403
  %v4407 = vmul.f32 %v4396, %v4403
  %v4408 = vmul.f32 %v4397, %v4403
  %v4409 = vmul.f32 %v4398, %v4403
  %v4410 = vmul.f32 %v4399, %v4403
  %v4411 = vlaneseq
  %v4412 = vshrl.u32 %v4411, 7
  %v4413 = vsub.s32 0, %v4412
  %v4414 = vrot.slane %v2441, %v4413
  %v4415 = vadd.f32 %v4404, %v4414
  %v4416 = vadd.f32 %v4405, %v4414
  %v4417 = vadd.f32 %v4406, %v4414
  %v4418 = vadd.f32 %v4407, %v4414
  %v4419 = vadd.f32 %v4408, %v4414
  %v4420 = vadd.f32 %v4409, %v4414
  %v4421 = vadd.f32 %v4410, %v4414
  %v4422 = vld [vmem:[%s9] sm:$0xff]
  %v4423 = vld [vmem:[%s9 + $0x8] sm:$0xff]
  %v4424 = vld [vmem:[%s9 + $0x10] sm:$0xff]
  %v4425 = vld [vmem:[%s9 + $0x18] sm:$0xff]
  %v4426 = vlaneseq
  %v4427 = vshrl.u32 %v4426, 7
  %v4428 = vsub.s32 0, %v4427
  %v4429 = vrot.slane %v2442, %v4428
  %v4431 = vsel %vm74, %v4415, 0
  %v4434 = vsel %vm74, %v4416, 0
  %v4437 = vsel %vm74, %v4417, 0
  %v4440 = vsel %vm74, %v4418, 0
  %v4443 = vsel %vm74, %v4419, 0
  %v4446 = vsel %vm74, %v4420, 0
  %v4449 = vsel %vm74, %v4421, 0
  %4451 = vmatprep.subr.mxu0 0.0
  %4452 = vmatpush1.msra.mxu0 0.0
  %4453 = vmatprep.subr.mxu0 0.0
  %4454 = vmatpush1.msra.mxu0 0.0
  %4455 = vmatprep.subr.mxu0 0.0
  %4456 = vmatpush1.msra.mxu0 0.0
  %4457 = vmatprep.subr.mxu0 0.0
  %4458 = vmatpush1.msra.mxu0 0.0
  %4459 = vmatprep.subr.mxu0 0.0
  %4460 = vmatpush1.msra.mxu0 0.0
  %4461 = vmatprep.subr.mxu0 0.0
  %4462 = vmatpush1.msra.mxu0 0.0
  %4463 = vmatprep.subr.mxu0 0.0
  %4464 = vmatpush1.msra.mxu0 0.0
  %4465 = vmatprep.subr.mxu0 0.0
  %4466 = vmatpush1.msra.mxu0 0.0
  %4467 = vmatprep.subr.mxu0 0.0
  %4468 = vmatpush1.msra.mxu0 0.0
  %4469 = vmatprep.subr.mxu0 0.0
  %4470 = vmatpush1.msra.mxu0 0.0
  %4471 = vmatprep.subr.mxu0 0.0
  %4472 = vmatpush1.msra.mxu0 0.0
  %4473 = vmatprep.subr.mxu0 0.0
  %4474 = vmatpush1.msra.mxu0 0.0
  %4475 = vmatprep.subr.mxu0 0.0
  %4476 = vmatpush1.msra.mxu0 %v4425
  %4477 = vmatprep.subr.mxu0 0.0
  %4478 = vmatpush1.msra.mxu0 %v4424
  %4479 = vmatprep.subr.mxu0 0.0
  %4480 = vmatpush1.msra.mxu0 %v4423
  %4481 = vmatprep.subr.mxu0 0.0
  %4482 = vmatpush1.msra.mxu0 %v4422
  %4483 = vmatprep.subr.mxu0 0.0
  %4484 = vmatpush2.msra.mxu0 0.0
  %4485 = vmatprep.subr.mxu0 0.0
  %4486 = vmatpush2.msra.mxu0 0.0
  %4487 = vmatprep.subr.mxu0 0.0
  %4488 = vmatpush2.msra.mxu0 0.0
  %4489 = vmatprep.subr.mxu0 0.0
  %4490 = vmatpush2.msra.mxu0 0.0
  %4491 = vmatprep.subr.mxu0 0.0
  %4492 = vmatpush2.msra.mxu0 0.0
  %4493 = vmatprep.subr.mxu0 0.0
  %4494 = vmatpush2.msra.mxu0 0.0
  %4495 = vmatprep.subr.mxu0 0.0
  %4496 = vmatpush2.msra.mxu0 0.0
  %4497 = vmatprep.subr.mxu0 0.0
  %4498 = vmatpush2.msra.mxu0 0.0
  %4499 = vmatprep.subr.mxu0 0.0
  %4500 = vmatpush2.msra.mxu0 0.0
  %4501 = vmatprep.subr.mxu0 0.0
  %4502 = vmatpush2.msra.mxu0 0.0
  %4503 = vmatprep.subr.mxu0 0.0
  %4504 = vmatpush2.msra.mxu0 0.0
  %4505 = vmatprep.subr.mxu0 0.0
  %4506 = vmatpush2.msra.mxu0 0.0
  %4507 = vmatprep.subr.mxu0 0.0
  %4508 = vmatpush2.msra.mxu0 0.0
  %4509 = vmatprep.subr.mxu0 0.0
  %4510 = vmatpush2.msra.mxu0 0.0
  %4511 = vmatprep.subr.mxu0 0.0
  %4512 = vmatpush2.msra.mxu0 0.0
  %4513 = vmatprep.subr.mxu0 0.0
  %4514 = vmatpush2.msra.mxu0 0.0
  %4515 = vmatprep.mubr.f32.mxu0 0.0
  %4516 = vmatmul.mubr.f32.gmra.mxu0 %v4431
  %v4517 = vpop.f32.mrf.mxu0
  %v4518 = vadd.f32 %v4429, %v4517
  %v4519 = vpop.f32.mrf.mxu0
  %4520 = vmatprep.mubr.f32.mxu0 0.0
  %4521 = vmatmul.mubr.f32.gmra.mxu0 %v4434
  %v4522 = vpop.f32.mrf.mxu0
  %v4523 = vadd.f32 %v4429, %v4522
  %v4524 = vpop.f32.mrf.mxu0
  %4525 = vmatprep.mubr.f32.mxu0 0.0
  %4526 = vmatmul.mubr.f32.gmra.mxu0 %v4437
  %v4527 = vpop.f32.mrf.mxu0
  %v4528 = vadd.f32 %v4429, %v4527
  %v4529 = vpop.f32.mrf.mxu0
  %4530 = vmatprep.mubr.f32.mxu0 0.0
  %4531 = vmatmul.mubr.f32.gmra.mxu0 %v4440
  %v4532 = vpop.f32.mrf.mxu0
  %v4533 = vadd.f32 %v4429, %v4532
  %v4534 = vpop.f32.mrf.mxu0
  %4535 = vmatprep.mubr.f32.mxu0 0.0
  %4536 = vmatmul.mubr.f32.gmra.mxu0 %v4443
  %v4537 = vpop.f32.mrf.mxu0
  %v4538 = vadd.f32 %v4429, %v4537
  %v4539 = vpop.f32.mrf.mxu0
  %4540 = vmatprep.mubr.f32.mxu0 0.0
  %4541 = vmatmul.mubr.f32.gmra.mxu0 %v4446
  %v4542 = vpop.f32.mrf.mxu0
  %v4543 = vadd.f32 %v4429, %v4542
  %v4544 = vpop.f32.mrf.mxu0
  %4545 = vmatprep.mubr.f32.mxu0 0.0
  %4546 = vmatmul.mubr.f32.gmra.mxu0 %v4449
  %v4547 = vpop.f32.mrf.mxu0
  %v4548 = vadd.f32 %v4429, %v4547
  %v4549 = vpop.f32.mrf.mxu0
  %4550 = vdwg.mxu0
  %v4551 = vmax.f32 %v4518, 0.0
  %v4552 = vmax.f32 %v4523, 0.0
  %v4553 = vmax.f32 %v4528, 0.0
  %v4554 = vmax.f32 %v4533, 0.0
  %v4555 = vmax.f32 %v4538, 0.0
  %v4556 = vmax.f32 %v4543, 0.0
  %v4557 = vmax.f32 %v4548, 0.0
  %v4558 = vld [vmem:[%s10] sm:$0xff]
  %v4559 = vld [vmem:[%s10 + $0x8] sm:$0xff]
  %v4560 = vld [vmem:[%s10 + $0x10] sm:$0xff]
  %v4561 = vld [vmem:[%s10 + $0x18] sm:$0xff]
  %v4562 = vld [vmem:[%s10 + $0x20] sm:$0xff]
  %v4563 = vld [vmem:[%s10 + $0x28] sm:$0xff]
  %v4564 = vld [vmem:[%s10 + $0x30] sm:$0xff]
  %v4565 = vld [vmem:[%s10 + $0x38] sm:$0xff]
  %v4566 = vlaneseq
  %v4567 = vshrl.u32 %v4566, 7
  %v4568 = vsub.s32 0, %v4567
  %v4569 = vrot.slane %v2443, %v4568
  %v4571 = vsel %vm2196, %v4551, 0
  %v4574 = vsel %vm2196, %v4552, 0
  %v4577 = vsel %vm2196, %v4553, 0
  %v4580 = vsel %vm2196, %v4554, 0
  %v4583 = vsel %vm2196, %v4555, 0
  %v4586 = vsel %vm2196, %v4556, 0
  %v4589 = vsel %vm2196, %v4557, 0
  %4591 = vmatprep.subr.mxu0 0.0
  %4592 = vmatpush1.msra.mxu0 0.0
  %4593 = vmatprep.subr.mxu0 0.0
  %4594 = vmatpush1.msra.mxu0 0.0
  %4595 = vmatprep.subr.mxu0 0.0
  %4596 = vmatpush1.msra.mxu0 0.0
  %4597 = vmatprep.subr.mxu0 0.0
  %4598 = vmatpush1.msra.mxu0 0.0
  %4599 = vmatprep.subr.mxu0 0.0
  %4600 = vmatpush1.msra.mxu0 0.0
  %4601 = vmatprep.subr.mxu0 0.0
  %4602 = vmatpush1.msra.mxu0 0.0
  %4603 = vmatprep.subr.mxu0 0.0
  %4604 = vmatpush1.msra.mxu0 0.0
  %4605 = vmatprep.subr.mxu0 0.0
  %4606 = vmatpush1.msra.mxu0 0.0
  %4607 = vmatprep.subr.mxu0 0.0
  %4608 = vmatpush1.msra.mxu0 %v4565
  %4609 = vmatprep.subr.mxu0 0.0
  %4610 = vmatpush1.msra.mxu0 %v4564
  %4611 = vmatprep.subr.mxu0 0.0
  %4612 = vmatpush1.msra.mxu0 %v4563
  %4613 = vmatprep.subr.mxu0 0.0
  %4614 = vmatpush1.msra.mxu0 %v4562
  %4615 = vmatprep.subr.mxu0 0.0
  %4616 = vmatpush1.msra.mxu0 %v4561
  %4617 = vmatprep.subr.mxu0 0.0
  %4618 = vmatpush1.msra.mxu0 %v4560
  %4619 = vmatprep.subr.mxu0 0.0
  %4620 = vmatpush1.msra.mxu0 %v4559
  %4621 = vmatprep.subr.mxu0 0.0
  %4622 = vmatpush1.msra.mxu0 %v4558
  %4623 = vmatprep.subr.mxu0 0.0
  %4624 = vmatpush2.msra.mxu0 0.0
  %4625 = vmatprep.subr.mxu0 0.0
  %4626 = vmatpush2.msra.mxu0 0.0
  %4627 = vmatprep.subr.mxu0 0.0
  %4628 = vmatpush2.msra.mxu0 0.0
  %4629 = vmatprep.subr.mxu0 0.0
  %4630 = vmatpush2.msra.mxu0 0.0
  %4631 = vmatprep.subr.mxu0 0.0
  %4632 = vmatpush2.msra.mxu0 0.0
  %4633 = vmatprep.subr.mxu0 0.0
  %4634 = vmatpush2.msra.mxu0 0.0
  %4635 = vmatprep.subr.mxu0 0.0
  %4636 = vmatpush2.msra.mxu0 0.0
  %4637 = vmatprep.subr.mxu0 0.0
  %4638 = vmatpush2.msra.mxu0 0.0
  %4639 = vmatprep.subr.mxu0 0.0
  %4640 = vmatpush2.msra.mxu0 0.0
  %4641 = vmatprep.subr.mxu0 0.0
  %4642 = vmatpush2.msra.mxu0 0.0
  %4643 = vmatprep.subr.mxu0 0.0
  %4644 = vmatpush2.msra.mxu0 0.0
  %4645 = vmatprep.subr.mxu0 0.0
  %4646 = vmatpush2.msra.mxu0 0.0
  %4647 = vmatprep.subr.mxu0 0.0
  %4648 = vmatpush2.msra.mxu0 0.0
  %4649 = vmatprep.subr.mxu0 0.0
  %4650 = vmatpush2.msra.mxu0 0.0
  %4651 = vmatprep.subr.mxu0 0.0
  %4652 = vmatpush2.msra.mxu0 0.0
  %4653 = vmatprep.subr.mxu0 0.0
  %4654 = vmatpush2.msra.mxu0 0.0
  %4655 = vmatprep.mubr.f32.mxu0 0.0
  %4656 = vmatmul.mubr.f32.gmra.mxu0 %v4571
  %v4657 = vpop.f32.mrf.mxu0
  %v4658 = vadd.f32 %v4569, %v4657
  %v4659 = vpop.f32.mrf.mxu0
  %4660 = vmatprep.mubr.f32.mxu0 0.0
  %4661 = vmatmul.mubr.f32.gmra.mxu0 %v4574
  %v4662 = vpop.f32.mrf.mxu0
  %v4663 = vadd.f32 %v4569, %v4662
  %v4664 = vpop.f32.mrf.mxu0
  %4665 = vmatprep.mubr.f32.mxu0 0.0
  %4666 = vmatmul.mubr.f32.gmra.mxu0 %v4577
  %v4667 = vpop.f32.mrf.mxu0
  %v4668 = vadd.f32 %v4569, %v4667
  %v4669 = vpop.f32.mrf.mxu0
  %4670 = vmatprep.mubr.f32.mxu0 0.0
  %4671 = vmatmul.mubr.f32.gmra.mxu0 %v4580
  %v4672 = vpop.f32.mrf.mxu0
  %v4673 = vadd.f32 %v4569, %v4672
  %v4674 = vpop.f32.mrf.mxu0
  %4675 = vmatprep.mubr.f32.mxu0 0.0
  %4676 = vmatmul.mubr.f32.gmra.mxu0 %v4583
  %v4677 = vpop.f32.mrf.mxu0
  %v4678 = vadd.f32 %v4569, %v4677
  %v4679 = vpop.f32.mrf.mxu0
  %4680 = vmatprep.mubr.f32.mxu0 0.0
  %4681 = vmatmul.mubr.f32.gmra.mxu0 %v4586
  %v4682 = vpop.f32.mrf.mxu0
  %v4683 = vadd.f32 %v4569, %v4682
  %v4684 = vpop.f32.mrf.mxu0
  %4685 = vmatprep.mubr.f32.mxu0 0.0
  %4686 = vmatmul.mubr.f32.gmra.mxu0 %v4589
  %v4687 = vpop.f32.mrf.mxu0
  %v4688 = vadd.f32 %v4569, %v4687
  %v4689 = vpop.f32.mrf.mxu0
  %4690 = vdwg.mxu0
  %v4691 = vadd.f32 %v4415, %v4658
  %v4692 = vadd.f32 %v4416, %v4663
  %v4693 = vadd.f32 %v4417, %v4668
  %v4694 = vadd.f32 %v4418, %v4673
  %v4695 = vadd.f32 %v4419, %v4678
  %v4696 = vadd.f32 %v4420, %v4683
  %v4697 = vadd.f32 %v4421, %v4688
  %v4698 = vsel %vm74, %v4691, 0.0
  %4699 = vadd.xlane.f32.xlu0 %v4698
  %v4700 = vpop.xlane.xlu0 %4699
  %v4701 = vsel %vm74, %v4692, 0.0
  %4702 = vadd.xlane.f32.xlu0 %v4701
  %v4703 = vpop.xlane.xlu0 %4702
  %v4704 = vsel %vm74, %v4693, 0.0
  %4705 = vadd.xlane.f32.xlu0 %v4704
  %v4706 = vpop.xlane.xlu0 %4705
  %v4707 = vsel %vm74, %v4694, 0.0
  %4708 = vadd.xlane.f32.xlu0 %v4707
  %v4709 = vpop.xlane.xlu0 %4708
  %v4710 = vsel %vm74, %v4695, 0.0
  %4711 = vadd.xlane.f32.xlu0 %v4710
  %v4712 = vpop.xlane.xlu0 %4711
  %v4713 = vsel %vm74, %v4696, 0.0
  %4714 = vadd.xlane.f32.xlu0 %v4713
  %v4715 = vpop.xlane.xlu0 %4714
  %v4716 = vsel %vm74, %v4697, 0.0
  %4717 = vadd.xlane.f32.xlu0 %v4716
  %v4718 = vpop.xlane.xlu0 %4717
  %v4719 = vmul.f32 %v4700, %v1955
  %v4720 = vmul.f32 %v4703, %v1955
  %v4721 = vmul.f32 %v4706, %v1955
  %v4722 = vmul.f32 %v4709, %v1955
  %v4723 = vmul.f32 %v4712, %v1955
  %v4724 = vmul.f32 %v4715, %v1955
  %v4725 = vmul.f32 %v4718, %v1955
  %v4726 = vsub.f32 %v4691, %v4719
  %v4727 = vsub.f32 %v4692, %v4720
  %v4728 = vsub.f32 %v4693, %v4721
  %v4729 = vsub.f32 %v4694, %v4722
  %v4730 = vsub.f32 %v4695, %v4723
  %v4731 = vsub.f32 %v4696, %v4724
  %v4732 = vsub.f32 %v4697, %v4725
  %v4733 = vmul.f32 %v4726, %v4726
  %v4734 = vmul.f32 %v4727, %v4727
  %v4735 = vmul.f32 %v4728, %v4728
  %v4736 = vmul.f32 %v4729, %v4729
  %v4737 = vmul.f32 %v4730, %v4730
  %v4738 = vmul.f32 %v4731, %v4731
  %v4739 = vmul.f32 %v4732, %v4732
  %v4740 = vsel %vm74, %v4733, 0.0
  %4741 = vadd.xlane.f32.xlu0 %v4740
  %v4742 = vpop.xlane.xlu0 %4741
  %v4743 = vsel %vm74, %v4734, 0.0
  %4744 = vadd.xlane.f32.xlu0 %v4743
  %v4745 = vpop.xlane.xlu0 %4744
  %v4746 = vsel %vm74, %v4735, 0.0
  %4747 = vadd.xlane.f32.xlu0 %v4746
  %v4748 = vpop.xlane.xlu0 %4747
  %v4749 = vsel %vm74, %v4736, 0.0
  %4750 = vadd.xlane.f32.xlu0 %v4749
  %v4751 = vpop.xlane.xlu0 %4750
  %v4752 = vsel %vm74, %v4737, 0.0
  %4753 = vadd.xlane.f32.xlu0 %v4752
  %v4754 = vpop.xlane.xlu0 %4753
  %v4755 = vsel %vm74, %v4738, 0.0
  %4756 = vadd.xlane.f32.xlu0 %v4755
  %v4757 = vpop.xlane.xlu0 %4756
  %v4758 = vsel %vm74, %v4739, 0.0
  %4759 = vadd.xlane.f32.xlu0 %v4758
  %v4760 = vpop.xlane.xlu0 %4759
  %v4761 = vmul.f32 %v4742, %v1955
  %v4762 = vmul.f32 %v4745, %v1955
  %v4763 = vmul.f32 %v4748, %v1955
  %v4764 = vmul.f32 %v4751, %v1955
  %v4765 = vmul.f32 %v4754, %v1955
  %v4766 = vmul.f32 %v4757, %v1955
  %v4767 = vmul.f32 %v4760, %v1955
  %v4768 = vadd.f32 %v4761, 1e-05
  %v4769 = vadd.f32 %v4762, 1e-05
  %v4770 = vadd.f32 %v4763, 1e-05
  %v4771 = vadd.f32 %v4764, 1e-05
  %v4772 = vadd.f32 %v4765, 1e-05
  %v4773 = vadd.f32 %v4766, 1e-05
  %v4774 = vadd.f32 %v4767, 1e-05
  %v4775 = vrsqrt.pop %v4768
  %v4776 = vrsqrt.pop %v4769
  %v4777 = vrsqrt.pop %v4770
  %v4778 = vrsqrt.pop %v4771
  %v4779 = vrsqrt.pop %v4772
  %v4780 = vrsqrt.pop %v4773
  %v4781 = vrsqrt.pop %v4774
  %v4782 = vmul.f32 %v4726, %v4775
  %v4783 = vmul.f32 %v4727, %v4776
  %v4784 = vmul.f32 %v4728, %v4777
  %v4785 = vmul.f32 %v4729, %v4778
  %v4786 = vmul.f32 %v4730, %v4779
  %v4787 = vmul.f32 %v4731, %v4780
  %v4788 = vmul.f32 %v4732, %v4781
  %v4789 = vlaneseq
  %v4790 = vshrl.u32 %v4789, 7
  %v4791 = vsub.s32 0, %v4790
  %v4792 = vrot.slane %v2444, %v4791
  %v4793 = vmul.f32 %v4782, %v4792
  %v4794 = vmul.f32 %v4783, %v4792
  %v4795 = vmul.f32 %v4784, %v4792
  %v4796 = vmul.f32 %v4785, %v4792
  %v4797 = vmul.f32 %v4786, %v4792
  %v4798 = vmul.f32 %v4787, %v4792
  %v4799 = vmul.f32 %v4788, %v4792
  %v4800 = vlaneseq
  %v4801 = vshrl.u32 %v4800, 7
  %v4802 = vsub.s32 0, %v4801
  %v4803 = vrot.slane %v2445, %v4802
  %v4804 = vadd.f32 %v4793, %v4803
  %v4805 = vadd.f32 %v4794, %v4803
  %v4806 = vadd.f32 %v4795, %v4803
  %v4807 = vadd.f32 %v4796, %v4803
  %v4808 = vadd.f32 %v4797, %v4803
  %v4809 = vadd.f32 %v4798, %v4803
  %v4810 = vadd.f32 %v4799, %v4803
  %v4811 = vld [vmem:[%s2 + $0x10] sm:$0x1]
  %v4812 = vld [vmem:[%s2 + $0x11] sm:$0x1]
  %v4813 = vld [vmem:[%s11] sm:$0xff]
  %v4814 = vld [vmem:[%s11 + $0x8] sm:$0xff]
  %v4815 = vld [vmem:[%s11 + $0x10] sm:$0xff]
  %v4816 = vld [vmem:[%s11 + $0x18] sm:$0xff]
  %v4817 = vld [vmem:[%s11 + $0x20] sm:$0xff]
  %v4818 = vld [vmem:[%s11 + $0x28] sm:$0xff]
  %v4819 = vld [vmem:[%s11 + $0x30] sm:$0xff]
  %v4820 = vld [vmem:[%s11 + $0x38] sm:$0xff]
  %v4822 = vsel %vm74, %v4805, 0
  %4824 = vmatprep.subr.mxu0 0.0
  %4825 = vmatpush1.msra.mxu0 0.0
  %4826 = vmatprep.subr.mxu0 0.0
  %4827 = vmatpush1.msra.mxu0 0.0
  %4828 = vmatprep.subr.mxu0 0.0
  %4829 = vmatpush1.msra.mxu0 0.0
  %4830 = vmatprep.subr.mxu0 0.0
  %4831 = vmatpush1.msra.mxu0 0.0
  %4832 = vmatprep.subr.mxu0 0.0
  %4833 = vmatpush1.msra.mxu0 0.0
  %4834 = vmatprep.subr.mxu0 0.0
  %4835 = vmatpush1.msra.mxu0 0.0
  %4836 = vmatprep.subr.mxu0 0.0
  %4837 = vmatpush1.msra.mxu0 0.0
  %4838 = vmatprep.subr.mxu0 0.0
  %4839 = vmatpush1.msra.mxu0 0.0
  %4840 = vmatprep.subr.mxu0 0.0
  %4841 = vmatpush1.msra.mxu0 0.0
  %4842 = vmatprep.subr.mxu0 0.0
  %4843 = vmatpush1.msra.mxu0 0.0
  %4844 = vmatprep.subr.mxu0 0.0
  %4845 = vmatpush1.msra.mxu0 0.0
  %4846 = vmatprep.subr.mxu0 0.0
  %4847 = vmatpush1.msra.mxu0 0.0
  %4848 = vmatprep.subr.mxu0 0.0
  %4849 = vmatpush1.msra.mxu0 %v4820
  %4850 = vmatprep.subr.mxu0 0.0
  %4851 = vmatpush1.msra.mxu0 %v4819
  %4852 = vmatprep.subr.mxu0 0.0
  %4853 = vmatpush1.msra.mxu0 %v4818
  %4854 = vmatprep.subr.mxu0 0.0
  %4855 = vmatpush1.msra.mxu0 %v4817
  %4856 = vmatprep.subr.mxu0 0.0
  %4857 = vmatpush2.msra.mxu0 0.0
  %4858 = vmatprep.subr.mxu0 0.0
  %4859 = vmatpush2.msra.mxu0 0.0
  %4860 = vmatprep.subr.mxu0 0.0
  %4861 = vmatpush2.msra.mxu0 0.0
  %4862 = vmatprep.subr.mxu0 0.0
  %4863 = vmatpush2.msra.mxu0 0.0
  %4864 = vmatprep.subr.mxu0 0.0
  %4865 = vmatpush2.msra.mxu0 0.0
  %4866 = vmatprep.subr.mxu0 0.0
  %4867 = vmatpush2.msra.mxu0 0.0
  %4868 = vmatprep.subr.mxu0 0.0
  %4869 = vmatpush2.msra.mxu0 0.0
  %4870 = vmatprep.subr.mxu0 0.0
  %4871 = vmatpush2.msra.mxu0 0.0
  %4872 = vmatprep.subr.mxu0 0.0
  %4873 = vmatpush2.msra.mxu0 0.0
  %4874 = vmatprep.subr.mxu0 0.0
  %4875 = vmatpush2.msra.mxu0 0.0
  %4876 = vmatprep.subr.mxu0 0.0
  %4877 = vmatpush2.msra.mxu0 0.0
  %4878 = vmatprep.subr.mxu0 0.0
  %4879 = vmatpush2.msra.mxu0 0.0
  %4880 = vmatprep.subr.mxu0 0.0
  %4881 = vmatpush2.msra.mxu0 0.0
  %4882 = vmatprep.subr.mxu0 0.0
  %4883 = vmatpush2.msra.mxu0 0.0
  %4884 = vmatprep.subr.mxu0 0.0
  %4885 = vmatpush2.msra.mxu0 0.0
  %4886 = vmatprep.subr.mxu0 0.0
  %4887 = vmatpush2.msra.mxu0 0.0
  %4888 = vmatprep.mubr.f32.mxu0 0.0
  %4889 = vmatmul.mubr.f32.gmra.mxu0 %v4822
  %v4890 = vpop.f32.mrf.mxu0
  %v4891 = vadd.f32 0.0, %v4890
  %v4892 = vpop.f32.mrf.mxu0
  %4893 = vdwg.mxu0
  %v4895 = vsel %vm74, %v4804, 0
  %4897 = vmatprep.subr.mxu0 0.0
  %4898 = vmatpush1.msra.mxu0 0.0
  %4899 = vmatprep.subr.mxu0 0.0
  %4900 = vmatpush1.msra.mxu0 0.0
  %4901 = vmatprep.subr.mxu0 0.0
  %4902 = vmatpush1.msra.mxu0 0.0
  %4903 = vmatprep.subr.mxu0 0.0
  %4904 = vmatpush1.msra.mxu0 0.0
  %4905 = vmatprep.subr.mxu0 0.0
  %4906 = vmatpush1.msra.mxu0 0.0
  %4907 = vmatprep.subr.mxu0 0.0
  %4908 = vmatpush1.msra.mxu0 0.0
  %4909 = vmatprep.subr.mxu0 0.0
  %4910 = vmatpush1.msra.mxu0 0.0
  %4911 = vmatprep.subr.mxu0 0.0
  %4912 = vmatpush1.msra.mxu0 0.0
  %4913 = vmatprep.subr.mxu0 0.0
  %4914 = vmatpush1.msra.mxu0 0.0
  %4915 = vmatprep.subr.mxu0 0.0
  %4916 = vmatpush1.msra.mxu0 0.0
  %4917 = vmatprep.subr.mxu0 0.0
  %4918 = vmatpush1.msra.mxu0 0.0
  %4919 = vmatprep.subr.mxu0 0.0
  %4920 = vmatpush1.msra.mxu0 0.0
  %4921 = vmatprep.subr.mxu0 0.0
  %4922 = vmatpush1.msra.mxu0 %v4816
  %4923 = vmatprep.subr.mxu0 0.0
  %4924 = vmatpush1.msra.mxu0 %v4815
  %4925 = vmatprep.subr.mxu0 0.0
  %4926 = vmatpush1.msra.mxu0 %v4814
  %4927 = vmatprep.subr.mxu0 0.0
  %4928 = vmatpush1.msra.mxu0 %v4813
  %4929 = vmatprep.subr.mxu0 0.0
  %4930 = vmatpush2.msra.mxu0 0.0
  %4931 = vmatprep.subr.mxu0 0.0
  %4932 = vmatpush2.msra.mxu0 0.0
  %4933 = vmatprep.subr.mxu0 0.0
  %4934 = vmatpush2.msra.mxu0 0.0
  %4935 = vmatprep.subr.mxu0 0.0
  %4936 = vmatpush2.msra.mxu0 0.0
  %4937 = vmatprep.subr.mxu0 0.0
  %4938 = vmatpush2.msra.mxu0 0.0
  %4939 = vmatprep.subr.mxu0 0.0
  %4940 = vmatpush2.msra.mxu0 0.0
  %4941 = vmatprep.subr.mxu0 0.0
  %4942 = vmatpush2.msra.mxu0 0.0
  %4943 = vmatprep.subr.mxu0 0.0
  %4944 = vmatpush2.msra.mxu0 0.0
  %4945 = vmatprep.subr.mxu0 0.0
  %4946 = vmatpush2.msra.mxu0 0.0
  %4947 = vmatprep.subr.mxu0 0.0
  %4948 = vmatpush2.msra.mxu0 0.0
  %4949 = vmatprep.subr.mxu0 0.0
  %4950 = vmatpush2.msra.mxu0 0.0
  %4951 = vmatprep.subr.mxu0 0.0
  %4952 = vmatpush2.msra.mxu0 0.0
  %4953 = vmatprep.subr.mxu0 0.0
  %4954 = vmatpush2.msra.mxu0 0.0
  %4955 = vmatprep.subr.mxu0 0.0
  %4956 = vmatpush2.msra.mxu0 0.0
  %4957 = vmatprep.subr.mxu0 0.0
  %4958 = vmatpush2.msra.mxu0 0.0
  %4959 = vmatprep.subr.mxu0 0.0
  %4960 = vmatpush2.msra.mxu0 0.0
  %4961 = vmatprep.mubr.f32.mxu0 0.0
  %4962 = vmatmul.mubr.f32.gmra.mxu0 %v4895
  %v4963 = vpop.f32.mrf.mxu0
  %v4964 = vadd.f32 %v4891, %v4963
  %v4965 = vpop.f32.mrf.mxu0
  %4966 = vdwg.mxu0
  %v4967 = vld [vmem:[%s11 + $0x40] sm:$0xff]
  %v4968 = vld [vmem:[%s11 + $0x48] sm:$0xff]
  %v4969 = vld [vmem:[%s11 + $0x50] sm:$0xff]
  %v4970 = vld [vmem:[%s11 + $0x58] sm:$0xff]
  %v4972 = vsel %vm74, %v4806, 0
  %4974 = vmatprep.subr.mxu0 0.0
  %4975 = vmatpush1.msra.mxu0 0.0
  %4976 = vmatprep.subr.mxu0 0.0
  %4977 = vmatpush1.msra.mxu0 0.0
  %4978 = vmatprep.subr.mxu0 0.0
  %4979 = vmatpush1.msra.mxu0 0.0
  %4980 = vmatprep.subr.mxu0 0.0
  %4981 = vmatpush1.msra.mxu0 0.0
  %4982 = vmatprep.subr.mxu0 0.0
  %4983 = vmatpush1.msra.mxu0 0.0
  %4984 = vmatprep.subr.mxu0 0.0
  %4985 = vmatpush1.msra.mxu0 0.0
  %4986 = vmatprep.subr.mxu0 0.0
  %4987 = vmatpush1.msra.mxu0 0.0
  %4988 = vmatprep.subr.mxu0 0.0
  %4989 = vmatpush1.msra.mxu0 0.0
  %4990 = vmatprep.subr.mxu0 0.0
  %4991 = vmatpush1.msra.mxu0 0.0
  %4992 = vmatprep.subr.mxu0 0.0
  %4993 = vmatpush1.msra.mxu0 0.0
  %4994 = vmatprep.subr.mxu0 0.0
  %4995 = vmatpush1.msra.mxu0 0.0
  %4996 = vmatprep.subr.mxu0 0.0
  %4997 = vmatpush1.msra.mxu0 0.0
  %4998 = vmatprep.subr.mxu0 0.0
  %4999 = vmatpush1.msra.mxu0 %v4970
  %5000 = vmatprep.subr.mxu0 0.0
  %5001 = vmatpush1.msra.mxu0 %v4969
  %5002 = vmatprep.subr.mxu0 0.0
  %5003 = vmatpush1.msra.mxu0 %v4968
  %5004 = vmatprep.subr.mxu0 0.0
  %5005 = vmatpush1.msra.mxu0 %v4967
  %5006 = vmatprep.subr.mxu0 0.0
  %5007 = vmatpush2.msra.mxu0 0.0
  %5008 = vmatprep.subr.mxu0 0.0
  %5009 = vmatpush2.msra.mxu0 0.0
  %5010 = vmatprep.subr.mxu0 0.0
  %5011 = vmatpush2.msra.mxu0 0.0
  %5012 = vmatprep.subr.mxu0 0.0
  %5013 = vmatpush2.msra.mxu0 0.0
  %5014 = vmatprep.subr.mxu0 0.0
  %5015 = vmatpush2.msra.mxu0 0.0
  %5016 = vmatprep.subr.mxu0 0.0
  %5017 = vmatpush2.msra.mxu0 0.0
  %5018 = vmatprep.subr.mxu0 0.0
  %5019 = vmatpush2.msra.mxu0 0.0
  %5020 = vmatprep.subr.mxu0 0.0
  %5021 = vmatpush2.msra.mxu0 0.0
  %5022 = vmatprep.subr.mxu0 0.0
  %5023 = vmatpush2.msra.mxu0 0.0
  %5024 = vmatprep.subr.mxu0 0.0
  %5025 = vmatpush2.msra.mxu0 0.0
  %5026 = vmatprep.subr.mxu0 0.0
  %5027 = vmatpush2.msra.mxu0 0.0
  %5028 = vmatprep.subr.mxu0 0.0
  %5029 = vmatpush2.msra.mxu0 0.0
  %5030 = vmatprep.subr.mxu0 0.0
  %5031 = vmatpush2.msra.mxu0 0.0
  %5032 = vmatprep.subr.mxu0 0.0
  %5033 = vmatpush2.msra.mxu0 0.0
  %5034 = vmatprep.subr.mxu0 0.0
  %5035 = vmatpush2.msra.mxu0 0.0
  %5036 = vmatprep.subr.mxu0 0.0
  %5037 = vmatpush2.msra.mxu0 0.0
  %5038 = vmatprep.mubr.f32.mxu0 0.0
  %5039 = vmatmul.mubr.f32.gmra.mxu0 %v4972
  %v5040 = vpop.f32.mrf.mxu0
  %v5041 = vadd.f32 0.0, %v5040
  %v5042 = vpop.f32.mrf.mxu0
  %5043 = vdwg.mxu0
  %v5044 = vadd.f32 %v4964, %v5041
  %v5045 = vld [vmem:[%s11 + $0x60] sm:$0xff]
  %v5046 = vld [vmem:[%s11 + $0x68] sm:$0xff]
  %v5047 = vld [vmem:[%s11 + $0x70] sm:$0xff]
  %v5048 = vld [vmem:[%s11 + $0x78] sm:$0xff]
  %v5050 = vsel %vm74, %v4807, 0
  %5052 = vmatprep.subr.mxu0 0.0
  %5053 = vmatpush1.msra.mxu0 0.0
  %5054 = vmatprep.subr.mxu0 0.0
  %5055 = vmatpush1.msra.mxu0 0.0
  %5056 = vmatprep.subr.mxu0 0.0
  %5057 = vmatpush1.msra.mxu0 0.0
  %5058 = vmatprep.subr.mxu0 0.0
  %5059 = vmatpush1.msra.mxu0 0.0
  %5060 = vmatprep.subr.mxu0 0.0
  %5061 = vmatpush1.msra.mxu0 0.0
  %5062 = vmatprep.subr.mxu0 0.0
  %5063 = vmatpush1.msra.mxu0 0.0
  %5064 = vmatprep.subr.mxu0 0.0
  %5065 = vmatpush1.msra.mxu0 0.0
  %5066 = vmatprep.subr.mxu0 0.0
  %5067 = vmatpush1.msra.mxu0 0.0
  %5068 = vmatprep.subr.mxu0 0.0
  %5069 = vmatpush1.msra.mxu0 0.0
  %5070 = vmatprep.subr.mxu0 0.0
  %5071 = vmatpush1.msra.mxu0 0.0
  %5072 = vmatprep.subr.mxu0 0.0
  %5073 = vmatpush1.msra.mxu0 0.0
  %5074 = vmatprep.subr.mxu0 0.0
  %5075 = vmatpush1.msra.mxu0 0.0
  %5076 = vmatprep.subr.mxu0 0.0
  %5077 = vmatpush1.msra.mxu0 %v5048
  %5078 = vmatprep.subr.mxu0 0.0
  %5079 = vmatpush1.msra.mxu0 %v5047
  %5080 = vmatprep.subr.mxu0 0.0
  %5081 = vmatpush1.msra.mxu0 %v5046
  %5082 = vmatprep.subr.mxu0 0.0
  %5083 = vmatpush1.msra.mxu0 %v5045
  %5084 = vmatprep.subr.mxu0 0.0
  %5085 = vmatpush2.msra.mxu0 0.0
  %5086 = vmatprep.subr.mxu0 0.0
  %5087 = vmatpush2.msra.mxu0 0.0
  %5088 = vmatprep.subr.mxu0 0.0
  %5089 = vmatpush2.msra.mxu0 0.0
  %5090 = vmatprep.subr.mxu0 0.0
  %5091 = vmatpush2.msra.mxu0 0.0
  %5092 = vmatprep.subr.mxu0 0.0
  %5093 = vmatpush2.msra.mxu0 0.0
  %5094 = vmatprep.subr.mxu0 0.0
  %5095 = vmatpush2.msra.mxu0 0.0
  %5096 = vmatprep.subr.mxu0 0.0
  %5097 = vmatpush2.msra.mxu0 0.0
  %5098 = vmatprep.subr.mxu0 0.0
  %5099 = vmatpush2.msra.mxu0 0.0
  %5100 = vmatprep.subr.mxu0 0.0
  %5101 = vmatpush2.msra.mxu0 0.0
  %5102 = vmatprep.subr.mxu0 0.0
  %5103 = vmatpush2.msra.mxu0 0.0
  %5104 = vmatprep.subr.mxu0 0.0
  %5105 = vmatpush2.msra.mxu0 0.0
  %5106 = vmatprep.subr.mxu0 0.0
  %5107 = vmatpush2.msra.mxu0 0.0
  %5108 = vmatprep.subr.mxu0 0.0
  %5109 = vmatpush2.msra.mxu0 0.0
  %5110 = vmatprep.subr.mxu0 0.0
  %5111 = vmatpush2.msra.mxu0 0.0
  %5112 = vmatprep.subr.mxu0 0.0
  %5113 = vmatpush2.msra.mxu0 0.0
  %5114 = vmatprep.subr.mxu0 0.0
  %5115 = vmatpush2.msra.mxu0 0.0
  %5116 = vmatprep.mubr.f32.mxu0 0.0
  %5117 = vmatmul.mubr.f32.gmra.mxu0 %v5050
  %v5118 = vpop.f32.mrf.mxu0
  %v5119 = vadd.f32 0.0, %v5118
  %v5120 = vpop.f32.mrf.mxu0
  %5121 = vdwg.mxu0
  %v5122 = vadd.f32 %v5044, %v5119
  %v5123 = vld [vmem:[%s11 + $0x80] sm:$0xff]
  %v5124 = vld [vmem:[%s11 + $0x88] sm:$0xff]
  %v5125 = vld [vmem:[%s11 + $0x90] sm:$0xff]
  %v5126 = vld [vmem:[%s11 + $0x98] sm:$0xff]
  %v5128 = vsel %vm74, %v4808, 0
  %5130 = vmatprep.subr.mxu0 0.0
  %5131 = vmatpush1.msra.mxu0 0.0
  %5132 = vmatprep.subr.mxu0 0.0
  %5133 = vmatpush1.msra.mxu0 0.0
  %5134 = vmatprep.subr.mxu0 0.0
  %5135 = vmatpush1.msra.mxu0 0.0
  %5136 = vmatprep.subr.mxu0 0.0
  %5137 = vmatpush1.msra.mxu0 0.0
  %5138 = vmatprep.subr.mxu0 0.0
  %5139 = vmatpush1.msra.mxu0 0.0
  %5140 = vmatprep.subr.mxu0 0.0
  %5141 = vmatpush1.msra.mxu0 0.0
  %5142 = vmatprep.subr.mxu0 0.0
  %5143 = vmatpush1.msra.mxu0 0.0
  %5144 = vmatprep.subr.mxu0 0.0
  %5145 = vmatpush1.msra.mxu0 0.0
  %5146 = vmatprep.subr.mxu0 0.0
  %5147 = vmatpush1.msra.mxu0 0.0
  %5148 = vmatprep.subr.mxu0 0.0
  %5149 = vmatpush1.msra.mxu0 0.0
  %5150 = vmatprep.subr.mxu0 0.0
  %5151 = vmatpush1.msra.mxu0 0.0
  %5152 = vmatprep.subr.mxu0 0.0
  %5153 = vmatpush1.msra.mxu0 0.0
  %5154 = vmatprep.subr.mxu0 0.0
  %5155 = vmatpush1.msra.mxu0 %v5126
  %5156 = vmatprep.subr.mxu0 0.0
  %5157 = vmatpush1.msra.mxu0 %v5125
  %5158 = vmatprep.subr.mxu0 0.0
  %5159 = vmatpush1.msra.mxu0 %v5124
  %5160 = vmatprep.subr.mxu0 0.0
  %5161 = vmatpush1.msra.mxu0 %v5123
  %5162 = vmatprep.subr.mxu0 0.0
  %5163 = vmatpush2.msra.mxu0 0.0
  %5164 = vmatprep.subr.mxu0 0.0
  %5165 = vmatpush2.msra.mxu0 0.0
  %5166 = vmatprep.subr.mxu0 0.0
  %5167 = vmatpush2.msra.mxu0 0.0
  %5168 = vmatprep.subr.mxu0 0.0
  %5169 = vmatpush2.msra.mxu0 0.0
  %5170 = vmatprep.subr.mxu0 0.0
  %5171 = vmatpush2.msra.mxu0 0.0
  %5172 = vmatprep.subr.mxu0 0.0
  %5173 = vmatpush2.msra.mxu0 0.0
  %5174 = vmatprep.subr.mxu0 0.0
  %5175 = vmatpush2.msra.mxu0 0.0
  %5176 = vmatprep.subr.mxu0 0.0
  %5177 = vmatpush2.msra.mxu0 0.0
  %5178 = vmatprep.subr.mxu0 0.0
  %5179 = vmatpush2.msra.mxu0 0.0
  %5180 = vmatprep.subr.mxu0 0.0
  %5181 = vmatpush2.msra.mxu0 0.0
  %5182 = vmatprep.subr.mxu0 0.0
  %5183 = vmatpush2.msra.mxu0 0.0
  %5184 = vmatprep.subr.mxu0 0.0
  %5185 = vmatpush2.msra.mxu0 0.0
  %5186 = vmatprep.subr.mxu0 0.0
  %5187 = vmatpush2.msra.mxu0 0.0
  %5188 = vmatprep.subr.mxu0 0.0
  %5189 = vmatpush2.msra.mxu0 0.0
  %5190 = vmatprep.subr.mxu0 0.0
  %5191 = vmatpush2.msra.mxu0 0.0
  %5192 = vmatprep.subr.mxu0 0.0
  %5193 = vmatpush2.msra.mxu0 0.0
  %5194 = vmatprep.mubr.f32.mxu0 0.0
  %5195 = vmatmul.mubr.f32.gmra.mxu0 %v5128
  %v5196 = vpop.f32.mrf.mxu0
  %v5197 = vadd.f32 0.0, %v5196
  %v5198 = vpop.f32.mrf.mxu0
  %5199 = vdwg.mxu0
  %v5200 = vadd.f32 %v5122, %v5197
  %v5201 = vld [vmem:[%s11 + $0xa0] sm:$0xff]
  %v5202 = vld [vmem:[%s11 + $0xa8] sm:$0xff]
  %v5203 = vld [vmem:[%s11 + $0xb0] sm:$0xff]
  %v5204 = vld [vmem:[%s11 + $0xb8] sm:$0xff]
  %v5206 = vsel %vm74, %v4809, 0
  %5208 = vmatprep.subr.mxu0 0.0
  %5209 = vmatpush1.msra.mxu0 0.0
  %5210 = vmatprep.subr.mxu0 0.0
  %5211 = vmatpush1.msra.mxu0 0.0
  %5212 = vmatprep.subr.mxu0 0.0
  %5213 = vmatpush1.msra.mxu0 0.0
  %5214 = vmatprep.subr.mxu0 0.0
  %5215 = vmatpush1.msra.mxu0 0.0
  %5216 = vmatprep.subr.mxu0 0.0
  %5217 = vmatpush1.msra.mxu0 0.0
  %5218 = vmatprep.subr.mxu0 0.0
  %5219 = vmatpush1.msra.mxu0 0.0
  %5220 = vmatprep.subr.mxu0 0.0
  %5221 = vmatpush1.msra.mxu0 0.0
  %5222 = vmatprep.subr.mxu0 0.0
  %5223 = vmatpush1.msra.mxu0 0.0
  %5224 = vmatprep.subr.mxu0 0.0
  %5225 = vmatpush1.msra.mxu0 0.0
  %5226 = vmatprep.subr.mxu0 0.0
  %5227 = vmatpush1.msra.mxu0 0.0
  %5228 = vmatprep.subr.mxu0 0.0
  %5229 = vmatpush1.msra.mxu0 0.0
  %5230 = vmatprep.subr.mxu0 0.0
  %5231 = vmatpush1.msra.mxu0 0.0
  %5232 = vmatprep.subr.mxu0 0.0
  %5233 = vmatpush1.msra.mxu0 %v5204
  %5234 = vmatprep.subr.mxu0 0.0
  %5235 = vmatpush1.msra.mxu0 %v5203
  %5236 = vmatprep.subr.mxu0 0.0
  %5237 = vmatpush1.msra.mxu0 %v5202
  %5238 = vmatprep.subr.mxu0 0.0
  %5239 = vmatpush1.msra.mxu0 %v5201
  %5240 = vmatprep.subr.mxu0 0.0
  %5241 = vmatpush2.msra.mxu0 0.0
  %5242 = vmatprep.subr.mxu0 0.0
  %5243 = vmatpush2.msra.mxu0 0.0
  %5244 = vmatprep.subr.mxu0 0.0
  %5245 = vmatpush2.msra.mxu0 0.0
  %5246 = vmatprep.subr.mxu0 0.0
  %5247 = vmatpush2.msra.mxu0 0.0
  %5248 = vmatprep.subr.mxu0 0.0
  %5249 = vmatpush2.msra.mxu0 0.0
  %5250 = vmatprep.subr.mxu0 0.0
  %5251 = vmatpush2.msra.mxu0 0.0
  %5252 = vmatprep.subr.mxu0 0.0
  %5253 = vmatpush2.msra.mxu0 0.0
  %5254 = vmatprep.subr.mxu0 0.0
  %5255 = vmatpush2.msra.mxu0 0.0
  %5256 = vmatprep.subr.mxu0 0.0
  %5257 = vmatpush2.msra.mxu0 0.0
  %5258 = vmatprep.subr.mxu0 0.0
  %5259 = vmatpush2.msra.mxu0 0.0
  %5260 = vmatprep.subr.mxu0 0.0
  %5261 = vmatpush2.msra.mxu0 0.0
  %5262 = vmatprep.subr.mxu0 0.0
  %5263 = vmatpush2.msra.mxu0 0.0
  %5264 = vmatprep.subr.mxu0 0.0
  %5265 = vmatpush2.msra.mxu0 0.0
  %5266 = vmatprep.subr.mxu0 0.0
  %5267 = vmatpush2.msra.mxu0 0.0
  %5268 = vmatprep.subr.mxu0 0.0
  %5269 = vmatpush2.msra.mxu0 0.0
  %5270 = vmatprep.subr.mxu0 0.0
  %5271 = vmatpush2.msra.mxu0 0.0
  %5272 = vmatprep.mubr.f32.mxu0 0.0
  %5273 = vmatmul.mubr.f32.gmra.mxu0 %v5206
  %v5274 = vpop.f32.mrf.mxu0
  %v5275 = vadd.f32 0.0, %v5274
  %v5276 = vpop.f32.mrf.mxu0
  %5277 = vdwg.mxu0
  %v5278 = vadd.f32 %v5200, %v5275
  %v5279 = vld [vmem:[%s11 + $0xc0] sm:$0xff]
  %v5280 = vld [vmem:[%s11 + $0xc8] sm:$0xff]
  %v5281 = vld [vmem:[%s11 + $0xd0] sm:$0xff]
  %v5282 = vld [vmem:[%s11 + $0xd8] sm:$0xff]
  %v5284 = vsel %vm74, %v4810, 0
  %5286 = vmatprep.subr.mxu0 0.0
  %5287 = vmatpush1.msra.mxu0 0.0
  %5288 = vmatprep.subr.mxu0 0.0
  %5289 = vmatpush1.msra.mxu0 0.0
  %5290 = vmatprep.subr.mxu0 0.0
  %5291 = vmatpush1.msra.mxu0 0.0
  %5292 = vmatprep.subr.mxu0 0.0
  %5293 = vmatpush1.msra.mxu0 0.0
  %5294 = vmatprep.subr.mxu0 0.0
  %5295 = vmatpush1.msra.mxu0 0.0
  %5296 = vmatprep.subr.mxu0 0.0
  %5297 = vmatpush1.msra.mxu0 0.0
  %5298 = vmatprep.subr.mxu0 0.0
  %5299 = vmatpush1.msra.mxu0 0.0
  %5300 = vmatprep.subr.mxu0 0.0
  %5301 = vmatpush1.msra.mxu0 0.0
  %5302 = vmatprep.subr.mxu0 0.0
  %5303 = vmatpush1.msra.mxu0 0.0
  %5304 = vmatprep.subr.mxu0 0.0
  %5305 = vmatpush1.msra.mxu0 0.0
  %5306 = vmatprep.subr.mxu0 0.0
  %5307 = vmatpush1.msra.mxu0 0.0
  %5308 = vmatprep.subr.mxu0 0.0
  %5309 = vmatpush1.msra.mxu0 0.0
  %5310 = vmatprep.subr.mxu0 0.0
  %5311 = vmatpush1.msra.mxu0 %v5282
  %5312 = vmatprep.subr.mxu0 0.0
  %5313 = vmatpush1.msra.mxu0 %v5281
  %5314 = vmatprep.subr.mxu0 0.0
  %5315 = vmatpush1.msra.mxu0 %v5280
  %5316 = vmatprep.subr.mxu0 0.0
  %5317 = vmatpush1.msra.mxu0 %v5279
  %5318 = vmatprep.subr.mxu0 0.0
  %5319 = vmatpush2.msra.mxu0 0.0
  %5320 = vmatprep.subr.mxu0 0.0
  %5321 = vmatpush2.msra.mxu0 0.0
  %5322 = vmatprep.subr.mxu0 0.0
  %5323 = vmatpush2.msra.mxu0 0.0
  %5324 = vmatprep.subr.mxu0 0.0
  %5325 = vmatpush2.msra.mxu0 0.0
  %5326 = vmatprep.subr.mxu0 0.0
  %5327 = vmatpush2.msra.mxu0 0.0
  %5328 = vmatprep.subr.mxu0 0.0
  %5329 = vmatpush2.msra.mxu0 0.0
  %5330 = vmatprep.subr.mxu0 0.0
  %5331 = vmatpush2.msra.mxu0 0.0
  %5332 = vmatprep.subr.mxu0 0.0
  %5333 = vmatpush2.msra.mxu0 0.0
  %5334 = vmatprep.subr.mxu0 0.0
  %5335 = vmatpush2.msra.mxu0 0.0
  %5336 = vmatprep.subr.mxu0 0.0
  %5337 = vmatpush2.msra.mxu0 0.0
  %5338 = vmatprep.subr.mxu0 0.0
  %5339 = vmatpush2.msra.mxu0 0.0
  %5340 = vmatprep.subr.mxu0 0.0
  %5341 = vmatpush2.msra.mxu0 0.0
  %5342 = vmatprep.subr.mxu0 0.0
  %5343 = vmatpush2.msra.mxu0 0.0
  %5344 = vmatprep.subr.mxu0 0.0
  %5345 = vmatpush2.msra.mxu0 0.0
  %5346 = vmatprep.subr.mxu0 0.0
  %5347 = vmatpush2.msra.mxu0 0.0
  %5348 = vmatprep.subr.mxu0 0.0
  %5349 = vmatpush2.msra.mxu0 0.0
  %5350 = vmatprep.mubr.f32.mxu0 0.0
  %5351 = vmatmul.mubr.f32.gmra.mxu0 %v5284
  %v5352 = vpop.f32.mrf.mxu0
  %v5353 = vadd.f32 0.0, %v5352
  %v5354 = vpop.f32.mrf.mxu0
  %5355 = vdwg.mxu0
  %v5356 = vadd.f32 %v5278, %v5353
  %v5357 = vlaneseq
  %v5358 = vshrl.u32 %v5357, 7
  %v5359 = vsub.s32 0, %v5358
  %v5360 = vrot.slane %v4811, %v5359
  %v5361 = vadd.f32 %v5356, %v5360
  %v5362 = vmax.f32 %v5361, 0.0
  %v5363 = vld [vmem:[%s12] sm:$0xff]
  %v5364 = vld [vmem:[%s12 + $0x8] sm:$0xff]
  %v5365 = vlaneseq
  %v5366 = vshrl.u32 %v5365, 7
  %v5367 = vsub.s32 0, %v5366
  %v5368 = vrot.slane %v4812, %v5367
  %v5370 = vsel %vm1782, %v5362, 0
  %5372 = vmatprep.subr.mxu0 0.0
  %5373 = vmatpush1.msra.mxu0 0.0
  %5374 = vmatprep.subr.mxu0 0.0
  %5375 = vmatpush1.msra.mxu0 0.0
  %5376 = vmatprep.subr.mxu0 0.0
  %5377 = vmatpush1.msra.mxu0 0.0
  %5378 = vmatprep.subr.mxu0 0.0
  %5379 = vmatpush1.msra.mxu0 0.0
  %5380 = vmatprep.subr.mxu0 0.0
  %5381 = vmatpush1.msra.mxu0 0.0
  %5382 = vmatprep.subr.mxu0 0.0
  %5383 = vmatpush1.msra.mxu0 0.0
  %5384 = vmatprep.subr.mxu0 0.0
  %5385 = vmatpush1.msra.mxu0 0.0
  %5386 = vmatprep.subr.mxu0 0.0
  %5387 = vmatpush1.msra.mxu0 0.0
  %5388 = vmatprep.subr.mxu0 0.0
  %5389 = vmatpush1.msra.mxu0 0.0
  %5390 = vmatprep.subr.mxu0 0.0
  %5391 = vmatpush1.msra.mxu0 0.0
  %5392 = vmatprep.subr.mxu0 0.0
  %5393 = vmatpush1.msra.mxu0 0.0
  %5394 = vmatprep.subr.mxu0 0.0
  %5395 = vmatpush1.msra.mxu0 0.0
  %5396 = vmatprep.subr.mxu0 0.0
  %5397 = vmatpush1.msra.mxu0 0.0
  %5398 = vmatprep.subr.mxu0 0.0
  %5399 = vmatpush1.msra.mxu0 0.0
  %5400 = vmatprep.subr.mxu0 0.0
  %5401 = vmatpush1.msra.mxu0 %v5364
  %5402 = vmatprep.subr.mxu0 0.0
  %5403 = vmatpush1.msra.mxu0 %v5363
  %5404 = vmatprep.subr.mxu0 0.0
  %5405 = vmatpush2.msra.mxu0 0.0
  %5406 = vmatprep.subr.mxu0 0.0
  %5407 = vmatpush2.msra.mxu0 0.0
  %5408 = vmatprep.subr.mxu0 0.0
  %5409 = vmatpush2.msra.mxu0 0.0
  %5410 = vmatprep.subr.mxu0 0.0
  %5411 = vmatpush2.msra.mxu0 0.0
  %5412 = vmatprep.subr.mxu0 0.0
  %5413 = vmatpush2.msra.mxu0 0.0
  %5414 = vmatprep.subr.mxu0 0.0
  %5415 = vmatpush2.msra.mxu0 0.0
  %5416 = vmatprep.subr.mxu0 0.0
  %5417 = vmatpush2.msra.mxu0 0.0
  %5418 = vmatprep.subr.mxu0 0.0
  %5419 = vmatpush2.msra.mxu0 0.0
  %5420 = vmatprep.subr.mxu0 0.0
  %5421 = vmatpush2.msra.mxu0 0.0
  %5422 = vmatprep.subr.mxu0 0.0
  %5423 = vmatpush2.msra.mxu0 0.0
  %5424 = vmatprep.subr.mxu0 0.0
  %5425 = vmatpush2.msra.mxu0 0.0
  %5426 = vmatprep.subr.mxu0 0.0
  %5427 = vmatpush2.msra.mxu0 0.0
  %5428 = vmatprep.subr.mxu0 0.0
  %5429 = vmatpush2.msra.mxu0 0.0
  %5430 = vmatprep.subr.mxu0 0.0
  %5431 = vmatpush2.msra.mxu0 0.0
  %5432 = vmatprep.subr.mxu0 0.0
  %5433 = vmatpush2.msra.mxu0 0.0
  %5434 = vmatprep.subr.mxu0 0.0
  %5435 = vmatpush2.msra.mxu0 0.0
  %5436 = vmatprep.mubr.f32.mxu0 0.0
  %5437 = vmatmul.mubr.f32.gmra.mxu0 %v5370
  %v5438 = vpop.f32.mrf.mxu0
  %v5439 = vadd.f32 %v5368, %v5438
  %v5440 = vpop.f32.mrf.mxu0
  %5441 = vdwg.mxu0
  %vm5442 = vcmask 7168
  %5443 = vst.msk [vmem:[%s13] sm:$0xff] %vm5442, %v5439
  // Predicated region
  $region54: #{tpu_custom_call.1} parent=0 // pred_check
    _
  $region55: #{tpu_custom_call.1} parent=0 // pred_check_branch
    %5445 = sbr.rel (0) target = $region57
  $region56: #{tpu_custom_call.1} parent=0 // pred_region
    _
  $region57: #{tpu_custom_call.1} parent=0 // pred_fallthru
    _
  // Predicated region
  $region58: #{tpu_custom_call.1} parent=0 // pred_check
    _
  $region59: #{tpu_custom_call.1} parent=0 // pred_check_branch
    %5447 = sbr.rel (0) target = $region61
  $region60: #{tpu_custom_call.1} parent=0 // pred_region
    _
  $region61: #{tpu_custom_call.1} parent=0 // pred_fallthru
    _

</llo_original>
